<compile_context>
chip_gen: v6e
topology: v6e:2x2x1
jax: 0.10.0
libtpu: 0.0.40
codegen_flags: <defaults>
</compile_context>

<pallas_src>
import jax
import jax.numpy as jnp
import numpy as np
from jax.experimental import pallas as pl
from jax.experimental.pallas import tpu as pltpu


# ---------------------------------------------------------------------------
# Pallas kernel
# ---------------------------------------------------------------------------
def _make_block_kernel(H, W):
    HW = H * W

    def kernel(x_ref, m_ref,
               w1a, b1a, w1b, b1b,
               w2a, b2a, w2b, b2b,
               w3a, b3a, w3b, b3b,
               wg, bg, wc123, bc123, wc4, bc4,
               o_ref):
        bt, _, C = x_ref.shape
        M = bt * HW

        # Load the 9 boundary masks once; reused by all six 3x3 convs.
        masks = [m_ref[k] for k in range(9)]              # each (M, 1) f32

        def conv3x3(xf, w_ref, b_ref):
            # xf: (M, Cin) f32; w_ref: (9*Cin, Cout) bf16; b_ref: (1, Cout) f32
            cols = []
            for k in range(9):
                dy = k // 3 - 1
                dx = k % 3 - 1
                s = dy * W + dx
                if s == 0:
                    cols.append(xf)                        # centre tap always valid
                else:
                    # roll by -s puts x[p + s] at row p; mask zeroes padding taps
                    shifted = pltpu.roll(xf, shift=(-s) % M, axis=0)
                    cols.append(shifted * masks[k])
            patches = jnp.concatenate(cols, axis=1).astype(jnp.bfloat16)
            return jnp.dot(patches, w_ref[...],
                           preferred_element_type=jnp.float32) + b_ref[...]

        def resblock(xf, wa, ba, wb, bb):
            h = jnp.maximum(conv3x3(xf, wa, ba), 0.0)
            h = conv3x3(h, wb, bb)
            return jnp.maximum(h + xf, 0.0)

        c0 = x_ref[...].reshape(M, C)
        r1 = resblock(c0, w1a, b1a, w1b, b1b)
        c1 = jnp.concatenate([c0, r1], axis=1)             # (M, 2C)
        r2 = resblock(c1, w2a, b2a, w2b, b2b)
        c2 = jnp.concatenate([c1, r2], axis=1)             # (M, 4C)
        r3 = resblock(c2, w3a, b3a, w3b, b3b)
        c3 = jnp.concatenate([c2, r3], axis=1)             # (M, 8C)

        # g = BasicBlock(8C -> C, 1x1): matmul + bias + relu (bf16 MXU, f32 acc)
        g = jnp.maximum(
            jnp.dot(c3.astype(jnp.bfloat16), wg[...],
                    preferred_element_type=jnp.float32) + bg[...],
            0.0)                                           # (M, C)

        # CALayer: per-image global average pool; the dilated 3x3 convs on the
        # 1x1 pooled map collapse exactly to their centre taps (kept in f32).
        g3 = g.reshape(bt, HW, C)
        y = jnp.sum(g3, axis=1) * (1.0 / HW)               # (bt, C)
        a = jnp.maximum(
            jnp.dot(y, wc123[...], preferred_element_type=jnp.float32)
            + bc123[...], 0.0)                             # (bt, 3*Cr)
        z = jnp.dot(a, wc4[...], preferred_element_type=jnp.float32) + bc4[...]
        s = 1.0 / (1.0 + jnp.exp(-z))                      # (bt, C) sigmoid

        o_ref[...] = g3 * s[:, None, :]                    # channel rescale

    return kernel


# ---------------------------------------------------------------------------
# Host-side glue
# ---------------------------------------------------------------------------
def _make_masks(H, W, bt):
    """Boundary-validity masks per tap: (9, bt*H*W, 1) f32 in {0, 1}."""
    HW = H * W
    rows = np.arange(HW) // W
    cols = np.arange(HW) % W
    m = np.zeros((9, HW, 1), np.float32)
    for k in range(9):
        dy, dx = k // 3 - 1, k % 3 - 1
        valid = ((rows + dy >= 0) & (rows + dy < H)
                 & (cols + dx >= 0) & (cols + dx < W))
        m[k, :, 0] = valid.astype(np.float32)
    return jnp.asarray(np.tile(m, (1, bt, 1)))


def block_forward(x_nchw, kp, batch_tile=1):
    N, C, H, W = x_nchw.shape
    HW = H * W
    bt = batch_tile
    assert N % bt == 0, "batch_tile must divide batch"
    x_flat = jnp.transpose(x_nchw, (0, 2, 3, 1)).reshape(N, HW, C)
    masks = _make_masks(H, W, bt)

    weight_args = [
        kp["w1a"], kp["b1a"], kp["w1b"], kp["b1b"],
        kp["w2a"], kp["b2a"], kp["w2b"], kp["b2b"],
        kp["w3a"], kp["b3a"], kp["w3b"], kp["b3b"],
        kp["wg"], kp["bg"],
        kp["wc123"], kp["bc123"], kp["wc4"], kp["bc4"],
    ]

    def full_spec(a):
        nd = a.ndim
        return pl.BlockSpec(a.shape, lambda *_: (0,) * nd)

    in_specs = ([pl.BlockSpec((bt, HW, C), lambda n: (n, 0, 0)),
                 full_spec(masks)]
                + [full_spec(a) for a in weight_args])
    out_spec = pl.BlockSpec((bt, HW, C), lambda n: (n, 0, 0))

    kernel = _make_block_kernel(H, W)
    out_flat = pl.pallas_call(
        kernel,
        out_shape=jax.ShapeDtypeStruct((N, HW, C), jnp.float32),
        grid_spec=pltpu.PrefetchScalarGridSpec(
            num_scalar_prefetch=0,
            grid=(N // bt,),
            in_specs=in_specs,
            out_specs=out_spec,
        ),
        compiler_params=pltpu.CompilerParams(
            dimension_semantics=("parallel",)),   # batch images are independent
    )(x_flat, masks, *weight_args)

    return jnp.transpose(out_flat.reshape(N, H, W, C), (0, 3, 1, 2))


# ---------------------------------------------------------------------------
# Deterministic parameter init (PyTorch OIHW conv layout)
# ---------------------------------------------------------------------------
def init_params(key, C, reduction=16):
    Cr = C // reduction
    keys = iter(jax.random.split(key, 32))

    def conv_w(cout, cin, kh, kw):
        return 0.05 * jax.random.normal(next(keys), (cout, cin, kh, kw),
                                        jnp.float32)

    def conv_b(cout):
        return 0.05 * jax.random.normal(next(keys), (cout,), jnp.float32)

    p = {}
    p["r1_w1"], p["r1_b1"] = conv_w(C, C, 3, 3), conv_b(C)
    p["r1_w2"], p["r1_b2"] = conv_w(C, C, 3, 3), conv_b(C)
    p["r2_w1"], p["r2_b1"] = conv_w(2 * C, 2 * C, 3, 3), conv_b(2 * C)
    p["r2_w2"], p["r2_b2"] = conv_w(2 * C, 2 * C, 3, 3), conv_b(2 * C)
    p["r3_w1"], p["r3_b1"] = conv_w(4 * C, 4 * C, 3, 3), conv_b(4 * C)
    p["r3_w2"], p["r3_b2"] = conv_w(4 * C, 4 * C, 3, 3), conv_b(4 * C)
    p["g_w"], p["g_b"] = conv_w(C, 8 * C, 1, 1), conv_b(C)
    p["ca1_w"], p["ca1_b"] = conv_w(Cr, C, 3, 3), conv_b(Cr)
    p["ca2_w"], p["ca2_b"] = conv_w(Cr, C, 3, 3), conv_b(Cr)
    p["ca3_w"], p["ca3_b"] = conv_w(Cr, C, 3, 3), conv_b(Cr)
    p["ca4_w"], p["ca4_b"] = conv_w(C, 3 * Cr, 3, 3), conv_b(C)
    return p


def to_kernel_params(p):
    def w3x3(w):  # (Cout, Cin, 3, 3) -> (9*Cin, Cout), tap-major rows, bf16
        cout, cin = w.shape[0], w.shape[1]
        return (jnp.transpose(w, (2, 3, 1, 0))
                .reshape(9 * cin, cout).astype(jnp.bfloat16))

    def brow(b):
        return b.reshape(1, -1)

    def ctap(w):  # centre tap of a 3x3 kernel -> (Cin, Cout), f32
        return jnp.transpose(w[:, :, 1, 1], (1, 0))

    return {
        "w1a": w3x3(p["r1_w1"]), "b1a": brow(p["r1_b1"]),
        "w1b": w3x3(p["r1_w2"]), "b1b": brow(p["r1_b2"]),
        "w2a": w3x3(p["r2_w1"]), "b2a": brow(p["r2_b1"]),
        "w2b": w3x3(p["r2_w2"]), "b2b": brow(p["r2_b2"]),
        "w3a": w3x3(p["r3_w1"]), "b3a": brow(p["r3_b1"]),
        "w3b": w3x3(p["r3_w2"]), "b3b": brow(p["r3_b2"]),
        "wg": jnp.transpose(p["g_w"][:, :, 0, 0], (1, 0)).astype(jnp.bfloat16),
        "bg": brow(p["g_b"]),
        # Dilated CA convs on a 1x1 pooled map collapse to their centre taps.
        "wc123": jnp.concatenate(
            [ctap(p["ca1_w"]), ctap(p["ca2_w"]), ctap(p["ca3_w"])], axis=1),
        "bc123": jnp.concatenate(
            [brow(p["ca1_b"]), brow(p["ca2_b"]), brow(p["ca3_b"])], axis=1),
        "wc4": ctap(p["ca4_w"]),
        "bc4": brow(p["ca4_b"]),
    }


# ---------------------------------------------------------------------------
# Pure-JAX reference (mirrors the PyTorch forward, NCHW, f32)
# ---------------------------------------------------------------------------
def conv2d_ref(x, w, b, pad, dil=1):
    out = jax.lax.conv_general_dilated(
        x, w, window_strides=(1, 1),
        padding=[(pad, pad), (pad, pad)],
        rhs_dilation=(dil, dil),
        dimension_numbers=("NCHW", "OIHW", "NCHW"))
    return out + b.reshape(1, -1, 1, 1)


def block_ref(x, p):
    def resblock(x, w1, b1, w2, b2):
        h = jax.nn.relu(conv2d_ref(x, w1, b1, 1))
        h = conv2d_ref(h, w2, b2, 1)
        return jax.nn.relu(h + x)

    c0 = x
    r1 = resblock(c0, p["r1_w1"], p["r1_b1"], p["r1_w2"], p["r1_b2"])
    c1 = jnp.concatenate([c0, r1], axis=1)
    r2 = resblock(c1, p["r2_w1"], p["r2_b1"], p["r2_w2"], p["r2_b2"])
    c2 = jnp.concatenate([c1, r2], axis=1)
    r3 = resblock(c2, p["r3_w1"], p["r3_b1"], p["r3_w2"], p["r3_b2"])
    c3 = jnp.concatenate([c2, r3], axis=1)
    g = jax.nn.relu(conv2d_ref(c3, p["g_w"], p["g_b"], 0))
    y = jnp.mean(g, axis=(2, 3), keepdims=True)
    a1 = jax.nn.relu(conv2d_ref(y, p["ca1_w"], p["ca1_b"], 3, 3))
    a2 = jax.nn.relu(conv2d_ref(y, p["ca2_w"], p["ca2_b"], 5, 5))
    a3 = jax.nn.relu(conv2d_ref(y, p["ca3_w"], p["ca3_b"], 7, 7))
    cat = jnp.concatenate([a1, a2, a3], axis=1)
    s = jax.nn.sigmoid(conv2d_ref(cat, p["ca4_w"], p["ca4_b"], 1))
    return g * s


# ---------------------------------------------------------------------------
if __name__ == "__main__":
    # channels must be >= 16 so that channel // reduction (=16) >= 1
    N, C, H, W = 2, 16, 8, 8
    key = jax.random.PRNGKey(0)
    kx, kparam = jax.random.split(key)
    x = jax.random.normal(kx, (N, C, H, W), jnp.float32)

    params = init_params(kparam, C)
    kparams = to_kernel_params(params)

    out = jax.block_until_ready(block_forward(x, kparams))

    ref = jax.block_until_ready(block_ref(x, params))
    np.testing.assert_allclose(np.asarray(out), np.asarray(ref),
                               rtol=2e-2, atol=2e-2)
    print("KERNEL_OK")
</pallas_src>

<mosaic_0001>
module attributes {stable_mosaic.version = 11 : i64} {
  func.func @kernel(%arg0: i32, %arg1: memref<1x64x16xf32, #tpu.memory_space<vmem>>, %arg2: memref<9x64x1xf32, #tpu.memory_space<vmem>>, %arg3: memref<144x16xbf16, #tpu.memory_space<vmem>>, %arg4: memref<1x16xf32, #tpu.memory_space<vmem>>, %arg5: memref<144x16xbf16, #tpu.memory_space<vmem>>, %arg6: memref<1x16xf32, #tpu.memory_space<vmem>>, %arg7: memref<288x32xbf16, #tpu.memory_space<vmem>>, %arg8: memref<1x32xf32, #tpu.memory_space<vmem>>, %arg9: memref<288x32xbf16, #tpu.memory_space<vmem>>, %arg10: memref<1x32xf32, #tpu.memory_space<vmem>>, %arg11: memref<576x64xbf16, #tpu.memory_space<vmem>>, %arg12: memref<1x64xf32, #tpu.memory_space<vmem>>, %arg13: memref<576x64xbf16, #tpu.memory_space<vmem>>, %arg14: memref<1x64xf32, #tpu.memory_space<vmem>>, %arg15: memref<128x16xbf16, #tpu.memory_space<vmem>>, %arg16: memref<1x16xf32, #tpu.memory_space<vmem>>, %arg17: memref<16x3xf32, #tpu.memory_space<vmem>>, %arg18: memref<1x3xf32, #tpu.memory_space<vmem>>, %arg19: memref<3x16xf32, #tpu.memory_space<vmem>>, %arg20: memref<1x16xf32, #tpu.memory_space<vmem>>, %arg21: memref<1x64x16xf32, #tpu.memory_space<vmem>>) attributes {dimension_semantics = [#tpu.dimension_semantics<parallel>], iteration_bounds = array<i64: 2>, scalar_prefetch = 0 : i64, scratch_operands = 0 : i64, tpu.core_type = #tpu.core_type<tc>, window_params = [{transform_indices = @transform_0, window_bounds = array<i64: 1, 64, 16>}, {pipeline_mode = #tpu.pipeline_mode<synchronous>, transform_indices = @transform_1, window_bounds = array<i64: 9, 64, 1>}, {pipeline_mode = #tpu.pipeline_mode<synchronous>, transform_indices = @transform_2, window_bounds = array<i64: 144, 16>}, {pipeline_mode = #tpu.pipeline_mode<synchronous>, transform_indices = @transform_3, window_bounds = array<i64: 1, 16>}, {pipeline_mode = #tpu.pipeline_mode<synchronous>, transform_indices = @transform_4, window_bounds = array<i64: 144, 16>}, {pipeline_mode = #tpu.pipeline_mode<synchronous>, transform_indices = @transform_5, window_bounds = array<i64: 1, 16>}, {pipeline_mode = #tpu.pipeline_mode<synchronous>, transform_indices = @transform_6, window_bounds = array<i64: 288, 32>}, {pipeline_mode = #tpu.pipeline_mode<synchronous>, transform_indices = @transform_7, window_bounds = array<i64: 1, 32>}, {pipeline_mode = #tpu.pipeline_mode<synchronous>, transform_indices = @transform_8, window_bounds = array<i64: 288, 32>}, {pipeline_mode = #tpu.pipeline_mode<synchronous>, transform_indices = @transform_9, window_bounds = array<i64: 1, 32>}, {pipeline_mode = #tpu.pipeline_mode<synchronous>, transform_indices = @transform_10, window_bounds = array<i64: 576, 64>}, {pipeline_mode = #tpu.pipeline_mode<synchronous>, transform_indices = @transform_11, window_bounds = array<i64: 1, 64>}, {pipeline_mode = #tpu.pipeline_mode<synchronous>, transform_indices = @transform_12, window_bounds = array<i64: 576, 64>}, {pipeline_mode = #tpu.pipeline_mode<synchronous>, transform_indices = @transform_13, window_bounds = array<i64: 1, 64>}, {pipeline_mode = #tpu.pipeline_mode<synchronous>, transform_indices = @transform_14, window_bounds = array<i64: 128, 16>}, {pipeline_mode = #tpu.pipeline_mode<synchronous>, transform_indices = @transform_15, window_bounds = array<i64: 1, 16>}, {pipeline_mode = #tpu.pipeline_mode<synchronous>, transform_indices = @transform_16, window_bounds = array<i64: 16, 3>}, {pipeline_mode = #tpu.pipeline_mode<synchronous>, transform_indices = @transform_17, window_bounds = array<i64: 1, 3>}, {pipeline_mode = #tpu.pipeline_mode<synchronous>, transform_indices = @transform_18, window_bounds = array<i64: 3, 16>}, {pipeline_mode = #tpu.pipeline_mode<synchronous>, transform_indices = @transform_19, window_bounds = array<i64: 1, 16>}, {transform_indices = @transform_20, window_bounds = array<i64: 1, 64, 16>}]} {
    %c0 = arith.constant 0 : index
    %c0_0 = arith.constant 0 : index
    %c0_1 = arith.constant 0 : index
    %0 = vector.load %arg2[%c0, %c0_0, %c0_1] : memref<9x64x1xf32, #tpu.memory_space<vmem>>, vector<1x64x1xf32>
    %1 = vector.shape_cast %0 : vector<1x64x1xf32> to vector<64x1xf32>
    %c1 = arith.constant 1 : index
    %c0_2 = arith.constant 0 : index
    %c0_3 = arith.constant 0 : index
    %2 = vector.load %arg2[%c1, %c0_2, %c0_3] : memref<9x64x1xf32, #tpu.memory_space<vmem>>, vector<1x64x1xf32>
    %3 = vector.shape_cast %2 : vector<1x64x1xf32> to vector<64x1xf32>
    %c2 = arith.constant 2 : index
    %c0_4 = arith.constant 0 : index
    %c0_5 = arith.constant 0 : index
    %4 = vector.load %arg2[%c2, %c0_4, %c0_5] : memref<9x64x1xf32, #tpu.memory_space<vmem>>, vector<1x64x1xf32>
    %5 = vector.shape_cast %4 : vector<1x64x1xf32> to vector<64x1xf32>
    %c3 = arith.constant 3 : index
    %c0_6 = arith.constant 0 : index
    %c0_7 = arith.constant 0 : index
    %6 = vector.load %arg2[%c3, %c0_6, %c0_7] : memref<9x64x1xf32, #tpu.memory_space<vmem>>, vector<1x64x1xf32>
    %7 = vector.shape_cast %6 : vector<1x64x1xf32> to vector<64x1xf32>
    %c5 = arith.constant 5 : index
    %c0_8 = arith.constant 0 : index
    %c0_9 = arith.constant 0 : index
    %8 = vector.load %arg2[%c5, %c0_8, %c0_9] : memref<9x64x1xf32, #tpu.memory_space<vmem>>, vector<1x64x1xf32>
    %9 = vector.shape_cast %8 : vector<1x64x1xf32> to vector<64x1xf32>
    %c6 = arith.constant 6 : index
    %c0_10 = arith.constant 0 : index
    %c0_11 = arith.constant 0 : index
    %10 = vector.load %arg2[%c6, %c0_10, %c0_11] : memref<9x64x1xf32, #tpu.memory_space<vmem>>, vector<1x64x1xf32>
    %11 = vector.shape_cast %10 : vector<1x64x1xf32> to vector<64x1xf32>
    %c7 = arith.constant 7 : index
    %c0_12 = arith.constant 0 : index
    %c0_13 = arith.constant 0 : index
    %12 = vector.load %arg2[%c7, %c0_12, %c0_13] : memref<9x64x1xf32, #tpu.memory_space<vmem>>, vector<1x64x1xf32>
    %13 = vector.shape_cast %12 : vector<1x64x1xf32> to vector<64x1xf32>
    %c8 = arith.constant 8 : index
    %c0_14 = arith.constant 0 : index
    %c0_15 = arith.constant 0 : index
    %14 = vector.load %arg2[%c8, %c0_14, %c0_15] : memref<9x64x1xf32, #tpu.memory_space<vmem>>, vector<1x64x1xf32>
    %15 = vector.shape_cast %14 : vector<1x64x1xf32> to vector<64x1xf32>
    %c0_16 = arith.constant 0 : index
    %c0_17 = arith.constant 0 : index
    %c0_18 = arith.constant 0 : index
    %16 = vector.load %arg1[%c0_16, %c0_17, %c0_18] : memref<1x64x16xf32, #tpu.memory_space<vmem>>, vector<1x64x16xf32>
    %17 = vector.shape_cast %16 : vector<1x64x16xf32> to vector<64x16xf32>
    %c9_i32 = arith.constant 9 : i32
    %18 = tpu.dynamic_rotate %17 by %c9_i32 dim 0 : vector<64x16xf32>, i32 -> vector<64x16xf32>
    %19 = vector.broadcast %1 : vector<64x1xf32> to vector<64x16xf32>
    %20 = arith.mulf %18, %19 : vector<64x16xf32>
    %c8_i32 = arith.constant 8 : i32
    %21 = tpu.dynamic_rotate %17 by %c8_i32 dim 0 : vector<64x16xf32>, i32 -> vector<64x16xf32>
    %22 = vector.broadcast %3 : vector<64x1xf32> to vector<64x16xf32>
    %23 = arith.mulf %21, %22 : vector<64x16xf32>
    %c7_i32 = arith.constant 7 : i32
    %24 = tpu.dynamic_rotate %17 by %c7_i32 dim 0 : vector<64x16xf32>, i32 -> vector<64x16xf32>
    %25 = vector.broadcast %5 : vector<64x1xf32> to vector<64x16xf32>
    %26 = arith.mulf %24, %25 : vector<64x16xf32>
    %c1_i32 = arith.constant 1 : i32
    %27 = tpu.dynamic_rotate %17 by %c1_i32 dim 0 : vector<64x16xf32>, i32 -> vector<64x16xf32>
    %28 = vector.broadcast %7 : vector<64x1xf32> to vector<64x16xf32>
    %29 = arith.mulf %27, %28 : vector<64x16xf32>
    %c63_i32 = arith.constant 63 : i32
    %30 = tpu.dynamic_rotate %17 by %c63_i32 dim 0 : vector<64x16xf32>, i32 -> vector<64x16xf32>
    %31 = vector.broadcast %9 : vector<64x1xf32> to vector<64x16xf32>
    %32 = arith.mulf %30, %31 : vector<64x16xf32>
    %c57_i32 = arith.constant 57 : i32
    %33 = tpu.dynamic_rotate %17 by %c57_i32 dim 0 : vector<64x16xf32>, i32 -> vector<64x16xf32>
    %34 = vector.broadcast %11 : vector<64x1xf32> to vector<64x16xf32>
    %35 = arith.mulf %33, %34 : vector<64x16xf32>
    %c56_i32 = arith.constant 56 : i32
    %36 = tpu.dynamic_rotate %17 by %c56_i32 dim 0 : vector<64x16xf32>, i32 -> vector<64x16xf32>
    %37 = vector.broadcast %13 : vector<64x1xf32> to vector<64x16xf32>
    %38 = arith.mulf %36, %37 : vector<64x16xf32>
    %c55_i32 = arith.constant 55 : i32
    %39 = tpu.dynamic_rotate %17 by %c55_i32 dim 0 : vector<64x16xf32>, i32 -> vector<64x16xf32>
    %40 = vector.broadcast %15 : vector<64x1xf32> to vector<64x16xf32>
    %41 = arith.mulf %39, %40 : vector<64x16xf32>
    %42 = tpu.concatenate %20, %23, %26, %29, %17, %32, %35, %38, %41 in 1 : vector<64x16xf32>, vector<64x16xf32>, vector<64x16xf32>, vector<64x16xf32>, vector<64x16xf32>, vector<64x16xf32>, vector<64x16xf32>, vector<64x16xf32>, vector<64x16xf32> -> vector<64x144xf32>
    %43 = arith.truncf %42 : vector<64x144xf32> to vector<64x144xbf16>
    %c0_19 = arith.constant 0 : index
    %c0_20 = arith.constant 0 : index
    %44 = vector.load %arg3[%c0_19, %c0_20] : memref<144x16xbf16, #tpu.memory_space<vmem>>, vector<144x16xbf16>
    %cst = arith.constant dense<0.000000e+00> : vector<64x16xf32>
    %45 = tpu.matmul %43, %44, %cst {dimension_numbers = #tpu.dot_dimension_numbers<[1], [0], [0], [1], [0, 0, 1, 1], [], []>} : vector<64x144xbf16>, vector<144x16xbf16>, vector<64x16xf32> -> vector<64x16xf32>
    %c0_21 = arith.constant 0 : index
    %c0_22 = arith.constant 0 : index
    %46 = vector.load %arg4[%c0_21, %c0_22] : memref<1x16xf32, #tpu.memory_space<vmem>>, vector<1x16xf32>
    %47 = vector.broadcast %46 : vector<1x16xf32> to vector<64x16xf32>
    %48 = arith.addf %45, %47 : vector<64x16xf32>
    %cst_23 = arith.constant 0.000000e+00 : f32
    %49 = vector.broadcast %cst_23 : f32 to vector<64x16xf32>
    %50 = arith.maximumf %48, %49 : vector<64x16xf32>
    %c9_i32_24 = arith.constant 9 : i32
    %51 = tpu.dynamic_rotate %50 by %c9_i32_24 dim 0 : vector<64x16xf32>, i32 -> vector<64x16xf32>
    %52 = vector.broadcast %1 : vector<64x1xf32> to vector<64x16xf32>
    %53 = arith.mulf %51, %52 : vector<64x16xf32>
    %c8_i32_25 = arith.constant 8 : i32
    %54 = tpu.dynamic_rotate %50 by %c8_i32_25 dim 0 : vector<64x16xf32>, i32 -> vector<64x16xf32>
    %55 = vector.broadcast %3 : vector<64x1xf32> to vector<64x16xf32>
    %56 = arith.mulf %54, %55 : vector<64x16xf32>
    %c7_i32_26 = arith.constant 7 : i32
    %57 = tpu.dynamic_rotate %50 by %c7_i32_26 dim 0 : vector<64x16xf32>, i32 -> vector<64x16xf32>
    %58 = vector.broadcast %5 : vector<64x1xf32> to vector<64x16xf32>
    %59 = arith.mulf %57, %58 : vector<64x16xf32>
    %c1_i32_27 = arith.constant 1 : i32
    %60 = tpu.dynamic_rotate %50 by %c1_i32_27 dim 0 : vector<64x16xf32>, i32 -> vector<64x16xf32>
    %61 = vector.broadcast %7 : vector<64x1xf32> to vector<64x16xf32>
    %62 = arith.mulf %60, %61 : vector<64x16xf32>
    %c63_i32_28 = arith.constant 63 : i32
    %63 = tpu.dynamic_rotate %50 by %c63_i32_28 dim 0 : vector<64x16xf32>, i32 -> vector<64x16xf32>
    %64 = vector.broadcast %9 : vector<64x1xf32> to vector<64x16xf32>
    %65 = arith.mulf %63, %64 : vector<64x16xf32>
    %c57_i32_29 = arith.constant 57 : i32
    %66 = tpu.dynamic_rotate %50 by %c57_i32_29 dim 0 : vector<64x16xf32>, i32 -> vector<64x16xf32>
    %67 = vector.broadcast %11 : vector<64x1xf32> to vector<64x16xf32>
    %68 = arith.mulf %66, %67 : vector<64x16xf32>
    %c56_i32_30 = arith.constant 56 : i32
    %69 = tpu.dynamic_rotate %50 by %c56_i32_30 dim 0 : vector<64x16xf32>, i32 -> vector<64x16xf32>
    %70 = vector.broadcast %13 : vector<64x1xf32> to vector<64x16xf32>
    %71 = arith.mulf %69, %70 : vector<64x16xf32>
    %c55_i32_31 = arith.constant 55 : i32
    %72 = tpu.dynamic_rotate %50 by %c55_i32_31 dim 0 : vector<64x16xf32>, i32 -> vector<64x16xf32>
    %73 = vector.broadcast %15 : vector<64x1xf32> to vector<64x16xf32>
    %74 = arith.mulf %72, %73 : vector<64x16xf32>
    %75 = tpu.concatenate %53, %56, %59, %62, %50, %65, %68, %71, %74 in 1 : vector<64x16xf32>, vector<64x16xf32>, vector<64x16xf32>, vector<64x16xf32>, vector<64x16xf32>, vector<64x16xf32>, vector<64x16xf32>, vector<64x16xf32>, vector<64x16xf32> -> vector<64x144xf32>
    %76 = arith.truncf %75 : vector<64x144xf32> to vector<64x144xbf16>
    %c0_32 = arith.constant 0 : index
    %c0_33 = arith.constant 0 : index
    %77 = vector.load %arg5[%c0_32, %c0_33] : memref<144x16xbf16, #tpu.memory_space<vmem>>, vector<144x16xbf16>
    %cst_34 = arith.constant dense<0.000000e+00> : vector<64x16xf32>
    %78 = tpu.matmul %76, %77, %cst_34 {dimension_numbers = #tpu.dot_dimension_numbers<[1], [0], [0], [1], [0, 0, 1, 1], [], []>} : vector<64x144xbf16>, vector<144x16xbf16>, vector<64x16xf32> -> vector<64x16xf32>
    %c0_35 = arith.constant 0 : index
    %c0_36 = arith.constant 0 : index
    %79 = vector.load %arg6[%c0_35, %c0_36] : memref<1x16xf32, #tpu.memory_space<vmem>>, vector<1x16xf32>
    %80 = vector.broadcast %79 : vector<1x16xf32> to vector<64x16xf32>
    %81 = arith.addf %78, %80 : vector<64x16xf32>
    %82 = arith.addf %81, %17 : vector<64x16xf32>
    %cst_37 = arith.constant 0.000000e+00 : f32
    %83 = vector.broadcast %cst_37 : f32 to vector<64x16xf32>
    %84 = arith.maximumf %82, %83 : vector<64x16xf32>
    %85 = tpu.concatenate %17, %84 in 1 : vector<64x16xf32>, vector<64x16xf32> -> vector<64x32xf32>
    %c9_i32_38 = arith.constant 9 : i32
    %86 = tpu.dynamic_rotate %85 by %c9_i32_38 dim 0 : vector<64x32xf32>, i32 -> vector<64x32xf32>
    %87 = vector.broadcast %1 : vector<64x1xf32> to vector<64x32xf32>
    %88 = arith.mulf %86, %87 : vector<64x32xf32>
    %c8_i32_39 = arith.constant 8 : i32
    %89 = tpu.dynamic_rotate %85 by %c8_i32_39 dim 0 : vector<64x32xf32>, i32 -> vector<64x32xf32>
    %90 = vector.broadcast %3 : vector<64x1xf32> to vector<64x32xf32>
    %91 = arith.mulf %89, %90 : vector<64x32xf32>
    %c7_i32_40 = arith.constant 7 : i32
    %92 = tpu.dynamic_rotate %85 by %c7_i32_40 dim 0 : vector<64x32xf32>, i32 -> vector<64x32xf32>
    %93 = vector.broadcast %5 : vector<64x1xf32> to vector<64x32xf32>
    %94 = arith.mulf %92, %93 : vector<64x32xf32>
    %c1_i32_41 = arith.constant 1 : i32
    %95 = tpu.dynamic_rotate %85 by %c1_i32_41 dim 0 : vector<64x32xf32>, i32 -> vector<64x32xf32>
    %96 = vector.broadcast %7 : vector<64x1xf32> to vector<64x32xf32>
    %97 = arith.mulf %95, %96 : vector<64x32xf32>
    %c63_i32_42 = arith.constant 63 : i32
    %98 = tpu.dynamic_rotate %85 by %c63_i32_42 dim 0 : vector<64x32xf32>, i32 -> vector<64x32xf32>
    %99 = vector.broadcast %9 : vector<64x1xf32> to vector<64x32xf32>
    %100 = arith.mulf %98, %99 : vector<64x32xf32>
    %c57_i32_43 = arith.constant 57 : i32
    %101 = tpu.dynamic_rotate %85 by %c57_i32_43 dim 0 : vector<64x32xf32>, i32 -> vector<64x32xf32>
    %102 = vector.broadcast %11 : vector<64x1xf32> to vector<64x32xf32>
    %103 = arith.mulf %101, %102 : vector<64x32xf32>
    %c56_i32_44 = arith.constant 56 : i32
    %104 = tpu.dynamic_rotate %85 by %c56_i32_44 dim 0 : vector<64x32xf32>, i32 -> vector<64x32xf32>
    %105 = vector.broadcast %13 : vector<64x1xf32> to vector<64x32xf32>
    %106 = arith.mulf %104, %105 : vector<64x32xf32>
    %c55_i32_45 = arith.constant 55 : i32
    %107 = tpu.dynamic_rotate %85 by %c55_i32_45 dim 0 : vector<64x32xf32>, i32 -> vector<64x32xf32>
    %108 = vector.broadcast %15 : vector<64x1xf32> to vector<64x32xf32>
    %109 = arith.mulf %107, %108 : vector<64x32xf32>
    %110 = tpu.concatenate %88, %91, %94, %97, %85, %100, %103, %106, %109 in 1 : vector<64x32xf32>, vector<64x32xf32>, vector<64x32xf32>, vector<64x32xf32>, vector<64x32xf32>, vector<64x32xf32>, vector<64x32xf32>, vector<64x32xf32>, vector<64x32xf32> -> vector<64x288xf32>
    %111 = arith.truncf %110 : vector<64x288xf32> to vector<64x288xbf16>
    %c0_46 = arith.constant 0 : index
    %c0_47 = arith.constant 0 : index
    %112 = vector.load %arg7[%c0_46, %c0_47] : memref<288x32xbf16, #tpu.memory_space<vmem>>, vector<288x32xbf16>
    %cst_48 = arith.constant dense<0.000000e+00> : vector<64x32xf32>
    %113 = tpu.matmul %111, %112, %cst_48 {dimension_numbers = #tpu.dot_dimension_numbers<[1], [0], [0], [1], [0, 0, 1, 1], [], []>} : vector<64x288xbf16>, vector<288x32xbf16>, vector<64x32xf32> -> vector<64x32xf32>
    %c0_49 = arith.constant 0 : index
    %c0_50 = arith.constant 0 : index
    %114 = vector.load %arg8[%c0_49, %c0_50] : memref<1x32xf32, #tpu.memory_space<vmem>>, vector<1x32xf32>
    %115 = vector.broadcast %114 : vector<1x32xf32> to vector<64x32xf32>
    %116 = arith.addf %113, %115 : vector<64x32xf32>
    %cst_51 = arith.constant 0.000000e+00 : f32
    %117 = vector.broadcast %cst_51 : f32 to vector<64x32xf32>
    %118 = arith.maximumf %116, %117 : vector<64x32xf32>
    %c9_i32_52 = arith.constant 9 : i32
    %119 = tpu.dynamic_rotate %118 by %c9_i32_52 dim 0 : vector<64x32xf32>, i32 -> vector<64x32xf32>
    %120 = vector.broadcast %1 : vector<64x1xf32> to vector<64x32xf32>
    %121 = arith.mulf %119, %120 : vector<64x32xf32>
    %c8_i32_53 = arith.constant 8 : i32
    %122 = tpu.dynamic_rotate %118 by %c8_i32_53 dim 0 : vector<64x32xf32>, i32 -> vector<64x32xf32>
    %123 = vector.broadcast %3 : vector<64x1xf32> to vector<64x32xf32>
    %124 = arith.mulf %122, %123 : vector<64x32xf32>
    %c7_i32_54 = arith.constant 7 : i32
    %125 = tpu.dynamic_rotate %118 by %c7_i32_54 dim 0 : vector<64x32xf32>, i32 -> vector<64x32xf32>
    %126 = vector.broadcast %5 : vector<64x1xf32> to vector<64x32xf32>
    %127 = arith.mulf %125, %126 : vector<64x32xf32>
    %c1_i32_55 = arith.constant 1 : i32
    %128 = tpu.dynamic_rotate %118 by %c1_i32_55 dim 0 : vector<64x32xf32>, i32 -> vector<64x32xf32>
    %129 = vector.broadcast %7 : vector<64x1xf32> to vector<64x32xf32>
    %130 = arith.mulf %128, %129 : vector<64x32xf32>
    %c63_i32_56 = arith.constant 63 : i32
    %131 = tpu.dynamic_rotate %118 by %c63_i32_56 dim 0 : vector<64x32xf32>, i32 -> vector<64x32xf32>
    %132 = vector.broadcast %9 : vector<64x1xf32> to vector<64x32xf32>
    %133 = arith.mulf %131, %132 : vector<64x32xf32>
    %c57_i32_57 = arith.constant 57 : i32
    %134 = tpu.dynamic_rotate %118 by %c57_i32_57 dim 0 : vector<64x32xf32>, i32 -> vector<64x32xf32>
    %135 = vector.broadcast %11 : vector<64x1xf32> to vector<64x32xf32>
    %136 = arith.mulf %134, %135 : vector<64x32xf32>
    %c56_i32_58 = arith.constant 56 : i32
    %137 = tpu.dynamic_rotate %118 by %c56_i32_58 dim 0 : vector<64x32xf32>, i32 -> vector<64x32xf32>
    %138 = vector.broadcast %13 : vector<64x1xf32> to vector<64x32xf32>
    %139 = arith.mulf %137, %138 : vector<64x32xf32>
    %c55_i32_59 = arith.constant 55 : i32
    %140 = tpu.dynamic_rotate %118 by %c55_i32_59 dim 0 : vector<64x32xf32>, i32 -> vector<64x32xf32>
    %141 = vector.broadcast %15 : vector<64x1xf32> to vector<64x32xf32>
    %142 = arith.mulf %140, %141 : vector<64x32xf32>
    %143 = tpu.concatenate %121, %124, %127, %130, %118, %133, %136, %139, %142 in 1 : vector<64x32xf32>, vector<64x32xf32>, vector<64x32xf32>, vector<64x32xf32>, vector<64x32xf32>, vector<64x32xf32>, vector<64x32xf32>, vector<64x32xf32>, vector<64x32xf32> -> vector<64x288xf32>
    %144 = arith.truncf %143 : vector<64x288xf32> to vector<64x288xbf16>
    %c0_60 = arith.constant 0 : index
    %c0_61 = arith.constant 0 : index
    %145 = vector.load %arg9[%c0_60, %c0_61] : memref<288x32xbf16, #tpu.memory_space<vmem>>, vector<288x32xbf16>
    %cst_62 = arith.constant dense<0.000000e+00> : vector<64x32xf32>
    %146 = tpu.matmul %144, %145, %cst_62 {dimension_numbers = #tpu.dot_dimension_numbers<[1], [0], [0], [1], [0, 0, 1, 1], [], []>} : vector<64x288xbf16>, vector<288x32xbf16>, vector<64x32xf32> -> vector<64x32xf32>
    %c0_63 = arith.constant 0 : index
    %c0_64 = arith.constant 0 : index
    %147 = vector.load %arg10[%c0_63, %c0_64] : memref<1x32xf32, #tpu.memory_space<vmem>>, vector<1x32xf32>
    %148 = vector.broadcast %147 : vector<1x32xf32> to vector<64x32xf32>
    %149 = arith.addf %146, %148 : vector<64x32xf32>
    %150 = arith.addf %149, %85 : vector<64x32xf32>
    %cst_65 = arith.constant 0.000000e+00 : f32
    %151 = vector.broadcast %cst_65 : f32 to vector<64x32xf32>
    %152 = arith.maximumf %150, %151 : vector<64x32xf32>
    %153 = tpu.concatenate %85, %152 in 1 : vector<64x32xf32>, vector<64x32xf32> -> vector<64x64xf32>
    %c9_i32_66 = arith.constant 9 : i32
    %154 = tpu.dynamic_rotate %153 by %c9_i32_66 dim 0 : vector<64x64xf32>, i32 -> vector<64x64xf32>
    %155 = vector.broadcast %1 : vector<64x1xf32> to vector<64x64xf32>
    %156 = arith.mulf %154, %155 : vector<64x64xf32>
    %c8_i32_67 = arith.constant 8 : i32
    %157 = tpu.dynamic_rotate %153 by %c8_i32_67 dim 0 : vector<64x64xf32>, i32 -> vector<64x64xf32>
    %158 = vector.broadcast %3 : vector<64x1xf32> to vector<64x64xf32>
    %159 = arith.mulf %157, %158 : vector<64x64xf32>
    %c7_i32_68 = arith.constant 7 : i32
    %160 = tpu.dynamic_rotate %153 by %c7_i32_68 dim 0 : vector<64x64xf32>, i32 -> vector<64x64xf32>
    %161 = vector.broadcast %5 : vector<64x1xf32> to vector<64x64xf32>
    %162 = arith.mulf %160, %161 : vector<64x64xf32>
    %c1_i32_69 = arith.constant 1 : i32
    %163 = tpu.dynamic_rotate %153 by %c1_i32_69 dim 0 : vector<64x64xf32>, i32 -> vector<64x64xf32>
    %164 = vector.broadcast %7 : vector<64x1xf32> to vector<64x64xf32>
    %165 = arith.mulf %163, %164 : vector<64x64xf32>
    %c63_i32_70 = arith.constant 63 : i32
    %166 = tpu.dynamic_rotate %153 by %c63_i32_70 dim 0 : vector<64x64xf32>, i32 -> vector<64x64xf32>
    %167 = vector.broadcast %9 : vector<64x1xf32> to vector<64x64xf32>
    %168 = arith.mulf %166, %167 : vector<64x64xf32>
    %c57_i32_71 = arith.constant 57 : i32
    %169 = tpu.dynamic_rotate %153 by %c57_i32_71 dim 0 : vector<64x64xf32>, i32 -> vector<64x64xf32>
    %170 = vector.broadcast %11 : vector<64x1xf32> to vector<64x64xf32>
    %171 = arith.mulf %169, %170 : vector<64x64xf32>
    %c56_i32_72 = arith.constant 56 : i32
    %172 = tpu.dynamic_rotate %153 by %c56_i32_72 dim 0 : vector<64x64xf32>, i32 -> vector<64x64xf32>
    %173 = vector.broadcast %13 : vector<64x1xf32> to vector<64x64xf32>
    %174 = arith.mulf %172, %173 : vector<64x64xf32>
    %c55_i32_73 = arith.constant 55 : i32
    %175 = tpu.dynamic_rotate %153 by %c55_i32_73 dim 0 : vector<64x64xf32>, i32 -> vector<64x64xf32>
    %176 = vector.broadcast %15 : vector<64x1xf32> to vector<64x64xf32>
    %177 = arith.mulf %175, %176 : vector<64x64xf32>
    %178 = tpu.concatenate %156, %159, %162, %165, %153, %168, %171, %174, %177 in 1 : vector<64x64xf32>, vector<64x64xf32>, vector<64x64xf32>, vector<64x64xf32>, vector<64x64xf32>, vector<64x64xf32>, vector<64x64xf32>, vector<64x64xf32>, vector<64x64xf32> -> vector<64x576xf32>
    %179 = arith.truncf %178 : vector<64x576xf32> to vector<64x576xbf16>
    %c0_74 = arith.constant 0 : index
    %c0_75 = arith.constant 0 : index
    %180 = vector.load %arg11[%c0_74, %c0_75] : memref<576x64xbf16, #tpu.memory_space<vmem>>, vector<576x64xbf16>
    %cst_76 = arith.constant dense<0.000000e+00> : vector<64x64xf32>
    %181 = tpu.matmul %179, %180, %cst_76 {dimension_numbers = #tpu.dot_dimension_numbers<[1], [0], [0], [1], [0, 0, 1, 1], [], []>} : vector<64x576xbf16>, vector<576x64xbf16>, vector<64x64xf32> -> vector<64x64xf32>
    %c0_77 = arith.constant 0 : index
    %c0_78 = arith.constant 0 : index
    %182 = vector.load %arg12[%c0_77, %c0_78] : memref<1x64xf32, #tpu.memory_space<vmem>>, vector<1x64xf32>
    %183 = vector.broadcast %182 : vector<1x64xf32> to vector<64x64xf32>
    %184 = arith.addf %181, %183 : vector<64x64xf32>
    %cst_79 = arith.constant 0.000000e+00 : f32
    %185 = vector.broadcast %cst_79 : f32 to vector<64x64xf32>
    %186 = arith.maximumf %184, %185 : vector<64x64xf32>
    %c9_i32_80 = arith.constant 9 : i32
    %187 = tpu.dynamic_rotate %186 by %c9_i32_80 dim 0 : vector<64x64xf32>, i32 -> vector<64x64xf32>
    %188 = vector.broadcast %1 : vector<64x1xf32> to vector<64x64xf32>
    %189 = arith.mulf %187, %188 : vector<64x64xf32>
    %c8_i32_81 = arith.constant 8 : i32
    %190 = tpu.dynamic_rotate %186 by %c8_i32_81 dim 0 : vector<64x64xf32>, i32 -> vector<64x64xf32>
    %191 = vector.broadcast %3 : vector<64x1xf32> to vector<64x64xf32>
    %192 = arith.mulf %190, %191 : vector<64x64xf32>
    %c7_i32_82 = arith.constant 7 : i32
    %193 = tpu.dynamic_rotate %186 by %c7_i32_82 dim 0 : vector<64x64xf32>, i32 -> vector<64x64xf32>
    %194 = vector.broadcast %5 : vector<64x1xf32> to vector<64x64xf32>
    %195 = arith.mulf %193, %194 : vector<64x64xf32>
    %c1_i32_83 = arith.constant 1 : i32
    %196 = tpu.dynamic_rotate %186 by %c1_i32_83 dim 0 : vector<64x64xf32>, i32 -> vector<64x64xf32>
    %197 = vector.broadcast %7 : vector<64x1xf32> to vector<64x64xf32>
    %198 = arith.mulf %196, %197 : vector<64x64xf32>
    %c63_i32_84 = arith.constant 63 : i32
    %199 = tpu.dynamic_rotate %186 by %c63_i32_84 dim 0 : vector<64x64xf32>, i32 -> vector<64x64xf32>
    %200 = vector.broadcast %9 : vector<64x1xf32> to vector<64x64xf32>
    %201 = arith.mulf %199, %200 : vector<64x64xf32>
    %c57_i32_85 = arith.constant 57 : i32
    %202 = tpu.dynamic_rotate %186 by %c57_i32_85 dim 0 : vector<64x64xf32>, i32 -> vector<64x64xf32>
    %203 = vector.broadcast %11 : vector<64x1xf32> to vector<64x64xf32>
    %204 = arith.mulf %202, %203 : vector<64x64xf32>
    %c56_i32_86 = arith.constant 56 : i32
    %205 = tpu.dynamic_rotate %186 by %c56_i32_86 dim 0 : vector<64x64xf32>, i32 -> vector<64x64xf32>
    %206 = vector.broadcast %13 : vector<64x1xf32> to vector<64x64xf32>
    %207 = arith.mulf %205, %206 : vector<64x64xf32>
    %c55_i32_87 = arith.constant 55 : i32
    %208 = tpu.dynamic_rotate %186 by %c55_i32_87 dim 0 : vector<64x64xf32>, i32 -> vector<64x64xf32>
    %209 = vector.broadcast %15 : vector<64x1xf32> to vector<64x64xf32>
    %210 = arith.mulf %208, %209 : vector<64x64xf32>
    %211 = tpu.concatenate %189, %192, %195, %198, %186, %201, %204, %207, %210 in 1 : vector<64x64xf32>, vector<64x64xf32>, vector<64x64xf32>, vector<64x64xf32>, vector<64x64xf32>, vector<64x64xf32>, vector<64x64xf32>, vector<64x64xf32>, vector<64x64xf32> -> vector<64x576xf32>
    %212 = arith.truncf %211 : vector<64x576xf32> to vector<64x576xbf16>
    %c0_88 = arith.constant 0 : index
    %c0_89 = arith.constant 0 : index
    %213 = vector.load %arg13[%c0_88, %c0_89] : memref<576x64xbf16, #tpu.memory_space<vmem>>, vector<576x64xbf16>
    %cst_90 = arith.constant dense<0.000000e+00> : vector<64x64xf32>
    %214 = tpu.matmul %212, %213, %cst_90 {dimension_numbers = #tpu.dot_dimension_numbers<[1], [0], [0], [1], [0, 0, 1, 1], [], []>} : vector<64x576xbf16>, vector<576x64xbf16>, vector<64x64xf32> -> vector<64x64xf32>
    %c0_91 = arith.constant 0 : index
    %c0_92 = arith.constant 0 : index
    %215 = vector.load %arg14[%c0_91, %c0_92] : memref<1x64xf32, #tpu.memory_space<vmem>>, vector<1x64xf32>
    %216 = vector.broadcast %215 : vector<1x64xf32> to vector<64x64xf32>
    %217 = arith.addf %214, %216 : vector<64x64xf32>
    %218 = arith.addf %217, %153 : vector<64x64xf32>
    %cst_93 = arith.constant 0.000000e+00 : f32
    %219 = vector.broadcast %cst_93 : f32 to vector<64x64xf32>
    %220 = arith.maximumf %218, %219 : vector<64x64xf32>
    %221 = tpu.concatenate %153, %220 in 1 : vector<64x64xf32>, vector<64x64xf32> -> vector<64x128xf32>
    %222 = arith.truncf %221 : vector<64x128xf32> to vector<64x128xbf16>
    %c0_94 = arith.constant 0 : index
    %c0_95 = arith.constant 0 : index
    %223 = vector.load %arg15[%c0_94, %c0_95] : memref<128x16xbf16, #tpu.memory_space<vmem>>, vector<128x16xbf16>
    %cst_96 = arith.constant dense<0.000000e+00> : vector<64x16xf32>
    %224 = tpu.matmul %222, %223, %cst_96 {dimension_numbers = #tpu.dot_dimension_numbers<[1], [0], [0], [1], [0, 0, 1, 1], [], []>} : vector<64x128xbf16>, vector<128x16xbf16>, vector<64x16xf32> -> vector<64x16xf32>
    %c0_97 = arith.constant 0 : index
    %c0_98 = arith.constant 0 : index
    %225 = vector.load %arg16[%c0_97, %c0_98] : memref<1x16xf32, #tpu.memory_space<vmem>>, vector<1x16xf32>
    %226 = vector.broadcast %225 : vector<1x16xf32> to vector<64x16xf32>
    %227 = arith.addf %224, %226 : vector<64x16xf32>
    %cst_99 = arith.constant 0.000000e+00 : f32
    %228 = vector.broadcast %cst_99 : f32 to vector<64x16xf32>
    %229 = arith.maximumf %227, %228 : vector<64x16xf32>
    %230 = vector.shape_cast %229 : vector<64x16xf32> to vector<1x64x16xf32>
    %cst_100 = arith.constant dense<0.000000e+00> : vector<1x16xf32>
    %231 = vector.multi_reduction <add>, %230, %cst_100 [1] : vector<1x64x16xf32> to vector<1x16xf32>
    %cst_101 = arith.constant 1.562500e-02 : f32
    %232 = vector.broadcast %cst_101 : f32 to vector<1x16xf32>
    %233 = arith.mulf %231, %232 : vector<1x16xf32>
    %c0_102 = arith.constant 0 : index
    %c0_103 = arith.constant 0 : index
    %234 = vector.load %arg17[%c0_102, %c0_103] : memref<16x3xf32, #tpu.memory_space<vmem>>, vector<16x3xf32>
    %cst_104 = arith.constant dense<0.000000e+00> : vector<1x3xf32>
    %235 = tpu.matmul %233, %234, %cst_104 {dimension_numbers = #tpu.dot_dimension_numbers<[1], [0], [0], [1], [0, 0, 1, 1], [], []>} : vector<1x16xf32>, vector<16x3xf32>, vector<1x3xf32> -> vector<1x3xf32>
    %c0_105 = arith.constant 0 : index
    %c0_106 = arith.constant 0 : index
    %236 = vector.load %arg18[%c0_105, %c0_106] : memref<1x3xf32, #tpu.memory_space<vmem>>, vector<1x3xf32>
    %237 = arith.addf %235, %236 : vector<1x3xf32>
    %cst_107 = arith.constant 0.000000e+00 : f32
    %238 = vector.broadcast %cst_107 : f32 to vector<1x3xf32>
    %239 = arith.maximumf %237, %238 : vector<1x3xf32>
    %c0_108 = arith.constant 0 : index
    %c0_109 = arith.constant 0 : index
    %240 = vector.load %arg19[%c0_108, %c0_109] : memref<3x16xf32, #tpu.memory_space<vmem>>, vector<3x16xf32>
    %cst_110 = arith.constant dense<0.000000e+00> : vector<1x16xf32>
    %241 = tpu.matmul %239, %240, %cst_110 {dimension_numbers = #tpu.dot_dimension_numbers<[1], [0], [0], [1], [0, 0, 1, 1], [], []>} : vector<1x3xf32>, vector<3x16xf32>, vector<1x16xf32> -> vector<1x16xf32>
    %c0_111 = arith.constant 0 : index
    %c0_112 = arith.constant 0 : index
    %242 = vector.load %arg20[%c0_111, %c0_112] : memref<1x16xf32, #tpu.memory_space<vmem>>, vector<1x16xf32>
    %243 = arith.addf %241, %242 : vector<1x16xf32>
    %cst_113 = arith.constant 0.000000e+00 : f32
    %244 = vector.broadcast %cst_113 : f32 to vector<1x16xf32>
    %245 = arith.subf %244, %243 : vector<1x16xf32>
    %246 = math.exp %245 : vector<1x16xf32>
    %cst_114 = arith.constant 1.000000e+00 : f32
    %247 = vector.broadcast %cst_114 : f32 to vector<1x16xf32>
    %248 = arith.addf %247, %246 : vector<1x16xf32>
    %cst_115 = arith.constant 1.000000e+00 : f32
    %249 = vector.broadcast %cst_115 : f32 to vector<1x16xf32>
    %250 = arith.divf %249, %248 : vector<1x16xf32>
    %251 = vector.shape_cast %250 : vector<1x16xf32> to vector<1x1x16xf32>
    %252 = vector.broadcast %251 : vector<1x1x16xf32> to vector<1x64x16xf32>
    %253 = arith.mulf %230, %252 : vector<1x64x16xf32>
    %c0_116 = arith.constant 0 : index
    %c0_117 = arith.constant 0 : index
    %c0_118 = arith.constant 0 : index
    %254 = vector.load %arg21[%c0_116, %c0_117, %c0_118] : memref<1x64x16xf32, #tpu.memory_space<vmem>>, vector<1x64x16xf32>
    tpu.vector_store %arg21[%c0_116, %c0_117, %c0_118], %253 {strides = array<i32>} : memref<1x64x16xf32, #tpu.memory_space<vmem>>, vector<1x64x16xf32>,
    return
  }
  func.func @transform_0(%arg0: i32) -> (i32, i32, i32) {
    %c0_i32 = arith.constant 0 : i32
    %c0_i32_0 = arith.constant 0 : i32
    %c0_i32_1 = arith.constant 0 : i32
    return %arg0, %c0_i32, %c0_i32_0 : i32, i32, i32
  }
  func.func @transform_1(%arg0: i32) -> (i32, i32, i32) {
    %c0_i32 = arith.constant 0 : i32
    %c0_i32_0 = arith.constant 0 : i32
    %c0_i32_1 = arith.constant 0 : i32
    %c0_i32_2 = arith.constant 0 : i32
    return %c0_i32, %c0_i32_0, %c0_i32_1 : i32, i32, i32
  }
  func.func @transform_2(%arg0: i32) -> (i32, i32) {
    %c0_i32 = arith.constant 0 : i32
    %c0_i32_0 = arith.constant 0 : i32
    %c0_i32_1 = arith.constant 0 : i32
    return %c0_i32, %c0_i32_0 : i32, i32
  }
  func.func @transform_3(%arg0: i32) -> (i32, i32) {
    %c0_i32 = arith.constant 0 : i32
    %c0_i32_0 = arith.constant 0 : i32
    %c0_i32_1 = arith.constant 0 : i32
    return %c0_i32, %c0_i32_0 : i32, i32
  }
  func.func @transform_4(%arg0: i32) -> (i32, i32) {
    %c0_i32 = arith.constant 0 : i32
    %c0_i32_0 = arith.constant 0 : i32
    %c0_i32_1 = arith.constant 0 : i32
    return %c0_i32, %c0_i32_0 : i32, i32
  }
  func.func @transform_5(%arg0: i32) -> (i32, i32) {
    %c0_i32 = arith.constant 0 : i32
    %c0_i32_0 = arith.constant 0 : i32
    %c0_i32_1 = arith.constant 0 : i32
    return %c0_i32, %c0_i32_0 : i32, i32
  }
  func.func @transform_6(%arg0: i32) -> (i32, i32) {
    %c0_i32 = arith.constant 0 : i32
    %c0_i32_0 = arith.constant 0 : i32
    %c0_i32_1 = arith.constant 0 : i32
    return %c0_i32, %c0_i32_0 : i32, i32
  }
  func.func @transform_7(%arg0: i32) -> (i32, i32) {
    %c0_i32 = arith.constant 0 : i32
    %c0_i32_0 = arith.constant 0 : i32
    %c0_i32_1 = arith.constant 0 : i32
    return %c0_i32, %c0_i32_0 : i32, i32
  }
  func.func @transform_8(%arg0: i32) -> (i32, i32) {
    %c0_i32 = arith.constant 0 : i32
    %c0_i32_0 = arith.constant 0 : i32
    %c0_i32_1 = arith.constant 0 : i32
    return %c0_i32, %c0_i32_0 : i32, i32
  }
  func.func @transform_9(%arg0: i32) -> (i32, i32) {
    %c0_i32 = arith.constant 0 : i32
    %c0_i32_0 = arith.constant 0 : i32
    %c0_i32_1 = arith.constant 0 : i32
    return %c0_i32, %c0_i32_0 : i32, i32
  }
  func.func @transform_10(%arg0: i32) -> (i32, i32) {
    %c0_i32 = arith.constant 0 : i32
    %c0_i32_0 = arith.constant 0 : i32
    %c0_i32_1 = arith.constant 0 : i32
    return %c0_i32, %c0_i32_0 : i32, i32
  }
  func.func @transform_11(%arg0: i32) -> (i32, i32) {
    %c0_i32 = arith.constant 0 : i32
    %c0_i32_0 = arith.constant 0 : i32
    %c0_i32_1 = arith.constant 0 : i32
    return %c0_i32, %c0_i32_0 : i32, i32
  }
  func.func @transform_12(%arg0: i32) -> (i32, i32) {
    %c0_i32 = arith.constant 0 : i32
    %c0_i32_0 = arith.constant 0 : i32
    %c0_i32_1 = arith.constant 0 : i32
    return %c0_i32, %c0_i32_0 : i32, i32
  }
  func.func @transform_13(%arg0: i32) -> (i32, i32) {
    %c0_i32 = arith.constant 0 : i32
    %c0_i32_0 = arith.constant 0 : i32
    %c0_i32_1 = arith.constant 0 : i32
    return %c0_i32, %c0_i32_0 : i32, i32
  }
  func.func @transform_14(%arg0: i32) -> (i32, i32) {
    %c0_i32 = arith.constant 0 : i32
    %c0_i32_0 = arith.constant 0 : i32
    %c0_i32_1 = arith.constant 0 : i32
    return %c0_i32, %c0_i32_0 : i32, i32
  }
  func.func @transform_15(%arg0: i32) -> (i32, i32) {
    %c0_i32 = arith.constant 0 : i32
    %c0_i32_0 = arith.constant 0 : i32
    %c0_i32_1 = arith.constant 0 : i32
    return %c0_i32, %c0_i32_0 : i32, i32
  }
  func.func @transform_16(%arg0: i32) -> (i32, i32) {
    %c0_i32 = arith.constant 0 : i32
    %c0_i32_0 = arith.constant 0 : i32
    %c0_i32_1 = arith.constant 0 : i32
    return %c0_i32, %c0_i32_0 : i32, i32
  }
  func.func @transform_17(%arg0: i32) -> (i32, i32) {
    %c0_i32 = arith.constant 0 : i32
    %c0_i32_0 = arith.constant 0 : i32
    %c0_i32_1 = arith.constant 0 : i32
    return %c0_i32, %c0_i32_0 : i32, i32
  }
  func.func @transform_18(%arg0: i32) -> (i32, i32) {
    %c0_i32 = arith.constant 0 : i32
    %c0_i32_0 = arith.constant 0 : i32
    %c0_i32_1 = arith.constant 0 : i32
    return %c0_i32, %c0_i32_0 : i32, i32
  }
  func.func @transform_19(%arg0: i32) -> (i32, i32) {
    %c0_i32 = arith.constant 0 : i32
    %c0_i32_0 = arith.constant 0 : i32
    %c0_i32_1 = arith.constant 0 : i32
    return %c0_i32, %c0_i32_0 : i32, i32
  }
  func.func @transform_20(%arg0: i32) -> (i32, i32, i32) {
    %c0_i32 = arith.constant 0 : i32
    %c0_i32_0 = arith.constant 0 : i32
    %c0_i32_1 = arith.constant 0 : i32
    return %arg0, %c0_i32, %c0_i32_0 : i32, i32, i32
  }
}

</mosaic_0001>

<llo_original>
// kernel: tpu_custom_call.1
$region0: #{tpu_custom_call.1}
  #allocation0 [shape = 'u32[]', space=smem, size = 0x4, offset = 0x4, fixed_abs, tag = 'smem constant byte address 0x4 - core index']
  #allocation1 [shape = 'u32[144,128]{1,0:T(1,128)}', space=vmem, size = 0x12000, scoped, tag = 'internal scratch']
  %s0 = inlined_call_operand.vmem [shape: f32[2,64,16], index: 0, kind: input, shape index: {}]
  %s1 = inlined_call_operand.vmem [shape: f32[9,64,1], index: 1, kind: input, shape index: {}]
  %s2 = inlined_call_operand.vmem [shape: bf16[144,16], index: 2, kind: input, shape index: {}]
  %s3 = inlined_call_operand.vmem [shape: f32[1,16], index: 3, kind: input, shape index: {}]
  %s4 = inlined_call_operand.vmem [shape: bf16[144,16], index: 4, kind: input, shape index: {}]
  %s5 = inlined_call_operand.vmem [shape: f32[1,16], index: 5, kind: input, shape index: {}]
  %s6 = inlined_call_operand.vmem [shape: bf16[288,32], index: 6, kind: input, shape index: {}]
  %s7 = inlined_call_operand.vmem [shape: f32[1,32], index: 7, kind: input, shape index: {}]
  %s8 = inlined_call_operand.vmem [shape: bf16[288,32], index: 8, kind: input, shape index: {}]
  %s9 = inlined_call_operand.vmem [shape: f32[1,32], index: 9, kind: input, shape index: {}]
  %s10 = inlined_call_operand.vmem [shape: bf16[576,64], index: 10, kind: input, shape index: {}]
  %s11 = inlined_call_operand.vmem [shape: f32[1,64], index: 11, kind: input, shape index: {}]
  %s12 = inlined_call_operand.vmem [shape: bf16[576,64], index: 12, kind: input, shape index: {}]
  %s13 = inlined_call_operand.vmem [shape: f32[1,64], index: 13, kind: input, shape index: {}]
  %s14 = inlined_call_operand.vmem [shape: bf16[128,16], index: 14, kind: input, shape index: {}]
  %s15 = inlined_call_operand.vmem [shape: f32[1,16], index: 15, kind: input, shape index: {}]
  %s16 = inlined_call_operand.vmem [shape: f32[16,3], index: 16, kind: input, shape index: {}]
  %s17 = inlined_call_operand.vmem [shape: f32[1,3], index: 17, kind: input, shape index: {}]
  %s18 = inlined_call_operand.vmem [shape: f32[3,16], index: 18, kind: input, shape index: {}]
  %s19 = inlined_call_operand.vmem [shape: f32[1,16], index: 19, kind: input, shape index: {}]
  %s20 = inlined_call_operand.vmem [shape: f32[2,64,16], index: 20, kind: output, shape index: {}]
  %s21 = sld [smem:[#allocation0]]
  $region113: #{tpu_custom_call.1} parent=0
    _
  %s23 = ssub.s32 1, %s21
  %s24 = scalar_select 0, %s23, %s21
  loop: start=0, step=1, limit=4
  $region2: #{tpu_custom_call.1} parent=0 // loop_pre_header
    _
  $region3: #{tpu_custom_call.1} parent=0 // loop_header
    %s26 = sphi 0, %s30
    %p27 = scmp.ge.s32.totalorder %s26, 4
    %s36 = sphi 0, %s38
    %s39 = sphi 0, %s36
    %s40 = sphi 0, %s39
    %s56 = sphi 0, %s40
    %s60 = sphi 0, %s60
    %s62 = sphi 0, %s60
    %s63 = sphi 0, %s62
    %s77 = sphi 0, %s63
    %s81 = sphi 0, %s81
    %s83 = sphi 0, %s81
    %s84 = sphi 0, %s83
    %s98 = sphi 0, %s84
    %s102 = sphi 0, %s102
    %s104 = sphi 0, %s102
    %s105 = sphi 0, %s104
    %s119 = sphi 0, %s105
    %s123 = sphi 0, %s123
    %s125 = sphi 0, %s123
    %s126 = sphi 0, %s125
    %s140 = sphi 0, %s126
    %s144 = sphi 0, %s144
    %s146 = sphi 0, %s144
    %s147 = sphi 0, %s146
    %s161 = sphi 0, %s147
    %s165 = sphi 0, %s165
    %s167 = sphi 0, %s165
    %s168 = sphi 0, %s167
    %s182 = sphi 0, %s168
    %s186 = sphi 0, %s186
    %s188 = sphi 0, %s186
    %s189 = sphi 0, %s188
    %s203 = sphi 0, %s189
    %s207 = sphi 0, %s207
    %s209 = sphi 0, %s207
    %s210 = sphi 0, %s209
    %s224 = sphi 0, %s210
    %s228 = sphi 0, %s228
    %s230 = sphi 0, %s228
    %s231 = sphi 0, %s230
    %s245 = sphi 0, %s231
    %s249 = sphi 0, %s249
    %s251 = sphi 0, %s249
    %s252 = sphi 0, %s251
    %s266 = sphi 0, %s252
    %s270 = sphi 0, %s270
    %s272 = sphi 0, %s270
    %s273 = sphi 0, %s272
    %s287 = sphi 0, %s273
    %s291 = sphi 0, %s291
    %s293 = sphi 0, %s291
    %s294 = sphi 0, %s293
    %s308 = sphi 0, %s294
    %s312 = sphi 0, %s312
    %s314 = sphi 0, %s312
    %s315 = sphi 0, %s314
    %s329 = sphi 0, %s315
    %s333 = sphi 0, %s333
    %s335 = sphi 0, %s333
    %s336 = sphi 0, %s335
    %s350 = sphi 0, %s336
    %s354 = sphi 0, %s354
    %s356 = sphi 0, %s354
    %s357 = sphi 0, %s356
    %s371 = sphi 0, %s357
    %s375 = sphi 0, %s375
    %s377 = sphi 0, %s375
    %s378 = sphi 0, %s377
    %s392 = sphi 0, %s378
    %s396 = sphi 0, %s396
    %s398 = sphi 0, %s396
    %s399 = sphi 0, %s398
    %s413 = sphi 0, %s399
    %s417 = sphi 0, %s417
    %s419 = sphi 0, %s417
    %s420 = sphi 0, %s419
    %s434 = sphi 0, %s420
    %s438 = sphi 0, %s438
    %s440 = sphi 0, %s438
    %s441 = sphi 0, %s440
    %s455 = sphi 0, %s441
    %s461 = sphi 0, %s463
    %s464 = sphi 0, %s461
    %s465 = sphi 0, %s464
    %s481 = sphi 0, %s465
  $region4: #{tpu_custom_call.1} parent=0 // loop_header_branch
    %29 = sbr.rel (%p27) target = $region8
  $region5: #{tpu_custom_call.1} parent=0 // loop_body
    %s31 = ssub.s32 %s26, 1
    %s32 = ssub.s32 %s26, 2
    %s33 = sadd.s32 %s26, 1
    %s34 = ssub.s32 %s26, %s33
    %p35 = scmp.eq.s32.totalorder %s34, 0
    %s37 = sadd.s32 %s36, 1
    %s38 = scalar_select %p35, %s36, %s37
    %p41 = pneg %p35
    %p42 = scmp.eq.s32.totalorder %s26, 1
    %p43 = por %p41, %p42
    %p44 = scmp.ne.s32.totalorder %s36, %s39
    %p45 = scmp.eq.s32.totalorder %s26, 0
    %p46 = por %p44, %p45
    %p47 = scmp.ne.s32.totalorder %s36, %s39
    %p48 = scmp.eq.s32.totalorder %s31, 1
    %p49 = por %p47, %p48
    %p50 = scmp.ne.s32.totalorder %s39, %s40
    %p51 = scmp.eq.s32.totalorder %s31, 0
    %p52 = por %p50, %p51
    %p53 = scmp.ne.s32.totalorder %s39, %s40
    %p54 = scmp.eq.s32.totalorder %s32, 1
    %p55 = por %p53, %p54
    %p57 = scmp.ne.s32.totalorder %s40, %s56
    %p58 = scmp.eq.s32.totalorder %s32, 0
    %p59 = por %p57, %p58
    %s61 = sadd.s32 %s60, 1
    %p64 = scmp.eq.s32.totalorder %s26, 1
    %p65 = scmp.ne.s32.totalorder %s60, %s62
    %p66 = scmp.eq.s32.totalorder %s26, 0
    %p67 = por %p65, %p66
    %p68 = scmp.ne.s32.totalorder %s60, %s62
    %p69 = scmp.eq.s32.totalorder %s31, 1
    %p70 = por %p68, %p69
    %p71 = scmp.ne.s32.totalorder %s62, %s63
    %p72 = scmp.eq.s32.totalorder %s31, 0
    %p73 = por %p71, %p72
    %p74 = scmp.ne.s32.totalorder %s62, %s63
    %p75 = scmp.eq.s32.totalorder %s32, 1
    %p76 = por %p74, %p75
    %p78 = scmp.ne.s32.totalorder %s63, %s77
    %p79 = scmp.eq.s32.totalorder %s32, 0
    %p80 = por %p78, %p79
    %s82 = sadd.s32 %s81, 1
    %p85 = scmp.eq.s32.totalorder %s26, 1
    %p86 = scmp.ne.s32.totalorder %s81, %s83
    %p87 = scmp.eq.s32.totalorder %s26, 0
    %p88 = por %p86, %p87
    %p89 = scmp.ne.s32.totalorder %s81, %s83
    %p90 = scmp.eq.s32.totalorder %s31, 1
    %p91 = por %p89, %p90
    %p92 = scmp.ne.s32.totalorder %s83, %s84
    %p93 = scmp.eq.s32.totalorder %s31, 0
    %p94 = por %p92, %p93
    %p95 = scmp.ne.s32.totalorder %s83, %s84
    %p96 = scmp.eq.s32.totalorder %s32, 1
    %p97 = por %p95, %p96
    %p99 = scmp.ne.s32.totalorder %s84, %s98
    %p100 = scmp.eq.s32.totalorder %s32, 0
    %p101 = por %p99, %p100
    %s103 = sadd.s32 %s102, 1
    %p106 = scmp.eq.s32.totalorder %s26, 1
    %p107 = scmp.ne.s32.totalorder %s102, %s104
    %p108 = scmp.eq.s32.totalorder %s26, 0
    %p109 = por %p107, %p108
    %p110 = scmp.ne.s32.totalorder %s102, %s104
    %p111 = scmp.eq.s32.totalorder %s31, 1
    %p112 = por %p110, %p111
    %p113 = scmp.ne.s32.totalorder %s104, %s105
    %p114 = scmp.eq.s32.totalorder %s31, 0
    %p115 = por %p113, %p114
    %p116 = scmp.ne.s32.totalorder %s104, %s105
    %p117 = scmp.eq.s32.totalorder %s32, 1
    %p118 = por %p116, %p117
    %p120 = scmp.ne.s32.totalorder %s105, %s119
    %p121 = scmp.eq.s32.totalorder %s32, 0
    %p122 = por %p120, %p121
    %s124 = sadd.s32 %s123, 1
    %p127 = scmp.eq.s32.totalorder %s26, 1
    %p128 = scmp.ne.s32.totalorder %s123, %s125
    %p129 = scmp.eq.s32.totalorder %s26, 0
    %p130 = por %p128, %p129
    %p131 = scmp.ne.s32.totalorder %s123, %s125
    %p132 = scmp.eq.s32.totalorder %s31, 1
    %p133 = por %p131, %p132
    %p134 = scmp.ne.s32.totalorder %s125, %s126
    %p135 = scmp.eq.s32.totalorder %s31, 0
    %p136 = por %p134, %p135
    %p137 = scmp.ne.s32.totalorder %s125, %s126
    %p138 = scmp.eq.s32.totalorder %s32, 1
    %p139 = por %p137, %p138
    %p141 = scmp.ne.s32.totalorder %s126, %s140
    %p142 = scmp.eq.s32.totalorder %s32, 0
    %p143 = por %p141, %p142
    %s145 = sadd.s32 %s144, 1
    %p148 = scmp.eq.s32.totalorder %s26, 1
    %p149 = scmp.ne.s32.totalorder %s144, %s146
    %p150 = scmp.eq.s32.totalorder %s26, 0
    %p151 = por %p149, %p150
    %p152 = scmp.ne.s32.totalorder %s144, %s146
    %p153 = scmp.eq.s32.totalorder %s31, 1
    %p154 = por %p152, %p153
    %p155 = scmp.ne.s32.totalorder %s146, %s147
    %p156 = scmp.eq.s32.totalorder %s31, 0
    %p157 = por %p155, %p156
    %p158 = scmp.ne.s32.totalorder %s146, %s147
    %p159 = scmp.eq.s32.totalorder %s32, 1
    %p160 = por %p158, %p159
    %p162 = scmp.ne.s32.totalorder %s147, %s161
    %p163 = scmp.eq.s32.totalorder %s32, 0
    %p164 = por %p162, %p163
    %s166 = sadd.s32 %s165, 1
    %p169 = scmp.eq.s32.totalorder %s26, 1
    %p170 = scmp.ne.s32.totalorder %s165, %s167
    %p171 = scmp.eq.s32.totalorder %s26, 0
    %p172 = por %p170, %p171
    %p173 = scmp.ne.s32.totalorder %s165, %s167
    %p174 = scmp.eq.s32.totalorder %s31, 1
    %p175 = por %p173, %p174
    %p176 = scmp.ne.s32.totalorder %s167, %s168
    %p177 = scmp.eq.s32.totalorder %s31, 0
    %p178 = por %p176, %p177
    %p179 = scmp.ne.s32.totalorder %s167, %s168
    %p180 = scmp.eq.s32.totalorder %s32, 1
    %p181 = por %p179, %p180
    %p183 = scmp.ne.s32.totalorder %s168, %s182
    %p184 = scmp.eq.s32.totalorder %s32, 0
    %p185 = por %p183, %p184
    %s187 = sadd.s32 %s186, 1
    %p190 = scmp.eq.s32.totalorder %s26, 1
    %p191 = scmp.ne.s32.totalorder %s186, %s188
    %p192 = scmp.eq.s32.totalorder %s26, 0
    %p193 = por %p191, %p192
    %p194 = scmp.ne.s32.totalorder %s186, %s188
    %p195 = scmp.eq.s32.totalorder %s31, 1
    %p196 = por %p194, %p195
    %p197 = scmp.ne.s32.totalorder %s188, %s189
    %p198 = scmp.eq.s32.totalorder %s31, 0
    %p199 = por %p197, %p198
    %p200 = scmp.ne.s32.totalorder %s188, %s189
    %p201 = scmp.eq.s32.totalorder %s32, 1
    %p202 = por %p200, %p201
    %p204 = scmp.ne.s32.totalorder %s189, %s203
    %p205 = scmp.eq.s32.totalorder %s32, 0
    %p206 = por %p204, %p205
    %s208 = sadd.s32 %s207, 1
    %p211 = scmp.eq.s32.totalorder %s26, 1
    %p212 = scmp.ne.s32.totalorder %s207, %s209
    %p213 = scmp.eq.s32.totalorder %s26, 0
    %p214 = por %p212, %p213
    %p215 = scmp.ne.s32.totalorder %s207, %s209
    %p216 = scmp.eq.s32.totalorder %s31, 1
    %p217 = por %p215, %p216
    %p218 = scmp.ne.s32.totalorder %s209, %s210
    %p219 = scmp.eq.s32.totalorder %s31, 0
    %p220 = por %p218, %p219
    %p221 = scmp.ne.s32.totalorder %s209, %s210
    %p222 = scmp.eq.s32.totalorder %s32, 1
    %p223 = por %p221, %p222
    %p225 = scmp.ne.s32.totalorder %s210, %s224
    %p226 = scmp.eq.s32.totalorder %s32, 0
    %p227 = por %p225, %p226
    %s229 = sadd.s32 %s228, 1
    %p232 = scmp.eq.s32.totalorder %s26, 1
    %p233 = scmp.ne.s32.totalorder %s228, %s230
    %p234 = scmp.eq.s32.totalorder %s26, 0
    %p235 = por %p233, %p234
    %p236 = scmp.ne.s32.totalorder %s228, %s230
    %p237 = scmp.eq.s32.totalorder %s31, 1
    %p238 = por %p236, %p237
    %p239 = scmp.ne.s32.totalorder %s230, %s231
    %p240 = scmp.eq.s32.totalorder %s31, 0
    %p241 = por %p239, %p240
    %p242 = scmp.ne.s32.totalorder %s230, %s231
    %p243 = scmp.eq.s32.totalorder %s32, 1
    %p244 = por %p242, %p243
    %p246 = scmp.ne.s32.totalorder %s231, %s245
    %p247 = scmp.eq.s32.totalorder %s32, 0
    %p248 = por %p246, %p247
    %s250 = sadd.s32 %s249, 1
    %p253 = scmp.eq.s32.totalorder %s26, 1
    %p254 = scmp.ne.s32.totalorder %s249, %s251
    %p255 = scmp.eq.s32.totalorder %s26, 0
    %p256 = por %p254, %p255
    %p257 = scmp.ne.s32.totalorder %s249, %s251
    %p258 = scmp.eq.s32.totalorder %s31, 1
    %p259 = por %p257, %p258
    %p260 = scmp.ne.s32.totalorder %s251, %s252
    %p261 = scmp.eq.s32.totalorder %s31, 0
    %p262 = por %p260, %p261
    %p263 = scmp.ne.s32.totalorder %s251, %s252
    %p264 = scmp.eq.s32.totalorder %s32, 1
    %p265 = por %p263, %p264
    %p267 = scmp.ne.s32.totalorder %s252, %s266
    %p268 = scmp.eq.s32.totalorder %s32, 0
    %p269 = por %p267, %p268
    %s271 = sadd.s32 %s270, 1
    %p274 = scmp.eq.s32.totalorder %s26, 1
    %p275 = scmp.ne.s32.totalorder %s270, %s272
    %p276 = scmp.eq.s32.totalorder %s26, 0
    %p277 = por %p275, %p276
    %p278 = scmp.ne.s32.totalorder %s270, %s272
    %p279 = scmp.eq.s32.totalorder %s31, 1
    %p280 = por %p278, %p279
    %p281 = scmp.ne.s32.totalorder %s272, %s273
    %p282 = scmp.eq.s32.totalorder %s31, 0
    %p283 = por %p281, %p282
    %p284 = scmp.ne.s32.totalorder %s272, %s273
    %p285 = scmp.eq.s32.totalorder %s32, 1
    %p286 = por %p284, %p285
    %p288 = scmp.ne.s32.totalorder %s273, %s287
    %p289 = scmp.eq.s32.totalorder %s32, 0
    %p290 = por %p288, %p289
    %s292 = sadd.s32 %s291, 1
    %p295 = scmp.eq.s32.totalorder %s26, 1
    %p296 = scmp.ne.s32.totalorder %s291, %s293
    %p297 = scmp.eq.s32.totalorder %s26, 0
    %p298 = por %p296, %p297
    %p299 = scmp.ne.s32.totalorder %s291, %s293
    %p300 = scmp.eq.s32.totalorder %s31, 1
    %p301 = por %p299, %p300
    %p302 = scmp.ne.s32.totalorder %s293, %s294
    %p303 = scmp.eq.s32.totalorder %s31, 0
    %p304 = por %p302, %p303
    %p305 = scmp.ne.s32.totalorder %s293, %s294
    %p306 = scmp.eq.s32.totalorder %s32, 1
    %p307 = por %p305, %p306
    %p309 = scmp.ne.s32.totalorder %s294, %s308
    %p310 = scmp.eq.s32.totalorder %s32, 0
    %p311 = por %p309, %p310
    %s313 = sadd.s32 %s312, 1
    %p316 = scmp.eq.s32.totalorder %s26, 1
    %p317 = scmp.ne.s32.totalorder %s312, %s314
    %p318 = scmp.eq.s32.totalorder %s26, 0
    %p319 = por %p317, %p318
    %p320 = scmp.ne.s32.totalorder %s312, %s314
    %p321 = scmp.eq.s32.totalorder %s31, 1
    %p322 = por %p320, %p321
    %p323 = scmp.ne.s32.totalorder %s314, %s315
    %p324 = scmp.eq.s32.totalorder %s31, 0
    %p325 = por %p323, %p324
    %p326 = scmp.ne.s32.totalorder %s314, %s315
    %p327 = scmp.eq.s32.totalorder %s32, 1
    %p328 = por %p326, %p327
    %p330 = scmp.ne.s32.totalorder %s315, %s329
    %p331 = scmp.eq.s32.totalorder %s32, 0
    %p332 = por %p330, %p331
    %s334 = sadd.s32 %s333, 1
    %p337 = scmp.eq.s32.totalorder %s26, 1
    %p338 = scmp.ne.s32.totalorder %s333, %s335
    %p339 = scmp.eq.s32.totalorder %s26, 0
    %p340 = por %p338, %p339
    %p341 = scmp.ne.s32.totalorder %s333, %s335
    %p342 = scmp.eq.s32.totalorder %s31, 1
    %p343 = por %p341, %p342
    %p344 = scmp.ne.s32.totalorder %s335, %s336
    %p345 = scmp.eq.s32.totalorder %s31, 0
    %p346 = por %p344, %p345
    %p347 = scmp.ne.s32.totalorder %s335, %s336
    %p348 = scmp.eq.s32.totalorder %s32, 1
    %p349 = por %p347, %p348
    %p351 = scmp.ne.s32.totalorder %s336, %s350
    %p352 = scmp.eq.s32.totalorder %s32, 0
    %p353 = por %p351, %p352
    %s355 = sadd.s32 %s354, 1
    %p358 = scmp.eq.s32.totalorder %s26, 1
    %p359 = scmp.ne.s32.totalorder %s354, %s356
    %p360 = scmp.eq.s32.totalorder %s26, 0
    %p361 = por %p359, %p360
    %p362 = scmp.ne.s32.totalorder %s354, %s356
    %p363 = scmp.eq.s32.totalorder %s31, 1
    %p364 = por %p362, %p363
    %p365 = scmp.ne.s32.totalorder %s356, %s357
    %p366 = scmp.eq.s32.totalorder %s31, 0
    %p367 = por %p365, %p366
    %p368 = scmp.ne.s32.totalorder %s356, %s357
    %p369 = scmp.eq.s32.totalorder %s32, 1
    %p370 = por %p368, %p369
    %p372 = scmp.ne.s32.totalorder %s357, %s371
    %p373 = scmp.eq.s32.totalorder %s32, 0
    %p374 = por %p372, %p373
    %s376 = sadd.s32 %s375, 1
    %p379 = scmp.eq.s32.totalorder %s26, 1
    %p380 = scmp.ne.s32.totalorder %s375, %s377
    %p381 = scmp.eq.s32.totalorder %s26, 0
    %p382 = por %p380, %p381
    %p383 = scmp.ne.s32.totalorder %s375, %s377
    %p384 = scmp.eq.s32.totalorder %s31, 1
    %p385 = por %p383, %p384
    %p386 = scmp.ne.s32.totalorder %s377, %s378
    %p387 = scmp.eq.s32.totalorder %s31, 0
    %p388 = por %p386, %p387
    %p389 = scmp.ne.s32.totalorder %s377, %s378
    %p390 = scmp.eq.s32.totalorder %s32, 1
    %p391 = por %p389, %p390
    %p393 = scmp.ne.s32.totalorder %s378, %s392
    %p394 = scmp.eq.s32.totalorder %s32, 0
    %p395 = por %p393, %p394
    %s397 = sadd.s32 %s396, 1
    %p400 = scmp.eq.s32.totalorder %s26, 1
    %p401 = scmp.ne.s32.totalorder %s396, %s398
    %p402 = scmp.eq.s32.totalorder %s26, 0
    %p403 = por %p401, %p402
    %p404 = scmp.ne.s32.totalorder %s396, %s398
    %p405 = scmp.eq.s32.totalorder %s31, 1
    %p406 = por %p404, %p405
    %p407 = scmp.ne.s32.totalorder %s398, %s399
    %p408 = scmp.eq.s32.totalorder %s31, 0
    %p409 = por %p407, %p408
    %p410 = scmp.ne.s32.totalorder %s398, %s399
    %p411 = scmp.eq.s32.totalorder %s32, 1
    %p412 = por %p410, %p411
    %p414 = scmp.ne.s32.totalorder %s399, %s413
    %p415 = scmp.eq.s32.totalorder %s32, 0
    %p416 = por %p414, %p415
    %s418 = sadd.s32 %s417, 1
    %p421 = scmp.eq.s32.totalorder %s26, 1
    %p422 = scmp.ne.s32.totalorder %s417, %s419
    %p423 = scmp.eq.s32.totalorder %s26, 0
    %p424 = por %p422, %p423
    %p425 = scmp.ne.s32.totalorder %s417, %s419
    %p426 = scmp.eq.s32.totalorder %s31, 1
    %p427 = por %p425, %p426
    %p428 = scmp.ne.s32.totalorder %s419, %s420
    %p429 = scmp.eq.s32.totalorder %s31, 0
    %p430 = por %p428, %p429
    %p431 = scmp.ne.s32.totalorder %s419, %s420
    %p432 = scmp.eq.s32.totalorder %s32, 1
    %p433 = por %p431, %p432
    %p435 = scmp.ne.s32.totalorder %s420, %s434
    %p436 = scmp.eq.s32.totalorder %s32, 0
    %p437 = por %p435, %p436
    %s439 = sadd.s32 %s438, 1
    %p442 = scmp.eq.s32.totalorder %s26, 1
    %p443 = scmp.ne.s32.totalorder %s438, %s440
    %p444 = scmp.eq.s32.totalorder %s26, 0
    %p445 = por %p443, %p444
    %p446 = scmp.ne.s32.totalorder %s438, %s440
    %p447 = scmp.eq.s32.totalorder %s31, 1
    %p448 = por %p446, %p447
    %p449 = scmp.ne.s32.totalorder %s440, %s441
    %p450 = scmp.eq.s32.totalorder %s31, 0
    %p451 = por %p449, %p450
    %p452 = scmp.ne.s32.totalorder %s440, %s441
    %p453 = scmp.eq.s32.totalorder %s32, 1
    %p454 = por %p452, %p453
    %p456 = scmp.ne.s32.totalorder %s441, %s455
    %p457 = scmp.eq.s32.totalorder %s32, 0
    %p458 = por %p456, %p457
    %s459 = ssub.s32 %s26, %s33
    %p460 = scmp.eq.s32.totalorder %s459, 0
    %s462 = sadd.s32 %s461, 1
    %s463 = scalar_select %p460, %s461, %s462
    %p466 = pneg %p460
    %p467 = scmp.eq.s32.totalorder %s26, 1
    %p468 = por %p466, %p467
    %p469 = scmp.ne.s32.totalorder %s461, %s464
    %p470 = scmp.eq.s32.totalorder %s26, 0
    %p471 = por %p469, %p470
    %p472 = scmp.ne.s32.totalorder %s461, %s464
    %p473 = scmp.eq.s32.totalorder %s31, 1
    %p474 = por %p472, %p473
    %p475 = scmp.ne.s32.totalorder %s464, %s465
    %p476 = scmp.eq.s32.totalorder %s31, 0
    %p477 = por %p475, %p476
    %p478 = scmp.ne.s32.totalorder %s464, %s465
    %p479 = scmp.eq.s32.totalorder %s32, 1
    %p480 = por %p478, %p479
    %p482 = scmp.ne.s32.totalorder %s465, %s481
    %p483 = scmp.eq.s32.totalorder %s32, 0
    %p484 = por %p482, %p483
    %p485 = scmp.le.s32.totalorder 1, %s26
    %p486 = scmp.lt.s32.totalorder %s26, 3
    %p487 = pnand %p485, %p486
    %p488 = pneg %p487
    // Predicated region
    $region9: #{tpu_custom_call.1} parent=5 // pred_check
      _
    $region10: #{tpu_custom_call.1} parent=5 // pred_check_branch
      %490 = sbr.rel (%p487) target = $region12
    $region11: #{tpu_custom_call.1} parent=5 // pred_region
      %s491 = ssub.s32 %s26, 1
      // Predicated region
      $region13: #{tpu_custom_call.1} parent=11 // pred_check
        %p492 = pneg %p73
      $region14: #{tpu_custom_call.1} parent=11 // pred_check_branch
        %494 = sbr.rel (%p492) target = $region16
      $region15: #{tpu_custom_call.1} parent=11 // pred_region
        _
      $region16: #{tpu_custom_call.1} parent=11 // pred_fallthru
        _
      // Predicated region
      $region17: #{tpu_custom_call.1} parent=11 // pred_check
        %p495 = pneg %p94
      $region18: #{tpu_custom_call.1} parent=11 // pred_check_branch
        %497 = sbr.rel (%p495) target = $region20
      $region19: #{tpu_custom_call.1} parent=11 // pred_region
        _
      $region20: #{tpu_custom_call.1} parent=11 // pred_fallthru
        _
      // Predicated region
      $region21: #{tpu_custom_call.1} parent=11 // pred_check
        %p498 = pneg %p115
      $region22: #{tpu_custom_call.1} parent=11 // pred_check_branch
        %500 = sbr.rel (%p498) target = $region24
      $region23: #{tpu_custom_call.1} parent=11 // pred_region
        _
      $region24: #{tpu_custom_call.1} parent=11 // pred_fallthru
        _
      // Predicated region
      $region25: #{tpu_custom_call.1} parent=11 // pred_check
        %p501 = pneg %p136
      $region26: #{tpu_custom_call.1} parent=11 // pred_check_branch
        %503 = sbr.rel (%p501) target = $region28
      $region27: #{tpu_custom_call.1} parent=11 // pred_region
        _
      $region28: #{tpu_custom_call.1} parent=11 // pred_fallthru
        _
      // Predicated region
      $region29: #{tpu_custom_call.1} parent=11 // pred_check
        %p504 = pneg %p157
      $region30: #{tpu_custom_call.1} parent=11 // pred_check_branch
        %506 = sbr.rel (%p504) target = $region32
      $region31: #{tpu_custom_call.1} parent=11 // pred_region
        _
      $region32: #{tpu_custom_call.1} parent=11 // pred_fallthru
        _
      // Predicated region
      $region33: #{tpu_custom_call.1} parent=11 // pred_check
        %p507 = pneg %p178
      $region34: #{tpu_custom_call.1} parent=11 // pred_check_branch
        %509 = sbr.rel (%p507) target = $region36
      $region35: #{tpu_custom_call.1} parent=11 // pred_region
        _
      $region36: #{tpu_custom_call.1} parent=11 // pred_fallthru
        _
      // Predicated region
      $region37: #{tpu_custom_call.1} parent=11 // pred_check
        %p510 = pneg %p199
      $region38: #{tpu_custom_call.1} parent=11 // pred_check_branch
        %512 = sbr.rel (%p510) target = $region40
      $region39: #{tpu_custom_call.1} parent=11 // pred_region
        _
      $region40: #{tpu_custom_call.1} parent=11 // pred_fallthru
        _
      // Predicated region
      $region41: #{tpu_custom_call.1} parent=11 // pred_check
        %p513 = pneg %p220
      $region42: #{tpu_custom_call.1} parent=11 // pred_check_branch
        %515 = sbr.rel (%p513) target = $region44
      $region43: #{tpu_custom_call.1} parent=11 // pred_region
        _
      $region44: #{tpu_custom_call.1} parent=11 // pred_fallthru
        _
      // Predicated region
      $region45: #{tpu_custom_call.1} parent=11 // pred_check
        %p516 = pneg %p241
      $region46: #{tpu_custom_call.1} parent=11 // pred_check_branch
        %518 = sbr.rel (%p516) target = $region48
      $region47: #{tpu_custom_call.1} parent=11 // pred_region
        _
      $region48: #{tpu_custom_call.1} parent=11 // pred_fallthru
        _
      // Predicated region
      $region49: #{tpu_custom_call.1} parent=11 // pred_check
        %p519 = pneg %p262
      $region50: #{tpu_custom_call.1} parent=11 // pred_check_branch
        %521 = sbr.rel (%p519) target = $region52
      $region51: #{tpu_custom_call.1} parent=11 // pred_region
        _
      $region52: #{tpu_custom_call.1} parent=11 // pred_fallthru
        _
      // Predicated region
      $region53: #{tpu_custom_call.1} parent=11 // pred_check
        %p522 = pneg %p283
      $region54: #{tpu_custom_call.1} parent=11 // pred_check_branch
        %524 = sbr.rel (%p522) target = $region56
      $region55: #{tpu_custom_call.1} parent=11 // pred_region
        _
      $region56: #{tpu_custom_call.1} parent=11 // pred_fallthru
        _
      // Predicated region
      $region57: #{tpu_custom_call.1} parent=11 // pred_check
        %p525 = pneg %p304
      $region58: #{tpu_custom_call.1} parent=11 // pred_check_branch
        %527 = sbr.rel (%p525) target = $region60
      $region59: #{tpu_custom_call.1} parent=11 // pred_region
        _
      $region60: #{tpu_custom_call.1} parent=11 // pred_fallthru
        _
      // Predicated region
      $region61: #{tpu_custom_call.1} parent=11 // pred_check
        %p528 = pneg %p325
      $region62: #{tpu_custom_call.1} parent=11 // pred_check_branch
        %530 = sbr.rel (%p528) target = $region64
      $region63: #{tpu_custom_call.1} parent=11 // pred_region
        _
      $region64: #{tpu_custom_call.1} parent=11 // pred_fallthru
        _
      // Predicated region
      $region65: #{tpu_custom_call.1} parent=11 // pred_check
        %p531 = pneg %p346
      $region66: #{tpu_custom_call.1} parent=11 // pred_check_branch
        %533 = sbr.rel (%p531) target = $region68
      $region67: #{tpu_custom_call.1} parent=11 // pred_region
        _
      $region68: #{tpu_custom_call.1} parent=11 // pred_fallthru
        _
      // Predicated region
      $region69: #{tpu_custom_call.1} parent=11 // pred_check
        %p534 = pneg %p367
      $region70: #{tpu_custom_call.1} parent=11 // pred_check_branch
        %536 = sbr.rel (%p534) target = $region72
      $region71: #{tpu_custom_call.1} parent=11 // pred_region
        _
      $region72: #{tpu_custom_call.1} parent=11 // pred_fallthru
        _
      // Predicated region
      $region73: #{tpu_custom_call.1} parent=11 // pred_check
        %p537 = pneg %p388
      $region74: #{tpu_custom_call.1} parent=11 // pred_check_branch
        %539 = sbr.rel (%p537) target = $region76
      $region75: #{tpu_custom_call.1} parent=11 // pred_region
        _
      $region76: #{tpu_custom_call.1} parent=11 // pred_fallthru
        _
      // Predicated region
      $region77: #{tpu_custom_call.1} parent=11 // pred_check
        %p540 = pneg %p409
      $region78: #{tpu_custom_call.1} parent=11 // pred_check_branch
        %542 = sbr.rel (%p540) target = $region80
      $region79: #{tpu_custom_call.1} parent=11 // pred_region
        _
      $region80: #{tpu_custom_call.1} parent=11 // pred_fallthru
        _
      // Predicated region
      $region81: #{tpu_custom_call.1} parent=11 // pred_check
        %p543 = pneg %p430
      $region82: #{tpu_custom_call.1} parent=11 // pred_check_branch
        %545 = sbr.rel (%p543) target = $region84
      $region83: #{tpu_custom_call.1} parent=11 // pred_region
        _
      $region84: #{tpu_custom_call.1} parent=11 // pred_fallthru
        _
      // Predicated region
      $region85: #{tpu_custom_call.1} parent=11 // pred_check
        %p546 = pneg %p451
      $region86: #{tpu_custom_call.1} parent=11 // pred_check_branch
        %548 = sbr.rel (%p546) target = $region88
      $region87: #{tpu_custom_call.1} parent=11 // pred_region
        _
      $region88: #{tpu_custom_call.1} parent=11 // pred_fallthru
        _
    $region12: #{tpu_custom_call.1} parent=5 // pred_fallthru
      _
    %p549 = scmp.lt.s32.totalorder %s26, 2
    // Predicated region
    $region89: #{tpu_custom_call.1} parent=5 // pred_check
      %p550 = pneg %p549
    $region90: #{tpu_custom_call.1} parent=5 // pred_check_branch
      %552 = sbr.rel (%p550) target = $region92
    $region91: #{tpu_custom_call.1} parent=5 // pred_region
      // Predicated region
      $region93: #{tpu_custom_call.1} parent=91 // pred_check
        %p553 = pneg %p46
      $region94: #{tpu_custom_call.1} parent=91 // pred_check_branch
        %555 = sbr.rel (%p553) target = $region96
      $region95: #{tpu_custom_call.1} parent=91 // pred_region
        %p556 = scmp.lt.s32.totalorder %s26, 1
        %s557 = scalar_select %p556, %s26, 1
        %s558 = smul.addr %s557, 8
        %s559 = smul.addr %s558, 8
        %s560 = scalar_lea.vmem %s0, %s559
      $region96: #{tpu_custom_call.1} parent=91 // pred_fallthru
        _
    $region92: #{tpu_custom_call.1} parent=5 // pred_fallthru
      _
    %p561 = scmp.le.s32.totalorder 1, %s26
    %p562 = scmp.lt.s32.totalorder %s26, 3
    %p563 = pnand %p561, %p562
    %p564 = pneg %p563
    // Predicated region
    $region97: #{tpu_custom_call.1} parent=5 // pred_check
      _
    $region98: #{tpu_custom_call.1} parent=5 // pred_check_branch
      %566 = sbr.rel (%p563) target = $region100
    $region99: #{tpu_custom_call.1} parent=5 // pred_region
      %s567 = ssub.s32 %s26, 1
      %p568 = scmp.lt.s32.totalorder %s31, 1
      %s569 = scalar_select %p568, %s31, 1
      %s570 = smul.addr %s569, 8
      %s571 = smul.addr %s570, 8
      %s572 = scalar_lea.vmem %s0, %s571
      %p573 = pneg %p52
      %p574 = pneg %p49
      %p575 = pneg %p73
      %p576 = pneg %p70
      %p577 = pneg %p94
      %p578 = pneg %p91
      %p579 = pneg %p115
      %p580 = pneg %p112
      %p581 = pneg %p136
      %p582 = pneg %p133
      %p583 = pneg %p157
      %p584 = pneg %p154
      %p585 = pneg %p178
      %p586 = pneg %p175
      %p587 = pneg %p199
      %p588 = pneg %p196
      %p589 = pneg %p220
      %p590 = pneg %p217
      %p591 = pneg %p241
      %p592 = pneg %p238
      %p593 = pneg %p262
      %p594 = pneg %p259
      %p595 = pneg %p283
      %p596 = pneg %p280
      %p597 = pneg %p304
      %p598 = pneg %p301
      %p599 = pneg %p325
      %p600 = pneg %p322
      %p601 = pneg %p346
      %p602 = pneg %p343
      %p603 = pneg %p367
      %p604 = pneg %p364
      %p605 = pneg %p388
      %p606 = pneg %p385
      %p607 = pneg %p409
      %p608 = pneg %p406
      %p609 = pneg %p430
      %p610 = pneg %p427
      %p611 = pneg %p451
      %p612 = pneg %p448
      %p613 = pneg %p477
      %p614 = pneg %p474
      %p615 = scmp.lt.s32.totalorder %s31, 1
      %s616 = scalar_select %p615, %s31, 1
      %s617 = smul.addr %s616, 8
      %s618 = smul.addr %s617, 8
      %s619 = scalar_lea.vmem %s20, %s618
      %p620 = scmp.lt.s32.totalorder %s31, 1
      %s621 = scalar_select %p620, %s31, 1
      %s622 = smul.addr %s621, 8
      %s623 = smul.addr %s622, 8
      %s624 = scalar_lea.vmem %s0, %s623
      %p625 = scmp.lt.s32.totalorder %s31, 1
      %s626 = scalar_select %p625, %s31, 1
      %s627 = smul.addr %s626, 8
      %s628 = smul.addr %s627, 8
      %s629 = scalar_lea.vmem %s20, %s628
      %v631 = vld [vmem:[%s1] sm:$0xff]
      %v632 = vld [vmem:[%s1 + $0x8] sm:$0xff]
      %v633 = vld [vmem:[%s1 + $0x10] sm:$0xff]
      %v634 = vld [vmem:[%s1 + $0x18] sm:$0xff]
      %v635 = vld [vmem:[%s1 + $0x20] sm:$0xff]
      %v636 = vld [vmem:[%s1 + $0x28] sm:$0xff]
      %v637 = vld [vmem:[%s1 + $0x30] sm:$0xff]
      %v638 = vld [vmem:[%s1 + $0x38] sm:$0xff]
      %s639 = scalar_lea.vmem %s1, 64
      %v640 = vld [vmem:[%s639] sm:$0xff]
      %v641 = vld [vmem:[%s639 + $0x8] sm:$0xff]
      %v642 = vld [vmem:[%s639 + $0x10] sm:$0xff]
      %v643 = vld [vmem:[%s639 + $0x18] sm:$0xff]
      %v644 = vld [vmem:[%s639 + $0x20] sm:$0xff]
      %v645 = vld [vmem:[%s639 + $0x28] sm:$0xff]
      %v646 = vld [vmem:[%s639 + $0x30] sm:$0xff]
      %v647 = vld [vmem:[%s639 + $0x38] sm:$0xff]
      %s648 = scalar_lea.vmem %s1, 128
      %v649 = vld [vmem:[%s648] sm:$0xff]
      %v650 = vld [vmem:[%s648 + $0x8] sm:$0xff]
      %v651 = vld [vmem:[%s648 + $0x10] sm:$0xff]
      %v652 = vld [vmem:[%s648 + $0x18] sm:$0xff]
      %v653 = vld [vmem:[%s648 + $0x20] sm:$0xff]
      %v654 = vld [vmem:[%s648 + $0x28] sm:$0xff]
      %v655 = vld [vmem:[%s648 + $0x30] sm:$0xff]
      %v656 = vld [vmem:[%s648 + $0x38] sm:$0xff]
      %s657 = scalar_lea.vmem %s1, 192
      %v658 = vld [vmem:[%s657] sm:$0xff]
      %v659 = vld [vmem:[%s657 + $0x8] sm:$0xff]
      %v660 = vld [vmem:[%s657 + $0x10] sm:$0xff]
      %v661 = vld [vmem:[%s657 + $0x18] sm:$0xff]
      %v662 = vld [vmem:[%s657 + $0x20] sm:$0xff]
      %v663 = vld [vmem:[%s657 + $0x28] sm:$0xff]
      %v664 = vld [vmem:[%s657 + $0x30] sm:$0xff]
      %v665 = vld [vmem:[%s657 + $0x38] sm:$0xff]
      %s666 = scalar_lea.vmem %s1, 320
      %v667 = vld [vmem:[%s666] sm:$0xff]
      %v668 = vld [vmem:[%s666 + $0x8] sm:$0xff]
      %v669 = vld [vmem:[%s666 + $0x10] sm:$0xff]
      %v670 = vld [vmem:[%s666 + $0x18] sm:$0xff]
      %v671 = vld [vmem:[%s666 + $0x20] sm:$0xff]
      %v672 = vld [vmem:[%s666 + $0x28] sm:$0xff]
      %v673 = vld [vmem:[%s666 + $0x30] sm:$0xff]
      %v674 = vld [vmem:[%s666 + $0x38] sm:$0xff]
      %s675 = scalar_lea.vmem %s1, 384
      %v676 = vld [vmem:[%s675] sm:$0xff]
      %v677 = vld [vmem:[%s675 + $0x8] sm:$0xff]
      %v678 = vld [vmem:[%s675 + $0x10] sm:$0xff]
      %v679 = vld [vmem:[%s675 + $0x18] sm:$0xff]
      %v680 = vld [vmem:[%s675 + $0x20] sm:$0xff]
      %v681 = vld [vmem:[%s675 + $0x28] sm:$0xff]
      %v682 = vld [vmem:[%s675 + $0x30] sm:$0xff]
      %v683 = vld [vmem:[%s675 + $0x38] sm:$0xff]
      %s684 = scalar_lea.vmem %s1, 448
      %v685 = vld [vmem:[%s684] sm:$0xff]
      %v686 = vld [vmem:[%s684 + $0x8] sm:$0xff]
      %v687 = vld [vmem:[%s684 + $0x10] sm:$0xff]
      %v688 = vld [vmem:[%s684 + $0x18] sm:$0xff]
      %v689 = vld [vmem:[%s684 + $0x20] sm:$0xff]
      %v690 = vld [vmem:[%s684 + $0x28] sm:$0xff]
      %v691 = vld [vmem:[%s684 + $0x30] sm:$0xff]
      %v692 = vld [vmem:[%s684 + $0x38] sm:$0xff]
      %s693 = scalar_lea.vmem %s1, 512
      %v694 = vld [vmem:[%s693] sm:$0xff]
      %v695 = vld [vmem:[%s693 + $0x8] sm:$0xff]
      %v696 = vld [vmem:[%s693 + $0x10] sm:$0xff]
      %v697 = vld [vmem:[%s693 + $0x18] sm:$0xff]
      %v698 = vld [vmem:[%s693 + $0x20] sm:$0xff]
      %v699 = vld [vmem:[%s693 + $0x28] sm:$0xff]
      %v700 = vld [vmem:[%s693 + $0x30] sm:$0xff]
      %v701 = vld [vmem:[%s693 + $0x38] sm:$0xff]
      %v702 = vld [vmem:[%s624] sm:$0xff]
      %v703 = vld [vmem:[%s624 + $0x8] sm:$0xff]
      %v704 = vld [vmem:[%s624 + $0x10] sm:$0xff]
      %v705 = vld [vmem:[%s624 + $0x18] sm:$0xff]
      %v706 = vld [vmem:[%s624 + $0x20] sm:$0xff]
      %v707 = vld [vmem:[%s624 + $0x28] sm:$0xff]
      %v708 = vld [vmem:[%s624 + $0x30] sm:$0xff]
      %v709 = vld [vmem:[%s624 + $0x38] sm:$0xff]
      %v710 = vrot.slane %v702, 7
      %v711 = vrot.slane %v703, 7
      %v712 = vrot.slane %v704, 7
      %v713 = vrot.slane %v705, 7
      %v714 = vrot.slane %v706, 7
      %v715 = vrot.slane %v707, 7
      %v716 = vrot.slane %v708, 7
      %v717 = vrot.slane %v709, 7
      %v718 = vlaneseq
      %v719 = vshrl.u32 %v718, 7
      %vm720 = vcmp.lt.s32.totalorder %v719, 1
      %v721 = vsel %vm720, %v716, %v717
      %v722 = vsel %vm720, %v715, %v716
      %v723 = vsel %vm720, %v714, %v715
      %v724 = vsel %vm720, %v713, %v714
      %v725 = vsel %vm720, %v712, %v713
      %v726 = vsel %vm720, %v711, %v712
      %v727 = vsel %vm720, %v710, %v711
      %v728 = vsel %vm720, %v717, %v710
      %730 = vset.pattern.permute.xlu0 0
      %731 = vperm.xlu0 %730, %v631
      %v732 = vpop.permute.xlu0 %731
      %735 = vset.pattern.permute.xlu0 0
      %736 = vperm.xlu0 %735, %v632
      %v737 = vpop.permute.xlu0 %736
      %740 = vset.pattern.permute.xlu0 0
      %741 = vperm.xlu0 %740, %v633
      %v742 = vpop.permute.xlu0 %741
      %745 = vset.pattern.permute.xlu0 0
      %746 = vperm.xlu0 %745, %v634
      %v747 = vpop.permute.xlu0 %746
      %750 = vset.pattern.permute.xlu0 0
      %751 = vperm.xlu0 %750, %v635
      %v752 = vpop.permute.xlu0 %751
      %755 = vset.pattern.permute.xlu0 0
      %756 = vperm.xlu0 %755, %v636
      %v757 = vpop.permute.xlu0 %756
      %760 = vset.pattern.permute.xlu0 0
      %761 = vperm.xlu0 %760, %v637
      %v762 = vpop.permute.xlu0 %761
      %765 = vset.pattern.permute.xlu0 0
      %766 = vperm.xlu0 %765, %v638
      %v767 = vpop.permute.xlu0 %766
      %v769 = vmul.f32 %v721, %v732
      %v770 = vmul.f32 %v728, %v737
      %v771 = vmul.f32 %v727, %v742
      %v772 = vmul.f32 %v726, %v747
      %v773 = vmul.f32 %v725, %v752
      %v774 = vmul.f32 %v724, %v757
      %v775 = vmul.f32 %v723, %v762
      %v776 = vmul.f32 %v722, %v767
      %778 = vset.pattern.permute.xlu0 0
      %779 = vperm.xlu0 %778, %v640
      %v780 = vpop.permute.xlu0 %779
      %783 = vset.pattern.permute.xlu0 0
      %784 = vperm.xlu0 %783, %v641
      %v785 = vpop.permute.xlu0 %784
      %788 = vset.pattern.permute.xlu0 0
      %789 = vperm.xlu0 %788, %v642
      %v790 = vpop.permute.xlu0 %789
      %793 = vset.pattern.permute.xlu0 0
      %794 = vperm.xlu0 %793, %v643
      %v795 = vpop.permute.xlu0 %794
      %798 = vset.pattern.permute.xlu0 0
      %799 = vperm.xlu0 %798, %v644
      %v800 = vpop.permute.xlu0 %799
      %803 = vset.pattern.permute.xlu0 0
      %804 = vperm.xlu0 %803, %v645
      %v805 = vpop.permute.xlu0 %804
      %808 = vset.pattern.permute.xlu0 0
      %809 = vperm.xlu0 %808, %v646
      %v810 = vpop.permute.xlu0 %809
      %813 = vset.pattern.permute.xlu0 0
      %814 = vperm.xlu0 %813, %v647
      %v815 = vpop.permute.xlu0 %814
      %v817 = vmul.f32 %v709, %v780
      %v818 = vmul.f32 %v702, %v785
      %v819 = vmul.f32 %v703, %v790
      %v820 = vmul.f32 %v704, %v795
      %v821 = vmul.f32 %v705, %v800
      %v822 = vmul.f32 %v706, %v805
      %v823 = vmul.f32 %v707, %v810
      %v824 = vmul.f32 %v708, %v815
      %v825 = vrot.slane %v702, 1
      %v826 = vrot.slane %v703, 1
      %v827 = vrot.slane %v704, 1
      %v828 = vrot.slane %v705, 1
      %v829 = vrot.slane %v706, 1
      %v830 = vrot.slane %v707, 1
      %v831 = vrot.slane %v708, 1
      %v832 = vrot.slane %v709, 1
      %vm833 = vcmp.lt.s32.totalorder %v719, 7
      %v834 = vsel %vm833, %v831, %v832
      %v835 = vsel %vm833, %v830, %v831
      %v836 = vsel %vm833, %v829, %v830
      %v837 = vsel %vm833, %v828, %v829
      %v838 = vsel %vm833, %v827, %v828
      %v839 = vsel %vm833, %v826, %v827
      %v840 = vsel %vm833, %v825, %v826
      %v841 = vsel %vm833, %v832, %v825
      %843 = vset.pattern.permute.xlu0 0
      %844 = vperm.xlu0 %843, %v649
      %v845 = vpop.permute.xlu0 %844
      %848 = vset.pattern.permute.xlu0 0
      %849 = vperm.xlu0 %848, %v650
      %v850 = vpop.permute.xlu0 %849
      %853 = vset.pattern.permute.xlu0 0
      %854 = vperm.xlu0 %853, %v651
      %v855 = vpop.permute.xlu0 %854
      %858 = vset.pattern.permute.xlu0 0
      %859 = vperm.xlu0 %858, %v652
      %v860 = vpop.permute.xlu0 %859
      %863 = vset.pattern.permute.xlu0 0
      %864 = vperm.xlu0 %863, %v653
      %v865 = vpop.permute.xlu0 %864
      %868 = vset.pattern.permute.xlu0 0
      %869 = vperm.xlu0 %868, %v654
      %v870 = vpop.permute.xlu0 %869
      %873 = vset.pattern.permute.xlu0 0
      %874 = vperm.xlu0 %873, %v655
      %v875 = vpop.permute.xlu0 %874
      %878 = vset.pattern.permute.xlu0 0
      %879 = vperm.xlu0 %878, %v656
      %v880 = vpop.permute.xlu0 %879
      %v882 = vmul.f32 %v841, %v845
      %v883 = vmul.f32 %v840, %v850
      %v884 = vmul.f32 %v839, %v855
      %v885 = vmul.f32 %v838, %v860
      %v886 = vmul.f32 %v837, %v865
      %v887 = vmul.f32 %v836, %v870
      %v888 = vmul.f32 %v835, %v875
      %v889 = vmul.f32 %v834, %v880
      %891 = vset.pattern.permute.xlu0 0
      %892 = vperm.xlu0 %891, %v658
      %v893 = vpop.permute.xlu0 %892
      %896 = vset.pattern.permute.xlu0 0
      %897 = vperm.xlu0 %896, %v659
      %v898 = vpop.permute.xlu0 %897
      %901 = vset.pattern.permute.xlu0 0
      %902 = vperm.xlu0 %901, %v660
      %v903 = vpop.permute.xlu0 %902
      %906 = vset.pattern.permute.xlu0 0
      %907 = vperm.xlu0 %906, %v661
      %v908 = vpop.permute.xlu0 %907
      %911 = vset.pattern.permute.xlu0 0
      %912 = vperm.xlu0 %911, %v662
      %v913 = vpop.permute.xlu0 %912
      %916 = vset.pattern.permute.xlu0 0
      %917 = vperm.xlu0 %916, %v663
      %v918 = vpop.permute.xlu0 %917
      %921 = vset.pattern.permute.xlu0 0
      %922 = vperm.xlu0 %921, %v664
      %v923 = vpop.permute.xlu0 %922
      %926 = vset.pattern.permute.xlu0 0
      %927 = vperm.xlu0 %926, %v665
      %v928 = vpop.permute.xlu0 %927
      %v930 = vmul.f32 %v728, %v893
      %v931 = vmul.f32 %v727, %v898
      %v932 = vmul.f32 %v726, %v903
      %v933 = vmul.f32 %v725, %v908
      %v934 = vmul.f32 %v724, %v913
      %v935 = vmul.f32 %v723, %v918
      %v936 = vmul.f32 %v722, %v923
      %v937 = vmul.f32 %v721, %v928
      %939 = vset.pattern.permute.xlu0 0
      %940 = vperm.xlu0 %939, %v667
      %v941 = vpop.permute.xlu0 %940
      %944 = vset.pattern.permute.xlu0 0
      %945 = vperm.xlu0 %944, %v668
      %v946 = vpop.permute.xlu0 %945
      %949 = vset.pattern.permute.xlu0 0
      %950 = vperm.xlu0 %949, %v669
      %v951 = vpop.permute.xlu0 %950
      %954 = vset.pattern.permute.xlu0 0
      %955 = vperm.xlu0 %954, %v670
      %v956 = vpop.permute.xlu0 %955
      %959 = vset.pattern.permute.xlu0 0
      %960 = vperm.xlu0 %959, %v671
      %v961 = vpop.permute.xlu0 %960
      %964 = vset.pattern.permute.xlu0 0
      %965 = vperm.xlu0 %964, %v672
      %v966 = vpop.permute.xlu0 %965
      %969 = vset.pattern.permute.xlu0 0
      %970 = vperm.xlu0 %969, %v673
      %v971 = vpop.permute.xlu0 %970
      %974 = vset.pattern.permute.xlu0 0
      %975 = vperm.xlu0 %974, %v674
      %v976 = vpop.permute.xlu0 %975
      %v978 = vmul.f32 %v840, %v941
      %v979 = vmul.f32 %v839, %v946
      %v980 = vmul.f32 %v838, %v951
      %v981 = vmul.f32 %v837, %v956
      %v982 = vmul.f32 %v836, %v961
      %v983 = vmul.f32 %v835, %v966
      %v984 = vmul.f32 %v834, %v971
      %v985 = vmul.f32 %v841, %v976
      %987 = vset.pattern.permute.xlu0 0
      %988 = vperm.xlu0 %987, %v676
      %v989 = vpop.permute.xlu0 %988
      %992 = vset.pattern.permute.xlu0 0
      %993 = vperm.xlu0 %992, %v677
      %v994 = vpop.permute.xlu0 %993
      %997 = vset.pattern.permute.xlu0 0
      %998 = vperm.xlu0 %997, %v678
      %v999 = vpop.permute.xlu0 %998
      %1002 = vset.pattern.permute.xlu0 0
      %1003 = vperm.xlu0 %1002, %v679
      %v1004 = vpop.permute.xlu0 %1003
      %1007 = vset.pattern.permute.xlu0 0
      %1008 = vperm.xlu0 %1007, %v680
      %v1009 = vpop.permute.xlu0 %1008
      %1012 = vset.pattern.permute.xlu0 0
      %1013 = vperm.xlu0 %1012, %v681
      %v1014 = vpop.permute.xlu0 %1013
      %1017 = vset.pattern.permute.xlu0 0
      %1018 = vperm.xlu0 %1017, %v682
      %v1019 = vpop.permute.xlu0 %1018
      %1022 = vset.pattern.permute.xlu0 0
      %1023 = vperm.xlu0 %1022, %v683
      %v1024 = vpop.permute.xlu0 %1023
      %v1026 = vmul.f32 %v727, %v989
      %v1027 = vmul.f32 %v726, %v994
      %v1028 = vmul.f32 %v725, %v999
      %v1029 = vmul.f32 %v724, %v1004
      %v1030 = vmul.f32 %v723, %v1009
      %v1031 = vmul.f32 %v722, %v1014
      %v1032 = vmul.f32 %v721, %v1019
      %v1033 = vmul.f32 %v728, %v1024
      %1035 = vset.pattern.permute.xlu0 0
      %1036 = vperm.xlu0 %1035, %v685
      %v1037 = vpop.permute.xlu0 %1036
      %1040 = vset.pattern.permute.xlu0 0
      %1041 = vperm.xlu0 %1040, %v686
      %v1042 = vpop.permute.xlu0 %1041
      %1045 = vset.pattern.permute.xlu0 0
      %1046 = vperm.xlu0 %1045, %v687
      %v1047 = vpop.permute.xlu0 %1046
      %1050 = vset.pattern.permute.xlu0 0
      %1051 = vperm.xlu0 %1050, %v688
      %v1052 = vpop.permute.xlu0 %1051
      %1055 = vset.pattern.permute.xlu0 0
      %1056 = vperm.xlu0 %1055, %v689
      %v1057 = vpop.permute.xlu0 %1056
      %1060 = vset.pattern.permute.xlu0 0
      %1061 = vperm.xlu0 %1060, %v690
      %v1062 = vpop.permute.xlu0 %1061
      %1065 = vset.pattern.permute.xlu0 0
      %1066 = vperm.xlu0 %1065, %v691
      %v1067 = vpop.permute.xlu0 %1066
      %1070 = vset.pattern.permute.xlu0 0
      %1071 = vperm.xlu0 %1070, %v692
      %v1072 = vpop.permute.xlu0 %1071
      %v1074 = vmul.f32 %v703, %v1037
      %v1075 = vmul.f32 %v704, %v1042
      %v1076 = vmul.f32 %v705, %v1047
      %v1077 = vmul.f32 %v706, %v1052
      %v1078 = vmul.f32 %v707, %v1057
      %v1079 = vmul.f32 %v708, %v1062
      %v1080 = vmul.f32 %v709, %v1067
      %v1081 = vmul.f32 %v702, %v1072
      %1083 = vset.pattern.permute.xlu0 0
      %1084 = vperm.xlu0 %1083, %v694
      %v1085 = vpop.permute.xlu0 %1084
      %1088 = vset.pattern.permute.xlu0 0
      %1089 = vperm.xlu0 %1088, %v695
      %v1090 = vpop.permute.xlu0 %1089
      %1093 = vset.pattern.permute.xlu0 0
      %1094 = vperm.xlu0 %1093, %v696
      %v1095 = vpop.permute.xlu0 %1094
      %1098 = vset.pattern.permute.xlu0 0
      %1099 = vperm.xlu0 %1098, %v697
      %v1100 = vpop.permute.xlu0 %1099
      %1103 = vset.pattern.permute.xlu0 0
      %1104 = vperm.xlu0 %1103, %v698
      %v1105 = vpop.permute.xlu0 %1104
      %1108 = vset.pattern.permute.xlu0 0
      %1109 = vperm.xlu0 %1108, %v699
      %v1110 = vpop.permute.xlu0 %1109
      %1113 = vset.pattern.permute.xlu0 0
      %1114 = vperm.xlu0 %1113, %v700
      %v1115 = vpop.permute.xlu0 %1114
      %1118 = vset.pattern.permute.xlu0 0
      %1119 = vperm.xlu0 %1118, %v701
      %v1120 = vpop.permute.xlu0 %1119
      %v1122 = vmul.f32 %v839, %v1085
      %v1123 = vmul.f32 %v838, %v1090
      %v1124 = vmul.f32 %v837, %v1095
      %v1125 = vmul.f32 %v836, %v1100
      %v1126 = vmul.f32 %v835, %v1105
      %v1127 = vmul.f32 %v834, %v1110
      %v1128 = vmul.f32 %v841, %v1115
      %v1129 = vmul.f32 %v840, %v1120
      %1138 = vrot.lane.b32.xlu0 %v817, 16
      %v1139 = vpop.permute.xlu0 %1138
      %1140 = vrot.lane.b32.xlu0 %v818, 16
      %v1141 = vpop.permute.xlu0 %1140
      %1142 = vrot.lane.b32.xlu0 %v819, 16
      %v1143 = vpop.permute.xlu0 %1142
      %1144 = vrot.lane.b32.xlu0 %v820, 16
      %v1145 = vpop.permute.xlu0 %1144
      %1146 = vrot.lane.b32.xlu0 %v821, 16
      %v1147 = vpop.permute.xlu0 %1146
      %1148 = vrot.lane.b32.xlu0 %v822, 16
      %v1149 = vpop.permute.xlu0 %1148
      %1150 = vrot.lane.b32.xlu0 %v823, 16
      %v1151 = vpop.permute.xlu0 %1150
      %1152 = vrot.lane.b32.xlu0 %v824, 16
      %v1153 = vpop.permute.xlu0 %1152
      %1170 = vrot.lane.b32.xlu0 %v882, 32
      %v1171 = vpop.permute.xlu0 %1170
      %1172 = vrot.lane.b32.xlu0 %v883, 32
      %v1173 = vpop.permute.xlu0 %1172
      %1174 = vrot.lane.b32.xlu0 %v884, 32
      %v1175 = vpop.permute.xlu0 %1174
      %1176 = vrot.lane.b32.xlu0 %v885, 32
      %v1177 = vpop.permute.xlu0 %1176
      %1178 = vrot.lane.b32.xlu0 %v886, 32
      %v1179 = vpop.permute.xlu0 %1178
      %1180 = vrot.lane.b32.xlu0 %v887, 32
      %v1181 = vpop.permute.xlu0 %1180
      %1182 = vrot.lane.b32.xlu0 %v888, 32
      %v1183 = vpop.permute.xlu0 %1182
      %1184 = vrot.lane.b32.xlu0 %v889, 32
      %v1185 = vpop.permute.xlu0 %1184
      %1202 = vrot.lane.b32.xlu0 %v930, 48
      %v1203 = vpop.permute.xlu0 %1202
      %1204 = vrot.lane.b32.xlu0 %v931, 48
      %v1205 = vpop.permute.xlu0 %1204
      %1206 = vrot.lane.b32.xlu0 %v932, 48
      %v1207 = vpop.permute.xlu0 %1206
      %1208 = vrot.lane.b32.xlu0 %v933, 48
      %v1209 = vpop.permute.xlu0 %1208
      %1210 = vrot.lane.b32.xlu0 %v934, 48
      %v1211 = vpop.permute.xlu0 %1210
      %1212 = vrot.lane.b32.xlu0 %v935, 48
      %v1213 = vpop.permute.xlu0 %1212
      %1214 = vrot.lane.b32.xlu0 %v936, 48
      %v1215 = vpop.permute.xlu0 %1214
      %1216 = vrot.lane.b32.xlu0 %v937, 48
      %v1217 = vpop.permute.xlu0 %1216
      %1234 = vrot.lane.b32.xlu0 %v702, 64
      %v1235 = vpop.permute.xlu0 %1234
      %1236 = vrot.lane.b32.xlu0 %v703, 64
      %v1237 = vpop.permute.xlu0 %1236
      %1238 = vrot.lane.b32.xlu0 %v704, 64
      %v1239 = vpop.permute.xlu0 %1238
      %1240 = vrot.lane.b32.xlu0 %v705, 64
      %v1241 = vpop.permute.xlu0 %1240
      %1242 = vrot.lane.b32.xlu0 %v706, 64
      %v1243 = vpop.permute.xlu0 %1242
      %1244 = vrot.lane.b32.xlu0 %v707, 64
      %v1245 = vpop.permute.xlu0 %1244
      %1246 = vrot.lane.b32.xlu0 %v708, 64
      %v1247 = vpop.permute.xlu0 %1246
      %1248 = vrot.lane.b32.xlu0 %v709, 64
      %v1249 = vpop.permute.xlu0 %1248
      %1266 = vrot.lane.b32.xlu0 %v978, 80
      %v1267 = vpop.permute.xlu0 %1266
      %1268 = vrot.lane.b32.xlu0 %v979, 80
      %v1269 = vpop.permute.xlu0 %1268
      %1270 = vrot.lane.b32.xlu0 %v980, 80
      %v1271 = vpop.permute.xlu0 %1270
      %1272 = vrot.lane.b32.xlu0 %v981, 80
      %v1273 = vpop.permute.xlu0 %1272
      %1274 = vrot.lane.b32.xlu0 %v982, 80
      %v1275 = vpop.permute.xlu0 %1274
      %1276 = vrot.lane.b32.xlu0 %v983, 80
      %v1277 = vpop.permute.xlu0 %1276
      %1278 = vrot.lane.b32.xlu0 %v984, 80
      %v1279 = vpop.permute.xlu0 %1278
      %1280 = vrot.lane.b32.xlu0 %v985, 80
      %v1281 = vpop.permute.xlu0 %1280
      %1298 = vrot.lane.b32.xlu0 %v1026, 96
      %v1299 = vpop.permute.xlu0 %1298
      %1300 = vrot.lane.b32.xlu0 %v1027, 96
      %v1301 = vpop.permute.xlu0 %1300
      %1302 = vrot.lane.b32.xlu0 %v1028, 96
      %v1303 = vpop.permute.xlu0 %1302
      %1304 = vrot.lane.b32.xlu0 %v1029, 96
      %v1305 = vpop.permute.xlu0 %1304
      %1306 = vrot.lane.b32.xlu0 %v1030, 96
      %v1307 = vpop.permute.xlu0 %1306
      %1308 = vrot.lane.b32.xlu0 %v1031, 96
      %v1309 = vpop.permute.xlu0 %1308
      %1310 = vrot.lane.b32.xlu0 %v1032, 96
      %v1311 = vpop.permute.xlu0 %1310
      %1312 = vrot.lane.b32.xlu0 %v1033, 96
      %v1313 = vpop.permute.xlu0 %1312
      %1330 = vrot.lane.b32.xlu0 %v1074, 112
      %v1331 = vpop.permute.xlu0 %1330
      %1332 = vrot.lane.b32.xlu0 %v1075, 112
      %v1333 = vpop.permute.xlu0 %1332
      %1334 = vrot.lane.b32.xlu0 %v1076, 112
      %v1335 = vpop.permute.xlu0 %1334
      %1336 = vrot.lane.b32.xlu0 %v1077, 112
      %v1337 = vpop.permute.xlu0 %1336
      %1338 = vrot.lane.b32.xlu0 %v1078, 112
      %v1339 = vpop.permute.xlu0 %1338
      %1340 = vrot.lane.b32.xlu0 %v1079, 112
      %v1341 = vpop.permute.xlu0 %1340
      %1342 = vrot.lane.b32.xlu0 %v1080, 112
      %v1343 = vpop.permute.xlu0 %1342
      %1344 = vrot.lane.b32.xlu0 %v1081, 112
      %v1345 = vpop.permute.xlu0 %1344
      %vm1354 = vcmask 130048
      %v1355 = vsel %vm1354, %v769, %v1139
      %v1356 = vsel %vm1354, %v770, %v1141
      %v1357 = vsel %vm1354, %v771, %v1143
      %v1358 = vsel %vm1354, %v772, %v1145
      %v1359 = vsel %vm1354, %v773, %v1147
      %v1360 = vsel %vm1354, %v774, %v1149
      %v1361 = vsel %vm1354, %v775, %v1151
      %v1362 = vsel %vm1354, %v776, %v1153
      %vm1363 = vcmask 261120
      %v1364 = vsel %vm1363, %v1355, %v1171
      %v1365 = vsel %vm1363, %v1356, %v1173
      %v1366 = vsel %vm1363, %v1357, %v1175
      %v1367 = vsel %vm1363, %v1358, %v1177
      %v1368 = vsel %vm1363, %v1359, %v1179
      %v1369 = vsel %vm1363, %v1360, %v1181
      %v1370 = vsel %vm1363, %v1361, %v1183
      %v1371 = vsel %vm1363, %v1362, %v1185
      %vm1372 = vcmask 392192
      %v1373 = vsel %vm1372, %v1364, %v1203
      %v1374 = vsel %vm1372, %v1365, %v1205
      %v1375 = vsel %vm1372, %v1366, %v1207
      %v1376 = vsel %vm1372, %v1367, %v1209
      %v1377 = vsel %vm1372, %v1368, %v1211
      %v1378 = vsel %vm1372, %v1369, %v1213
      %v1379 = vsel %vm1372, %v1370, %v1215
      %v1380 = vsel %vm1372, %v1371, %v1217
      %vm1381 = vcmask 523264
      %v1382 = vsel %vm1381, %v1373, %v1235
      %v1383 = vsel %vm1381, %v1374, %v1237
      %v1384 = vsel %vm1381, %v1375, %v1239
      %v1385 = vsel %vm1381, %v1376, %v1241
      %v1386 = vsel %vm1381, %v1377, %v1243
      %v1387 = vsel %vm1381, %v1378, %v1245
      %v1388 = vsel %vm1381, %v1379, %v1247
      %v1389 = vsel %vm1381, %v1380, %v1249
      %vm1390 = vcmask 654336
      %v1391 = vsel %vm1390, %v1382, %v1267
      %v1392 = vsel %vm1390, %v1383, %v1269
      %v1393 = vsel %vm1390, %v1384, %v1271
      %v1394 = vsel %vm1390, %v1385, %v1273
      %v1395 = vsel %vm1390, %v1386, %v1275
      %v1396 = vsel %vm1390, %v1387, %v1277
      %v1397 = vsel %vm1390, %v1388, %v1279
      %v1398 = vsel %vm1390, %v1389, %v1281
      %vm1399 = vcmask 785408
      %v1400 = vsel %vm1399, %v1391, %v1299
      %v1401 = vsel %vm1399, %v1392, %v1301
      %v1402 = vsel %vm1399, %v1393, %v1303
      %v1403 = vsel %vm1399, %v1394, %v1305
      %v1404 = vsel %vm1399, %v1395, %v1307
      %v1405 = vsel %vm1399, %v1396, %v1309
      %v1406 = vsel %vm1399, %v1397, %v1311
      %v1407 = vsel %vm1399, %v1398, %v1313
      %vm1408 = vcmask 916480
      %v1409 = vsel %vm1408, %v1400, %v1331
      %v1410 = vsel %vm1408, %v1401, %v1333
      %v1411 = vsel %vm1408, %v1402, %v1335
      %v1412 = vsel %vm1408, %v1403, %v1337
      %v1413 = vsel %vm1408, %v1404, %v1339
      %v1414 = vsel %vm1408, %v1405, %v1341
      %v1415 = vsel %vm1408, %v1406, %v1343
      %v1416 = vsel %vm1408, %v1407, %v1345
      %v1417 = vpack.c.bf16 %v1410, %v1409
      %v1418 = vpack.c.bf16 %v1123, %v1122
      %v1419 = vpack.c.bf16 %v1412, %v1411
      %v1420 = vpack.c.bf16 %v1125, %v1124
      %v1421 = vpack.c.bf16 %v1414, %v1413
      %v1422 = vpack.c.bf16 %v1127, %v1126
      %v1423 = vpack.c.bf16 %v1416, %v1415
      %v1424 = vpack.c.bf16 %v1129, %v1128
      %v1425 = vld [vmem:[%s2] sm:$0xf]
      %v1426 = vld [vmem:[%s2 + $0x4] sm:$0xf]
      %v1427 = vld [vmem:[%s2 + $0x8] sm:$0xf]
      %v1428 = vld [vmem:[%s2 + $0xc] sm:$0xf]
      %v1429 = vld [vmem:[%s2 + $0x10] sm:$0xf]
      %v1430 = vld [vmem:[%s2 + $0x14] sm:$0xf]
      %v1431 = vld [vmem:[%s2 + $0x18] sm:$0xf]
      %v1432 = vld [vmem:[%s2 + $0x1c] sm:$0xf]
      %v1433 = vld [vmem:[%s2 + $0x20] sm:$0xf]
      %v1434 = vld [vmem:[%s2 + $0x24] sm:$0xf]
      %v1435 = vld [vmem:[%s2 + $0x28] sm:$0xf]
      %v1436 = vld [vmem:[%s2 + $0x2c] sm:$0xf]
      %v1437 = vld [vmem:[%s2 + $0x30] sm:$0xf]
      %v1438 = vld [vmem:[%s2 + $0x34] sm:$0xf]
      %v1439 = vld [vmem:[%s2 + $0x38] sm:$0xf]
      %v1440 = vld [vmem:[%s2 + $0x3c] sm:$0xf]
      %v1441 = vld [vmem:[%s2 + $0x40] sm:$0xf]
      %v1442 = vld [vmem:[%s2 + $0x44] sm:$0xf]
      %v1443 = vld [vmem:[%s3] sm:$0x1]
      %v1445 = vlaneseq
      %v1446 = vshrl.u32 %v1445, 7
      %v1447 = vsub.s32 0, %v1446
      %v1448 = vrot.slane %v1443, %v1447
      %v1468 = vunpack.c.l.b16 %v1425
      %v1469 = vunpack.c.l.b16 %v1426
      %v1470 = vunpack.c.l.b16 %v1427
      %v1471 = vunpack.c.l.b16 %v1428
      %v1472 = vunpack.c.l.b16 %v1429
      %v1473 = vunpack.c.l.b16 %v1430
      %v1474 = vunpack.c.l.b16 %v1431
      %v1475 = vunpack.c.l.b16 %v1432
      %v1476 = vunpack.c.l.b16 %v1433
      %v1477 = vunpack.c.l.b16 %v1434
      %v1478 = vunpack.c.l.b16 %v1435
      %v1479 = vunpack.c.l.b16 %v1436
      %v1480 = vunpack.c.l.b16 %v1437
      %v1481 = vunpack.c.l.b16 %v1438
      %v1482 = vunpack.c.l.b16 %v1439
      %v1483 = vunpack.c.l.b16 %v1440
      %v1484 = vunpack.c.l.b16 %v1441
      %v1485 = vunpack.c.l.b16 %v1442
      %v1486 = vpack.c.b16 %v1469, %v1468
      %v1487 = vpack.c.b16 %v1471, %v1470
      %v1488 = vpack.c.b16 %v1473, %v1472
      %v1489 = vpack.c.b16 %v1475, %v1474
      %v1490 = vpack.c.b16 %v1477, %v1476
      %v1491 = vpack.c.b16 %v1479, %v1478
      %v1492 = vpack.c.b16 %v1481, %v1480
      %v1493 = vpack.c.b16 %v1483, %v1482
      %v1494 = vpack.c.b16 %v1485, %v1484
      %v1505 = vsel %vm1354, %v1418, 0
      %v1508 = vsel %vm1354, %v1420, 0
      %v1511 = vsel %vm1354, %v1422, 0
      %v1514 = vsel %vm1354, %v1424, 0
      %1516 = vmatprep.subr.bf16.mxu0 0
      %1517 = vmatpush1.bf16.msra.mxu0 %v1493
      %1518 = vmatprep.subr.bf16.mxu0 0
      %1519 = vmatpush1.bf16.msra.mxu0 %v1492
      %1520 = vmatprep.subr.bf16.mxu0 0
      %1521 = vmatpush1.bf16.msra.mxu0 %v1491
      %1522 = vmatprep.subr.bf16.mxu0 0
      %1523 = vmatpush1.bf16.msra.mxu0 %v1490
      %1524 = vmatprep.subr.bf16.mxu0 0
      %1525 = vmatpush1.bf16.msra.mxu0 %v1489
      %1526 = vmatprep.subr.bf16.mxu0 0
      %1527 = vmatpush1.bf16.msra.mxu0 %v1488
      %1528 = vmatprep.subr.bf16.mxu0 0
      %1529 = vmatpush1.bf16.msra.mxu0 %v1487
      %1530 = vmatprep.subr.bf16.mxu0 0
      %1531 = vmatpush1.bf16.msra.mxu0 %v1486
      %1532 = vmatprep.subr.bf16.mxu0 0
      %1533 = vmatpush2.bf16.msra.mxu0 0
      %1534 = vmatprep.subr.bf16.mxu0 0
      %1535 = vmatpush2.bf16.msra.mxu0 0
      %1536 = vmatprep.subr.bf16.mxu0 0
      %1537 = vmatpush2.bf16.msra.mxu0 0
      %1538 = vmatprep.subr.bf16.mxu0 0
      %1539 = vmatpush2.bf16.msra.mxu0 0
      %1540 = vmatprep.subr.bf16.mxu0 0
      %1541 = vmatpush2.bf16.msra.mxu0 0
      %1542 = vmatprep.subr.bf16.mxu0 0
      %1543 = vmatpush2.bf16.msra.mxu0 0
      %1544 = vmatprep.subr.bf16.mxu0 0
      %1545 = vmatpush2.bf16.msra.mxu0 0
      %1546 = vmatprep.subr.bf16.mxu0 0
      %1547 = vmatpush2.bf16.msra.mxu0 %v1494
      %1548 = vmatprep.mubr.bf16.mxu0 %v1505
      %1549 = vmatmul.mubr.bf16.gmra.mxu0 %v1417
      %v1550 = vpop.f32.mrf.mxu0
      %v1551 = vadd.f32 %v1448, %v1550
      %v1552 = vpop.f32.mrf.mxu0
      %v1553 = vpop.f32.mrf.mxu0
      %v1554 = vadd.f32 %v1448, %v1553
      %v1555 = vpop.f32.mrf.mxu0
      %1556 = vmatprep.mubr.bf16.mxu0 %v1508
      %1557 = vmatmul.mubr.bf16.gmra.mxu0 %v1419
      %v1558 = vpop.f32.mrf.mxu0
      %v1559 = vadd.f32 %v1448, %v1558
      %v1560 = vpop.f32.mrf.mxu0
      %v1561 = vpop.f32.mrf.mxu0
      %v1562 = vadd.f32 %v1448, %v1561
      %v1563 = vpop.f32.mrf.mxu0
      %1564 = vmatprep.mubr.bf16.mxu0 %v1511
      %1565 = vmatmul.mubr.bf16.gmra.mxu0 %v1421
      %v1566 = vpop.f32.mrf.mxu0
      %v1567 = vadd.f32 %v1448, %v1566
      %v1568 = vpop.f32.mrf.mxu0
      %v1569 = vpop.f32.mrf.mxu0
      %v1570 = vadd.f32 %v1448, %v1569
      %v1571 = vpop.f32.mrf.mxu0
      %1572 = vmatprep.mubr.bf16.mxu0 %v1514
      %1573 = vmatmul.mubr.bf16.gmra.mxu0 %v1423
      %v1574 = vpop.f32.mrf.mxu0
      %v1575 = vadd.f32 %v1448, %v1574
      %v1576 = vpop.f32.mrf.mxu0
      %v1577 = vpop.f32.mrf.mxu0
      %v1578 = vadd.f32 %v1448, %v1577
      %v1579 = vpop.f32.mrf.mxu0
      %1580 = vdwg.mxu0
      %v1581 = vmax.f32 %v1551, 0.0
      %v1582 = vmax.f32 %v1554, 0.0
      %v1583 = vmax.f32 %v1559, 0.0
      %v1584 = vmax.f32 %v1562, 0.0
      %v1585 = vmax.f32 %v1567, 0.0
      %v1586 = vmax.f32 %v1570, 0.0
      %v1587 = vmax.f32 %v1575, 0.0
      %v1588 = vmax.f32 %v1578, 0.0
      %v1589 = vrot.slane %v1581, 7
      %v1590 = vrot.slane %v1582, 7
      %v1591 = vrot.slane %v1583, 7
      %v1592 = vrot.slane %v1584, 7
      %v1593 = vrot.slane %v1585, 7
      %v1594 = vrot.slane %v1586, 7
      %v1595 = vrot.slane %v1587, 7
      %v1596 = vrot.slane %v1588, 7
      %v1597 = vsel %vm720, %v1595, %v1596
      %v1598 = vsel %vm720, %v1594, %v1595
      %v1599 = vsel %vm720, %v1593, %v1594
      %v1600 = vsel %vm720, %v1592, %v1593
      %v1601 = vsel %vm720, %v1591, %v1592
      %v1602 = vsel %vm720, %v1590, %v1591
      %v1603 = vsel %vm720, %v1589, %v1590
      %v1604 = vsel %vm720, %v1596, %v1589
      %v1605 = vmul.f32 %v1597, %v732
      %v1606 = vmul.f32 %v1604, %v737
      %v1607 = vmul.f32 %v1603, %v742
      %v1608 = vmul.f32 %v1602, %v747
      %v1609 = vmul.f32 %v1601, %v752
      %v1610 = vmul.f32 %v1600, %v757
      %v1611 = vmul.f32 %v1599, %v762
      %v1612 = vmul.f32 %v1598, %v767
      %v1613 = vmul.f32 %v1588, %v780
      %v1614 = vmul.f32 %v1581, %v785
      %v1615 = vmul.f32 %v1582, %v790
      %v1616 = vmul.f32 %v1583, %v795
      %v1617 = vmul.f32 %v1584, %v800
      %v1618 = vmul.f32 %v1585, %v805
      %v1619 = vmul.f32 %v1586, %v810
      %v1620 = vmul.f32 %v1587, %v815
      %v1621 = vrot.slane %v1581, 1
      %v1622 = vrot.slane %v1582, 1
      %v1623 = vrot.slane %v1583, 1
      %v1624 = vrot.slane %v1584, 1
      %v1625 = vrot.slane %v1585, 1
      %v1626 = vrot.slane %v1586, 1
      %v1627 = vrot.slane %v1587, 1
      %v1628 = vrot.slane %v1588, 1
      %v1629 = vsel %vm833, %v1627, %v1628
      %v1630 = vsel %vm833, %v1626, %v1627
      %v1631 = vsel %vm833, %v1625, %v1626
      %v1632 = vsel %vm833, %v1624, %v1625
      %v1633 = vsel %vm833, %v1623, %v1624
      %v1634 = vsel %vm833, %v1622, %v1623
      %v1635 = vsel %vm833, %v1621, %v1622
      %v1636 = vsel %vm833, %v1628, %v1621
      %v1637 = vmul.f32 %v1636, %v845
      %v1638 = vmul.f32 %v1635, %v850
      %v1639 = vmul.f32 %v1634, %v855
      %v1640 = vmul.f32 %v1633, %v860
      %v1641 = vmul.f32 %v1632, %v865
      %v1642 = vmul.f32 %v1631, %v870
      %v1643 = vmul.f32 %v1630, %v875
      %v1644 = vmul.f32 %v1629, %v880
      %v1645 = vmul.f32 %v1604, %v893
      %v1646 = vmul.f32 %v1603, %v898
      %v1647 = vmul.f32 %v1602, %v903
      %v1648 = vmul.f32 %v1601, %v908
      %v1649 = vmul.f32 %v1600, %v913
      %v1650 = vmul.f32 %v1599, %v918
      %v1651 = vmul.f32 %v1598, %v923
      %v1652 = vmul.f32 %v1597, %v928
      %v1653 = vmul.f32 %v1635, %v941
      %v1654 = vmul.f32 %v1634, %v946
      %v1655 = vmul.f32 %v1633, %v951
      %v1656 = vmul.f32 %v1632, %v956
      %v1657 = vmul.f32 %v1631, %v961
      %v1658 = vmul.f32 %v1630, %v966
      %v1659 = vmul.f32 %v1629, %v971
      %v1660 = vmul.f32 %v1636, %v976
      %v1661 = vmul.f32 %v1603, %v989
      %v1662 = vmul.f32 %v1602, %v994
      %v1663 = vmul.f32 %v1601, %v999
      %v1664 = vmul.f32 %v1600, %v1004
      %v1665 = vmul.f32 %v1599, %v1009
      %v1666 = vmul.f32 %v1598, %v1014
      %v1667 = vmul.f32 %v1597, %v1019
      %v1668 = vmul.f32 %v1604, %v1024
      %v1669 = vmul.f32 %v1582, %v1037
      %v1670 = vmul.f32 %v1583, %v1042
      %v1671 = vmul.f32 %v1584, %v1047
      %v1672 = vmul.f32 %v1585, %v1052
      %v1673 = vmul.f32 %v1586, %v1057
      %v1674 = vmul.f32 %v1587, %v1062
      %v1675 = vmul.f32 %v1588, %v1067
      %v1676 = vmul.f32 %v1581, %v1072
      %v1677 = vmul.f32 %v1634, %v1085
      %v1678 = vmul.f32 %v1633, %v1090
      %v1679 = vmul.f32 %v1632, %v1095
      %v1680 = vmul.f32 %v1631, %v1100
      %v1681 = vmul.f32 %v1630, %v1105
      %v1682 = vmul.f32 %v1629, %v1110
      %v1683 = vmul.f32 %v1636, %v1115
      %v1684 = vmul.f32 %v1635, %v1120
      %1693 = vrot.lane.b32.xlu0 %v1613, 16
      %v1694 = vpop.permute.xlu0 %1693
      %1695 = vrot.lane.b32.xlu0 %v1614, 16
      %v1696 = vpop.permute.xlu0 %1695
      %1697 = vrot.lane.b32.xlu0 %v1615, 16
      %v1698 = vpop.permute.xlu0 %1697
      %1699 = vrot.lane.b32.xlu0 %v1616, 16
      %v1700 = vpop.permute.xlu0 %1699
      %1701 = vrot.lane.b32.xlu0 %v1617, 16
      %v1702 = vpop.permute.xlu0 %1701
      %1703 = vrot.lane.b32.xlu0 %v1618, 16
      %v1704 = vpop.permute.xlu0 %1703
      %1705 = vrot.lane.b32.xlu0 %v1619, 16
      %v1706 = vpop.permute.xlu0 %1705
      %1707 = vrot.lane.b32.xlu0 %v1620, 16
      %v1708 = vpop.permute.xlu0 %1707
      %1725 = vrot.lane.b32.xlu0 %v1637, 32
      %v1726 = vpop.permute.xlu0 %1725
      %1727 = vrot.lane.b32.xlu0 %v1638, 32
      %v1728 = vpop.permute.xlu0 %1727
      %1729 = vrot.lane.b32.xlu0 %v1639, 32
      %v1730 = vpop.permute.xlu0 %1729
      %1731 = vrot.lane.b32.xlu0 %v1640, 32
      %v1732 = vpop.permute.xlu0 %1731
      %1733 = vrot.lane.b32.xlu0 %v1641, 32
      %v1734 = vpop.permute.xlu0 %1733
      %1735 = vrot.lane.b32.xlu0 %v1642, 32
      %v1736 = vpop.permute.xlu0 %1735
      %1737 = vrot.lane.b32.xlu0 %v1643, 32
      %v1738 = vpop.permute.xlu0 %1737
      %1739 = vrot.lane.b32.xlu0 %v1644, 32
      %v1740 = vpop.permute.xlu0 %1739
      %1757 = vrot.lane.b32.xlu0 %v1645, 48
      %v1758 = vpop.permute.xlu0 %1757
      %1759 = vrot.lane.b32.xlu0 %v1646, 48
      %v1760 = vpop.permute.xlu0 %1759
      %1761 = vrot.lane.b32.xlu0 %v1647, 48
      %v1762 = vpop.permute.xlu0 %1761
      %1763 = vrot.lane.b32.xlu0 %v1648, 48
      %v1764 = vpop.permute.xlu0 %1763
      %1765 = vrot.lane.b32.xlu0 %v1649, 48
      %v1766 = vpop.permute.xlu0 %1765
      %1767 = vrot.lane.b32.xlu0 %v1650, 48
      %v1768 = vpop.permute.xlu0 %1767
      %1769 = vrot.lane.b32.xlu0 %v1651, 48
      %v1770 = vpop.permute.xlu0 %1769
      %1771 = vrot.lane.b32.xlu0 %v1652, 48
      %v1772 = vpop.permute.xlu0 %1771
      %1789 = vrot.lane.b32.xlu0 %v1581, 64
      %v1790 = vpop.permute.xlu0 %1789
      %1791 = vrot.lane.b32.xlu0 %v1582, 64
      %v1792 = vpop.permute.xlu0 %1791
      %1793 = vrot.lane.b32.xlu0 %v1583, 64
      %v1794 = vpop.permute.xlu0 %1793
      %1795 = vrot.lane.b32.xlu0 %v1584, 64
      %v1796 = vpop.permute.xlu0 %1795
      %1797 = vrot.lane.b32.xlu0 %v1585, 64
      %v1798 = vpop.permute.xlu0 %1797
      %1799 = vrot.lane.b32.xlu0 %v1586, 64
      %v1800 = vpop.permute.xlu0 %1799
      %1801 = vrot.lane.b32.xlu0 %v1587, 64
      %v1802 = vpop.permute.xlu0 %1801
      %1803 = vrot.lane.b32.xlu0 %v1588, 64
      %v1804 = vpop.permute.xlu0 %1803
      %1821 = vrot.lane.b32.xlu0 %v1653, 80
      %v1822 = vpop.permute.xlu0 %1821
      %1823 = vrot.lane.b32.xlu0 %v1654, 80
      %v1824 = vpop.permute.xlu0 %1823
      %1825 = vrot.lane.b32.xlu0 %v1655, 80
      %v1826 = vpop.permute.xlu0 %1825
      %1827 = vrot.lane.b32.xlu0 %v1656, 80
      %v1828 = vpop.permute.xlu0 %1827
      %1829 = vrot.lane.b32.xlu0 %v1657, 80
      %v1830 = vpop.permute.xlu0 %1829
      %1831 = vrot.lane.b32.xlu0 %v1658, 80
      %v1832 = vpop.permute.xlu0 %1831
      %1833 = vrot.lane.b32.xlu0 %v1659, 80
      %v1834 = vpop.permute.xlu0 %1833
      %1835 = vrot.lane.b32.xlu0 %v1660, 80
      %v1836 = vpop.permute.xlu0 %1835
      %1853 = vrot.lane.b32.xlu0 %v1661, 96
      %v1854 = vpop.permute.xlu0 %1853
      %1855 = vrot.lane.b32.xlu0 %v1662, 96
      %v1856 = vpop.permute.xlu0 %1855
      %1857 = vrot.lane.b32.xlu0 %v1663, 96
      %v1858 = vpop.permute.xlu0 %1857
      %1859 = vrot.lane.b32.xlu0 %v1664, 96
      %v1860 = vpop.permute.xlu0 %1859
      %1861 = vrot.lane.b32.xlu0 %v1665, 96
      %v1862 = vpop.permute.xlu0 %1861
      %1863 = vrot.lane.b32.xlu0 %v1666, 96
      %v1864 = vpop.permute.xlu0 %1863
      %1865 = vrot.lane.b32.xlu0 %v1667, 96
      %v1866 = vpop.permute.xlu0 %1865
      %1867 = vrot.lane.b32.xlu0 %v1668, 96
      %v1868 = vpop.permute.xlu0 %1867
      %1885 = vrot.lane.b32.xlu0 %v1669, 112
      %v1886 = vpop.permute.xlu0 %1885
      %1887 = vrot.lane.b32.xlu0 %v1670, 112
      %v1888 = vpop.permute.xlu0 %1887
      %1889 = vrot.lane.b32.xlu0 %v1671, 112
      %v1890 = vpop.permute.xlu0 %1889
      %1891 = vrot.lane.b32.xlu0 %v1672, 112
      %v1892 = vpop.permute.xlu0 %1891
      %1893 = vrot.lane.b32.xlu0 %v1673, 112
      %v1894 = vpop.permute.xlu0 %1893
      %1895 = vrot.lane.b32.xlu0 %v1674, 112
      %v1896 = vpop.permute.xlu0 %1895
      %1897 = vrot.lane.b32.xlu0 %v1675, 112
      %v1898 = vpop.permute.xlu0 %1897
      %1899 = vrot.lane.b32.xlu0 %v1676, 112
      %v1900 = vpop.permute.xlu0 %1899
      %v1909 = vsel %vm1354, %v1605, %v1694
      %v1910 = vsel %vm1354, %v1606, %v1696
      %v1911 = vsel %vm1354, %v1607, %v1698
      %v1912 = vsel %vm1354, %v1608, %v1700
      %v1913 = vsel %vm1354, %v1609, %v1702
      %v1914 = vsel %vm1354, %v1610, %v1704
      %v1915 = vsel %vm1354, %v1611, %v1706
      %v1916 = vsel %vm1354, %v1612, %v1708
      %v1917 = vsel %vm1363, %v1909, %v1726
      %v1918 = vsel %vm1363, %v1910, %v1728
      %v1919 = vsel %vm1363, %v1911, %v1730
      %v1920 = vsel %vm1363, %v1912, %v1732
      %v1921 = vsel %vm1363, %v1913, %v1734
      %v1922 = vsel %vm1363, %v1914, %v1736
      %v1923 = vsel %vm1363, %v1915, %v1738
      %v1924 = vsel %vm1363, %v1916, %v1740
      %v1925 = vsel %vm1372, %v1917, %v1758
      %v1926 = vsel %vm1372, %v1918, %v1760
      %v1927 = vsel %vm1372, %v1919, %v1762
      %v1928 = vsel %vm1372, %v1920, %v1764
      %v1929 = vsel %vm1372, %v1921, %v1766
      %v1930 = vsel %vm1372, %v1922, %v1768
      %v1931 = vsel %vm1372, %v1923, %v1770
      %v1932 = vsel %vm1372, %v1924, %v1772
      %v1933 = vsel %vm1381, %v1925, %v1790
      %v1934 = vsel %vm1381, %v1926, %v1792
      %v1935 = vsel %vm1381, %v1927, %v1794
      %v1936 = vsel %vm1381, %v1928, %v1796
      %v1937 = vsel %vm1381, %v1929, %v1798
      %v1938 = vsel %vm1381, %v1930, %v1800
      %v1939 = vsel %vm1381, %v1931, %v1802
      %v1940 = vsel %vm1381, %v1932, %v1804
      %v1941 = vsel %vm1390, %v1933, %v1822
      %v1942 = vsel %vm1390, %v1934, %v1824
      %v1943 = vsel %vm1390, %v1935, %v1826
      %v1944 = vsel %vm1390, %v1936, %v1828
      %v1945 = vsel %vm1390, %v1937, %v1830
      %v1946 = vsel %vm1390, %v1938, %v1832
      %v1947 = vsel %vm1390, %v1939, %v1834
      %v1948 = vsel %vm1390, %v1940, %v1836
      %v1949 = vsel %vm1399, %v1941, %v1854
      %v1950 = vsel %vm1399, %v1942, %v1856
      %v1951 = vsel %vm1399, %v1943, %v1858
      %v1952 = vsel %vm1399, %v1944, %v1860
      %v1953 = vsel %vm1399, %v1945, %v1862
      %v1954 = vsel %vm1399, %v1946, %v1864
      %v1955 = vsel %vm1399, %v1947, %v1866
      %v1956 = vsel %vm1399, %v1948, %v1868
      %v1957 = vsel %vm1408, %v1949, %v1886
      %v1958 = vsel %vm1408, %v1950, %v1888
      %v1959 = vsel %vm1408, %v1951, %v1890
      %v1960 = vsel %vm1408, %v1952, %v1892
      %v1961 = vsel %vm1408, %v1953, %v1894
      %v1962 = vsel %vm1408, %v1954, %v1896
      %v1963 = vsel %vm1408, %v1955, %v1898
      %v1964 = vsel %vm1408, %v1956, %v1900
      %v1965 = vpack.c.bf16 %v1958, %v1957
      %v1966 = vpack.c.bf16 %v1678, %v1677
      %v1967 = vpack.c.bf16 %v1960, %v1959
      %v1968 = vpack.c.bf16 %v1680, %v1679
      %v1969 = vpack.c.bf16 %v1962, %v1961
      %v1970 = vpack.c.bf16 %v1682, %v1681
      %v1971 = vpack.c.bf16 %v1964, %v1963
      %v1972 = vpack.c.bf16 %v1684, %v1683
      %v1973 = vld [vmem:[%s4] sm:$0xf]
      %v1974 = vld [vmem:[%s4 + $0x4] sm:$0xf]
      %v1975 = vld [vmem:[%s4 + $0x8] sm:$0xf]
      %v1976 = vld [vmem:[%s4 + $0xc] sm:$0xf]
      %v1977 = vld [vmem:[%s4 + $0x10] sm:$0xf]
      %v1978 = vld [vmem:[%s4 + $0x14] sm:$0xf]
      %v1979 = vld [vmem:[%s4 + $0x18] sm:$0xf]
      %v1980 = vld [vmem:[%s4 + $0x1c] sm:$0xf]
      %v1981 = vld [vmem:[%s4 + $0x20] sm:$0xf]
      %v1982 = vld [vmem:[%s4 + $0x24] sm:$0xf]
      %v1983 = vld [vmem:[%s4 + $0x28] sm:$0xf]
      %v1984 = vld [vmem:[%s4 + $0x2c] sm:$0xf]
      %v1985 = vld [vmem:[%s4 + $0x30] sm:$0xf]
      %v1986 = vld [vmem:[%s4 + $0x34] sm:$0xf]
      %v1987 = vld [vmem:[%s4 + $0x38] sm:$0xf]
      %v1988 = vld [vmem:[%s4 + $0x3c] sm:$0xf]
      %v1989 = vld [vmem:[%s4 + $0x40] sm:$0xf]
      %v1990 = vld [vmem:[%s4 + $0x44] sm:$0xf]
      %v1991 = vld [vmem:[%s5] sm:$0x1]
      %v1993 = vlaneseq
      %v1994 = vshrl.u32 %v1993, 7
      %v1995 = vsub.s32 0, %v1994
      %v1996 = vrot.slane %v1991, %v1995
      %v2016 = vunpack.c.l.b16 %v1973
      %v2017 = vunpack.c.l.b16 %v1974
      %v2018 = vunpack.c.l.b16 %v1975
      %v2019 = vunpack.c.l.b16 %v1976
      %v2020 = vunpack.c.l.b16 %v1977
      %v2021 = vunpack.c.l.b16 %v1978
      %v2022 = vunpack.c.l.b16 %v1979
      %v2023 = vunpack.c.l.b16 %v1980
      %v2024 = vunpack.c.l.b16 %v1981
      %v2025 = vunpack.c.l.b16 %v1982
      %v2026 = vunpack.c.l.b16 %v1983
      %v2027 = vunpack.c.l.b16 %v1984
      %v2028 = vunpack.c.l.b16 %v1985
      %v2029 = vunpack.c.l.b16 %v1986
      %v2030 = vunpack.c.l.b16 %v1987
      %v2031 = vunpack.c.l.b16 %v1988
      %v2032 = vunpack.c.l.b16 %v1989
      %v2033 = vunpack.c.l.b16 %v1990
      %v2034 = vpack.c.b16 %v2017, %v2016
      %v2035 = vpack.c.b16 %v2019, %v2018
      %v2036 = vpack.c.b16 %v2021, %v2020
      %v2037 = vpack.c.b16 %v2023, %v2022
      %v2038 = vpack.c.b16 %v2025, %v2024
      %v2039 = vpack.c.b16 %v2027, %v2026
      %v2040 = vpack.c.b16 %v2029, %v2028
      %v2041 = vpack.c.b16 %v2031, %v2030
      %v2042 = vpack.c.b16 %v2033, %v2032
      %v2053 = vsel %vm1354, %v1966, 0
      %v2056 = vsel %vm1354, %v1968, 0
      %v2059 = vsel %vm1354, %v1970, 0
      %v2062 = vsel %vm1354, %v1972, 0
      %2064 = vmatprep.subr.bf16.mxu0 0
      %2065 = vmatpush1.bf16.msra.mxu0 %v2041
      %2066 = vmatprep.subr.bf16.mxu0 0
      %2067 = vmatpush1.bf16.msra.mxu0 %v2040
      %2068 = vmatprep.subr.bf16.mxu0 0
      %2069 = vmatpush1.bf16.msra.mxu0 %v2039
      %2070 = vmatprep.subr.bf16.mxu0 0
      %2071 = vmatpush1.bf16.msra.mxu0 %v2038
      %2072 = vmatprep.subr.bf16.mxu0 0
      %2073 = vmatpush1.bf16.msra.mxu0 %v2037
      %2074 = vmatprep.subr.bf16.mxu0 0
      %2075 = vmatpush1.bf16.msra.mxu0 %v2036
      %2076 = vmatprep.subr.bf16.mxu0 0
      %2077 = vmatpush1.bf16.msra.mxu0 %v2035
      %2078 = vmatprep.subr.bf16.mxu0 0
      %2079 = vmatpush1.bf16.msra.mxu0 %v2034
      %2080 = vmatprep.subr.bf16.mxu0 0
      %2081 = vmatpush2.bf16.msra.mxu0 0
      %2082 = vmatprep.subr.bf16.mxu0 0
      %2083 = vmatpush2.bf16.msra.mxu0 0
      %2084 = vmatprep.subr.bf16.mxu0 0
      %2085 = vmatpush2.bf16.msra.mxu0 0
      %2086 = vmatprep.subr.bf16.mxu0 0
      %2087 = vmatpush2.bf16.msra.mxu0 0
      %2088 = vmatprep.subr.bf16.mxu0 0
      %2089 = vmatpush2.bf16.msra.mxu0 0
      %2090 = vmatprep.subr.bf16.mxu0 0
      %2091 = vmatpush2.bf16.msra.mxu0 0
      %2092 = vmatprep.subr.bf16.mxu0 0
      %2093 = vmatpush2.bf16.msra.mxu0 0
      %2094 = vmatprep.subr.bf16.mxu0 0
      %2095 = vmatpush2.bf16.msra.mxu0 %v2042
      %2096 = vmatprep.mubr.bf16.mxu0 %v2053
      %2097 = vmatmul.mubr.bf16.gmra.mxu0 %v1965
      %v2098 = vpop.f32.mrf.mxu0
      %v2099 = vadd.f32 %v1996, %v2098
      %v2100 = vpop.f32.mrf.mxu0
      %v2101 = vpop.f32.mrf.mxu0
      %v2102 = vadd.f32 %v1996, %v2101
      %v2103 = vpop.f32.mrf.mxu0
      %2104 = vmatprep.mubr.bf16.mxu0 %v2056
      %2105 = vmatmul.mubr.bf16.gmra.mxu0 %v1967
      %v2106 = vpop.f32.mrf.mxu0
      %v2107 = vadd.f32 %v1996, %v2106
      %v2108 = vpop.f32.mrf.mxu0
      %v2109 = vpop.f32.mrf.mxu0
      %v2110 = vadd.f32 %v1996, %v2109
      %v2111 = vpop.f32.mrf.mxu0
      %2112 = vmatprep.mubr.bf16.mxu0 %v2059
      %2113 = vmatmul.mubr.bf16.gmra.mxu0 %v1969
      %v2114 = vpop.f32.mrf.mxu0
      %v2115 = vadd.f32 %v1996, %v2114
      %v2116 = vpop.f32.mrf.mxu0
      %v2117 = vpop.f32.mrf.mxu0
      %v2118 = vadd.f32 %v1996, %v2117
      %v2119 = vpop.f32.mrf.mxu0
      %2120 = vmatprep.mubr.bf16.mxu0 %v2062
      %2121 = vmatmul.mubr.bf16.gmra.mxu0 %v1971
      %v2122 = vpop.f32.mrf.mxu0
      %v2123 = vadd.f32 %v1996, %v2122
      %v2124 = vpop.f32.mrf.mxu0
      %v2125 = vpop.f32.mrf.mxu0
      %v2126 = vadd.f32 %v1996, %v2125
      %v2127 = vpop.f32.mrf.mxu0
      %2128 = vdwg.mxu0
      %v2129 = vadd.f32 %v2099, %v702
      %v2130 = vadd.f32 %v2102, %v703
      %v2131 = vadd.f32 %v2107, %v704
      %v2132 = vadd.f32 %v2110, %v705
      %v2133 = vadd.f32 %v2115, %v706
      %v2134 = vadd.f32 %v2118, %v707
      %v2135 = vadd.f32 %v2123, %v708
      %v2136 = vadd.f32 %v2126, %v709
      %v2137 = vmax.f32 %v2129, 0.0
      %v2138 = vmax.f32 %v2130, 0.0
      %v2139 = vmax.f32 %v2131, 0.0
      %v2140 = vmax.f32 %v2132, 0.0
      %v2141 = vmax.f32 %v2133, 0.0
      %v2142 = vmax.f32 %v2134, 0.0
      %v2143 = vmax.f32 %v2135, 0.0
      %v2144 = vmax.f32 %v2136, 0.0
      %2153 = vrot.lane.b32.xlu0 %v2137, 16
      %v2154 = vpop.permute.xlu0 %2153
      %2155 = vrot.lane.b32.xlu0 %v2138, 16
      %v2156 = vpop.permute.xlu0 %2155
      %2157 = vrot.lane.b32.xlu0 %v2139, 16
      %v2158 = vpop.permute.xlu0 %2157
      %2159 = vrot.lane.b32.xlu0 %v2140, 16
      %v2160 = vpop.permute.xlu0 %2159
      %2161 = vrot.lane.b32.xlu0 %v2141, 16
      %v2162 = vpop.permute.xlu0 %2161
      %2163 = vrot.lane.b32.xlu0 %v2142, 16
      %v2164 = vpop.permute.xlu0 %2163
      %2165 = vrot.lane.b32.xlu0 %v2143, 16
      %v2166 = vpop.permute.xlu0 %2165
      %2167 = vrot.lane.b32.xlu0 %v2144, 16
      %v2168 = vpop.permute.xlu0 %2167
      %v2177 = vsel %vm1354, %v702, %v2154
      %v2178 = vsel %vm1354, %v703, %v2156
      %v2179 = vsel %vm1354, %v704, %v2158
      %v2180 = vsel %vm1354, %v705, %v2160
      %v2181 = vsel %vm1354, %v706, %v2162
      %v2182 = vsel %vm1354, %v707, %v2164
      %v2183 = vsel %vm1354, %v708, %v2166
      %v2184 = vsel %vm1354, %v709, %v2168
      %v2185 = vrot.slane %v2177, 7
      %v2186 = vrot.slane %v2178, 7
      %v2187 = vrot.slane %v2179, 7
      %v2188 = vrot.slane %v2180, 7
      %v2189 = vrot.slane %v2181, 7
      %v2190 = vrot.slane %v2182, 7
      %v2191 = vrot.slane %v2183, 7
      %v2192 = vrot.slane %v2184, 7
      %v2193 = vsel %vm720, %v2191, %v2192
      %v2194 = vsel %vm720, %v2190, %v2191
      %v2195 = vsel %vm720, %v2189, %v2190
      %v2196 = vsel %vm720, %v2188, %v2189
      %v2197 = vsel %vm720, %v2187, %v2188
      %v2198 = vsel %vm720, %v2186, %v2187
      %v2199 = vsel %vm720, %v2185, %v2186
      %v2200 = vsel %vm720, %v2192, %v2185
      %v2201 = vmul.f32 %v2193, %v732
      %v2202 = vmul.f32 %v2200, %v737
      %v2203 = vmul.f32 %v2199, %v742
      %v2204 = vmul.f32 %v2198, %v747
      %v2205 = vmul.f32 %v2197, %v752
      %v2206 = vmul.f32 %v2196, %v757
      %v2207 = vmul.f32 %v2195, %v762
      %v2208 = vmul.f32 %v2194, %v767
      %v2209 = vmul.f32 %v2184, %v780
      %v2210 = vmul.f32 %v2177, %v785
      %v2211 = vmul.f32 %v2178, %v790
      %v2212 = vmul.f32 %v2179, %v795
      %v2213 = vmul.f32 %v2180, %v800
      %v2214 = vmul.f32 %v2181, %v805
      %v2215 = vmul.f32 %v2182, %v810
      %v2216 = vmul.f32 %v2183, %v815
      %v2217 = vrot.slane %v2177, 1
      %v2218 = vrot.slane %v2178, 1
      %v2219 = vrot.slane %v2179, 1
      %v2220 = vrot.slane %v2180, 1
      %v2221 = vrot.slane %v2181, 1
      %v2222 = vrot.slane %v2182, 1
      %v2223 = vrot.slane %v2183, 1
      %v2224 = vrot.slane %v2184, 1
      %v2225 = vsel %vm833, %v2223, %v2224
      %v2226 = vsel %vm833, %v2222, %v2223
      %v2227 = vsel %vm833, %v2221, %v2222
      %v2228 = vsel %vm833, %v2220, %v2221
      %v2229 = vsel %vm833, %v2219, %v2220
      %v2230 = vsel %vm833, %v2218, %v2219
      %v2231 = vsel %vm833, %v2217, %v2218
      %v2232 = vsel %vm833, %v2224, %v2217
      %v2233 = vmul.f32 %v2232, %v845
      %v2234 = vmul.f32 %v2231, %v850
      %v2235 = vmul.f32 %v2230, %v855
      %v2236 = vmul.f32 %v2229, %v860
      %v2237 = vmul.f32 %v2228, %v865
      %v2238 = vmul.f32 %v2227, %v870
      %v2239 = vmul.f32 %v2226, %v875
      %v2240 = vmul.f32 %v2225, %v880
      %v2241 = vmul.f32 %v2200, %v893
      %v2242 = vmul.f32 %v2199, %v898
      %v2243 = vmul.f32 %v2198, %v903
      %v2244 = vmul.f32 %v2197, %v908
      %v2245 = vmul.f32 %v2196, %v913
      %v2246 = vmul.f32 %v2195, %v918
      %v2247 = vmul.f32 %v2194, %v923
      %v2248 = vmul.f32 %v2193, %v928
      %v2249 = vmul.f32 %v2231, %v941
      %v2250 = vmul.f32 %v2230, %v946
      %v2251 = vmul.f32 %v2229, %v951
      %v2252 = vmul.f32 %v2228, %v956
      %v2253 = vmul.f32 %v2227, %v961
      %v2254 = vmul.f32 %v2226, %v966
      %v2255 = vmul.f32 %v2225, %v971
      %v2256 = vmul.f32 %v2232, %v976
      %v2257 = vmul.f32 %v2199, %v989
      %v2258 = vmul.f32 %v2198, %v994
      %v2259 = vmul.f32 %v2197, %v999
      %v2260 = vmul.f32 %v2196, %v1004
      %v2261 = vmul.f32 %v2195, %v1009
      %v2262 = vmul.f32 %v2194, %v1014
      %v2263 = vmul.f32 %v2193, %v1019
      %v2264 = vmul.f32 %v2200, %v1024
      %v2265 = vmul.f32 %v2178, %v1037
      %v2266 = vmul.f32 %v2179, %v1042
      %v2267 = vmul.f32 %v2180, %v1047
      %v2268 = vmul.f32 %v2181, %v1052
      %v2269 = vmul.f32 %v2182, %v1057
      %v2270 = vmul.f32 %v2183, %v1062
      %v2271 = vmul.f32 %v2184, %v1067
      %v2272 = vmul.f32 %v2177, %v1072
      %v2273 = vmul.f32 %v2230, %v1085
      %v2274 = vmul.f32 %v2229, %v1090
      %v2275 = vmul.f32 %v2228, %v1095
      %v2276 = vmul.f32 %v2227, %v1100
      %v2277 = vmul.f32 %v2226, %v1105
      %v2278 = vmul.f32 %v2225, %v1110
      %v2279 = vmul.f32 %v2232, %v1115
      %v2280 = vmul.f32 %v2231, %v1120
      %2289 = vrot.lane.b32.xlu0 %v2209, 32
      %v2290 = vpop.permute.xlu0 %2289
      %2291 = vrot.lane.b32.xlu0 %v2210, 32
      %v2292 = vpop.permute.xlu0 %2291
      %2293 = vrot.lane.b32.xlu0 %v2211, 32
      %v2294 = vpop.permute.xlu0 %2293
      %2295 = vrot.lane.b32.xlu0 %v2212, 32
      %v2296 = vpop.permute.xlu0 %2295
      %2297 = vrot.lane.b32.xlu0 %v2213, 32
      %v2298 = vpop.permute.xlu0 %2297
      %2299 = vrot.lane.b32.xlu0 %v2214, 32
      %v2300 = vpop.permute.xlu0 %2299
      %2301 = vrot.lane.b32.xlu0 %v2215, 32
      %v2302 = vpop.permute.xlu0 %2301
      %2303 = vrot.lane.b32.xlu0 %v2216, 32
      %v2304 = vpop.permute.xlu0 %2303
      %2321 = vrot.lane.b32.xlu0 %v2233, 64
      %v2322 = vpop.permute.xlu0 %2321
      %2323 = vrot.lane.b32.xlu0 %v2234, 64
      %v2324 = vpop.permute.xlu0 %2323
      %2325 = vrot.lane.b32.xlu0 %v2235, 64
      %v2326 = vpop.permute.xlu0 %2325
      %2327 = vrot.lane.b32.xlu0 %v2236, 64
      %v2328 = vpop.permute.xlu0 %2327
      %2329 = vrot.lane.b32.xlu0 %v2237, 64
      %v2330 = vpop.permute.xlu0 %2329
      %2331 = vrot.lane.b32.xlu0 %v2238, 64
      %v2332 = vpop.permute.xlu0 %2331
      %2333 = vrot.lane.b32.xlu0 %v2239, 64
      %v2334 = vpop.permute.xlu0 %2333
      %2335 = vrot.lane.b32.xlu0 %v2240, 64
      %v2336 = vpop.permute.xlu0 %2335
      %2353 = vrot.lane.b32.xlu0 %v2241, 96
      %v2354 = vpop.permute.xlu0 %2353
      %2355 = vrot.lane.b32.xlu0 %v2242, 96
      %v2356 = vpop.permute.xlu0 %2355
      %2357 = vrot.lane.b32.xlu0 %v2243, 96
      %v2358 = vpop.permute.xlu0 %2357
      %2359 = vrot.lane.b32.xlu0 %v2244, 96
      %v2360 = vpop.permute.xlu0 %2359
      %2361 = vrot.lane.b32.xlu0 %v2245, 96
      %v2362 = vpop.permute.xlu0 %2361
      %2363 = vrot.lane.b32.xlu0 %v2246, 96
      %v2364 = vpop.permute.xlu0 %2363
      %2365 = vrot.lane.b32.xlu0 %v2247, 96
      %v2366 = vpop.permute.xlu0 %2365
      %2367 = vrot.lane.b32.xlu0 %v2248, 96
      %v2368 = vpop.permute.xlu0 %2367
      %2385 = vrot.lane.b32.xlu0 %v2249, 32
      %v2386 = vpop.permute.xlu0 %2385
      %2387 = vrot.lane.b32.xlu0 %v2250, 32
      %v2388 = vpop.permute.xlu0 %2387
      %2389 = vrot.lane.b32.xlu0 %v2251, 32
      %v2390 = vpop.permute.xlu0 %2389
      %2391 = vrot.lane.b32.xlu0 %v2252, 32
      %v2392 = vpop.permute.xlu0 %2391
      %2393 = vrot.lane.b32.xlu0 %v2253, 32
      %v2394 = vpop.permute.xlu0 %2393
      %2395 = vrot.lane.b32.xlu0 %v2254, 32
      %v2396 = vpop.permute.xlu0 %2395
      %2397 = vrot.lane.b32.xlu0 %v2255, 32
      %v2398 = vpop.permute.xlu0 %2397
      %2399 = vrot.lane.b32.xlu0 %v2256, 32
      %v2400 = vpop.permute.xlu0 %2399
      %2417 = vrot.lane.b32.xlu0 %v2257, 64
      %v2418 = vpop.permute.xlu0 %2417
      %2419 = vrot.lane.b32.xlu0 %v2258, 64
      %v2420 = vpop.permute.xlu0 %2419
      %2421 = vrot.lane.b32.xlu0 %v2259, 64
      %v2422 = vpop.permute.xlu0 %2421
      %2423 = vrot.lane.b32.xlu0 %v2260, 64
      %v2424 = vpop.permute.xlu0 %2423
      %2425 = vrot.lane.b32.xlu0 %v2261, 64
      %v2426 = vpop.permute.xlu0 %2425
      %2427 = vrot.lane.b32.xlu0 %v2262, 64
      %v2428 = vpop.permute.xlu0 %2427
      %2429 = vrot.lane.b32.xlu0 %v2263, 64
      %v2430 = vpop.permute.xlu0 %2429
      %2431 = vrot.lane.b32.xlu0 %v2264, 64
      %v2432 = vpop.permute.xlu0 %2431
      %2449 = vrot.lane.b32.xlu0 %v2265, 96
      %v2450 = vpop.permute.xlu0 %2449
      %2451 = vrot.lane.b32.xlu0 %v2266, 96
      %v2452 = vpop.permute.xlu0 %2451
      %2453 = vrot.lane.b32.xlu0 %v2267, 96
      %v2454 = vpop.permute.xlu0 %2453
      %2455 = vrot.lane.b32.xlu0 %v2268, 96
      %v2456 = vpop.permute.xlu0 %2455
      %2457 = vrot.lane.b32.xlu0 %v2269, 96
      %v2458 = vpop.permute.xlu0 %2457
      %2459 = vrot.lane.b32.xlu0 %v2270, 96
      %v2460 = vpop.permute.xlu0 %2459
      %2461 = vrot.lane.b32.xlu0 %v2271, 96
      %v2462 = vpop.permute.xlu0 %2461
      %2463 = vrot.lane.b32.xlu0 %v2272, 96
      %v2464 = vpop.permute.xlu0 %2463
      %v2473 = vsel %vm1363, %v2201, %v2290
      %v2474 = vsel %vm1363, %v2202, %v2292
      %v2475 = vsel %vm1363, %v2203, %v2294
      %v2476 = vsel %vm1363, %v2204, %v2296
      %v2477 = vsel %vm1363, %v2205, %v2298
      %v2478 = vsel %vm1363, %v2206, %v2300
      %v2479 = vsel %vm1363, %v2207, %v2302
      %v2480 = vsel %vm1363, %v2208, %v2304
      %v2481 = vsel %vm1381, %v2473, %v2322
      %v2482 = vsel %vm1381, %v2474, %v2324
      %v2483 = vsel %vm1381, %v2475, %v2326
      %v2484 = vsel %vm1381, %v2476, %v2328
      %v2485 = vsel %vm1381, %v2477, %v2330
      %v2486 = vsel %vm1381, %v2478, %v2332
      %v2487 = vsel %vm1381, %v2479, %v2334
      %v2488 = vsel %vm1381, %v2480, %v2336
      %v2489 = vsel %vm1399, %v2481, %v2354
      %v2490 = vsel %vm1399, %v2482, %v2356
      %v2491 = vsel %vm1399, %v2483, %v2358
      %v2492 = vsel %vm1399, %v2484, %v2360
      %v2493 = vsel %vm1399, %v2485, %v2362
      %v2494 = vsel %vm1399, %v2486, %v2364
      %v2495 = vsel %vm1399, %v2487, %v2366
      %v2496 = vsel %vm1399, %v2488, %v2368
      %v2497 = vsel %vm1363, %v2177, %v2386
      %v2498 = vsel %vm1363, %v2178, %v2388
      %v2499 = vsel %vm1363, %v2179, %v2390
      %v2500 = vsel %vm1363, %v2180, %v2392
      %v2501 = vsel %vm1363, %v2181, %v2394
      %v2502 = vsel %vm1363, %v2182, %v2396
      %v2503 = vsel %vm1363, %v2183, %v2398
      %v2504 = vsel %vm1363, %v2184, %v2400
      %v2505 = vsel %vm1381, %v2497, %v2418
      %v2506 = vsel %vm1381, %v2498, %v2420
      %v2507 = vsel %vm1381, %v2499, %v2422
      %v2508 = vsel %vm1381, %v2500, %v2424
      %v2509 = vsel %vm1381, %v2501, %v2426
      %v2510 = vsel %vm1381, %v2502, %v2428
      %v2511 = vsel %vm1381, %v2503, %v2430
      %v2512 = vsel %vm1381, %v2504, %v2432
      %v2513 = vsel %vm1399, %v2505, %v2450
      %v2514 = vsel %vm1399, %v2506, %v2452
      %v2515 = vsel %vm1399, %v2507, %v2454
      %v2516 = vsel %vm1399, %v2508, %v2456
      %v2517 = vsel %vm1399, %v2509, %v2458
      %v2518 = vsel %vm1399, %v2510, %v2460
      %v2519 = vsel %vm1399, %v2511, %v2462
      %v2520 = vsel %vm1399, %v2512, %v2464
      %v2521 = vpack.c.bf16 %v2490, %v2489
      %v2522 = vpack.c.bf16 %v2514, %v2513
      %v2523 = vpack.c.bf16 %v2274, %v2273
      %v2524 = vpack.c.bf16 %v2492, %v2491
      %v2525 = vpack.c.bf16 %v2516, %v2515
      %v2526 = vpack.c.bf16 %v2276, %v2275
      %v2527 = vpack.c.bf16 %v2494, %v2493
      %v2528 = vpack.c.bf16 %v2518, %v2517
      %v2529 = vpack.c.bf16 %v2278, %v2277
      %v2530 = vpack.c.bf16 %v2496, %v2495
      %v2531 = vpack.c.bf16 %v2520, %v2519
      %v2532 = vpack.c.bf16 %v2280, %v2279
      %v2533 = vld [vmem:[%s6] sm:$0xf]
      %v2534 = vld [vmem:[%s6 + $0x4] sm:$0xf]
      %v2535 = vld [vmem:[%s6 + $0x8] sm:$0xf]
      %v2536 = vld [vmem:[%s6 + $0xc] sm:$0xf]
      %v2537 = vld [vmem:[%s6 + $0x10] sm:$0xf]
      %v2538 = vld [vmem:[%s6 + $0x14] sm:$0xf]
      %v2539 = vld [vmem:[%s6 + $0x18] sm:$0xf]
      %v2540 = vld [vmem:[%s6 + $0x1c] sm:$0xf]
      %v2541 = vld [vmem:[%s6 + $0x20] sm:$0xf]
      %v2542 = vld [vmem:[%s6 + $0x24] sm:$0xf]
      %v2543 = vld [vmem:[%s6 + $0x28] sm:$0xf]
      %v2544 = vld [vmem:[%s6 + $0x2c] sm:$0xf]
      %v2545 = vld [vmem:[%s6 + $0x30] sm:$0xf]
      %v2546 = vld [vmem:[%s6 + $0x34] sm:$0xf]
      %v2547 = vld [vmem:[%s6 + $0x38] sm:$0xf]
      %v2548 = vld [vmem:[%s6 + $0x3c] sm:$0xf]
      %v2549 = vld [vmem:[%s6 + $0x40] sm:$0xf]
      %v2550 = vld [vmem:[%s6 + $0x44] sm:$0xf]
      %v2551 = vld [vmem:[%s6 + $0x48] sm:$0xf]
      %v2552 = vld [vmem:[%s6 + $0x4c] sm:$0xf]
      %v2553 = vld [vmem:[%s6 + $0x50] sm:$0xf]
      %v2554 = vld [vmem:[%s6 + $0x54] sm:$0xf]
      %v2555 = vld [vmem:[%s6 + $0x58] sm:$0xf]
      %v2556 = vld [vmem:[%s6 + $0x5c] sm:$0xf]
      %v2557 = vld [vmem:[%s6 + $0x60] sm:$0xf]
      %v2558 = vld [vmem:[%s6 + $0x64] sm:$0xf]
      %v2559 = vld [vmem:[%s6 + $0x68] sm:$0xf]
      %v2560 = vld [vmem:[%s6 + $0x6c] sm:$0xf]
      %v2561 = vld [vmem:[%s6 + $0x70] sm:$0xf]
      %v2562 = vld [vmem:[%s6 + $0x74] sm:$0xf]
      %v2563 = vld [vmem:[%s6 + $0x78] sm:$0xf]
      %v2564 = vld [vmem:[%s6 + $0x7c] sm:$0xf]
      %v2565 = vld [vmem:[%s6 + $0x80] sm:$0xf]
      %v2566 = vld [vmem:[%s6 + $0x84] sm:$0xf]
      %v2567 = vld [vmem:[%s6 + $0x88] sm:$0xf]
      %v2568 = vld [vmem:[%s6 + $0x8c] sm:$0xf]
      %v2569 = vld [vmem:[%s7] sm:$0x1]
      %v2571 = vlaneseq
      %v2572 = vshrl.u32 %v2571, 7
      %v2573 = vsub.s32 0, %v2572
      %v2574 = vrot.slane %v2569, %v2573
      %v2612 = vunpack.c.l.b16 %v2533
      %v2613 = vunpack.c.l.b16 %v2534
      %v2614 = vunpack.c.l.b16 %v2535
      %v2615 = vunpack.c.l.b16 %v2536
      %v2616 = vunpack.c.l.b16 %v2537
      %v2617 = vunpack.c.l.b16 %v2538
      %v2618 = vunpack.c.l.b16 %v2539
      %v2619 = vunpack.c.l.b16 %v2540
      %v2620 = vunpack.c.l.b16 %v2541
      %v2621 = vunpack.c.l.b16 %v2542
      %v2622 = vunpack.c.l.b16 %v2543
      %v2623 = vunpack.c.l.b16 %v2544
      %v2624 = vunpack.c.l.b16 %v2545
      %v2625 = vunpack.c.l.b16 %v2546
      %v2626 = vunpack.c.l.b16 %v2547
      %v2627 = vunpack.c.l.b16 %v2548
      %v2628 = vunpack.c.l.b16 %v2549
      %v2629 = vunpack.c.l.b16 %v2550
      %v2630 = vunpack.c.l.b16 %v2551
      %v2631 = vunpack.c.l.b16 %v2552
      %v2632 = vunpack.c.l.b16 %v2553
      %v2633 = vunpack.c.l.b16 %v2554
      %v2634 = vunpack.c.l.b16 %v2555
      %v2635 = vunpack.c.l.b16 %v2556
      %v2636 = vunpack.c.l.b16 %v2557
      %v2637 = vunpack.c.l.b16 %v2558
      %v2638 = vunpack.c.l.b16 %v2559
      %v2639 = vunpack.c.l.b16 %v2560
      %v2640 = vunpack.c.l.b16 %v2561
      %v2641 = vunpack.c.l.b16 %v2562
      %v2642 = vunpack.c.l.b16 %v2563
      %v2643 = vunpack.c.l.b16 %v2564
      %v2644 = vunpack.c.l.b16 %v2565
      %v2645 = vunpack.c.l.b16 %v2566
      %v2646 = vunpack.c.l.b16 %v2567
      %v2647 = vunpack.c.l.b16 %v2568
      %v2648 = vpack.c.b16 %v2613, %v2612
      %v2649 = vpack.c.b16 %v2615, %v2614
      %v2650 = vpack.c.b16 %v2617, %v2616
      %v2651 = vpack.c.b16 %v2619, %v2618
      %v2652 = vpack.c.b16 %v2621, %v2620
      %v2653 = vpack.c.b16 %v2623, %v2622
      %v2654 = vpack.c.b16 %v2625, %v2624
      %v2655 = vpack.c.b16 %v2627, %v2626
      %v2656 = vpack.c.b16 %v2629, %v2628
      %v2657 = vpack.c.b16 %v2631, %v2630
      %v2658 = vpack.c.b16 %v2633, %v2632
      %v2659 = vpack.c.b16 %v2635, %v2634
      %v2660 = vpack.c.b16 %v2637, %v2636
      %v2661 = vpack.c.b16 %v2639, %v2638
      %v2662 = vpack.c.b16 %v2641, %v2640
      %v2663 = vpack.c.b16 %v2643, %v2642
      %v2664 = vpack.c.b16 %v2645, %v2644
      %v2665 = vpack.c.b16 %v2647, %v2646
      %v2685 = vsel %vm1363, %v2523, 0
      %v2688 = vsel %vm1363, %v2526, 0
      %v2691 = vsel %vm1363, %v2529, 0
      %v2694 = vsel %vm1363, %v2532, 0
      %2696 = vmatprep.subr.bf16.mxu0 0
      %2697 = vmatpush1.bf16.msra.mxu0 %v2655
      %2698 = vmatprep.subr.bf16.mxu0 0
      %2699 = vmatpush1.bf16.msra.mxu0 %v2654
      %2700 = vmatprep.subr.bf16.mxu0 0
      %2701 = vmatpush1.bf16.msra.mxu0 %v2653
      %2702 = vmatprep.subr.bf16.mxu0 0
      %2703 = vmatpush1.bf16.msra.mxu0 %v2652
      %2704 = vmatprep.subr.bf16.mxu0 0
      %2705 = vmatpush1.bf16.msra.mxu0 %v2651
      %2706 = vmatprep.subr.bf16.mxu0 0
      %2707 = vmatpush1.bf16.msra.mxu0 %v2650
      %2708 = vmatprep.subr.bf16.mxu0 0
      %2709 = vmatpush1.bf16.msra.mxu0 %v2649
      %2710 = vmatprep.subr.bf16.mxu0 0
      %2711 = vmatpush1.bf16.msra.mxu0 %v2648
      %2712 = vmatprep.subr.bf16.mxu0 0
      %2713 = vmatpush2.bf16.msra.mxu0 %v2663
      %2714 = vmatprep.subr.bf16.mxu0 0
      %2715 = vmatpush2.bf16.msra.mxu0 %v2662
      %2716 = vmatprep.subr.bf16.mxu0 0
      %2717 = vmatpush2.bf16.msra.mxu0 %v2661
      %2718 = vmatprep.subr.bf16.mxu0 0
      %2719 = vmatpush2.bf16.msra.mxu0 %v2660
      %2720 = vmatprep.subr.bf16.mxu0 0
      %2721 = vmatpush2.bf16.msra.mxu0 %v2659
      %2722 = vmatprep.subr.bf16.mxu0 0
      %2723 = vmatpush2.bf16.msra.mxu0 %v2658
      %2724 = vmatprep.subr.bf16.mxu0 0
      %2725 = vmatpush2.bf16.msra.mxu0 %v2657
      %2726 = vmatprep.subr.bf16.mxu0 0
      %2727 = vmatpush2.bf16.msra.mxu0 %v2656
      %2728 = vmatprep.mubr.bf16.mxu0 %v2522
      %2729 = vmatmul.mubr.bf16.gmra.mxu0 %v2521
      %v2730 = vpop.f32.mrf.mxu0
      %v2731 = vadd.f32 %v2574, %v2730
      %v2732 = vpop.f32.mrf.mxu0
      %v2733 = vpop.f32.mrf.mxu0
      %v2734 = vadd.f32 %v2574, %v2733
      %v2735 = vpop.f32.mrf.mxu0
      %2736 = vmatprep.mubr.bf16.mxu0 %v2525
      %2737 = vmatmul.mubr.bf16.gmra.mxu0 %v2524
      %v2738 = vpop.f32.mrf.mxu0
      %v2739 = vadd.f32 %v2574, %v2738
      %v2740 = vpop.f32.mrf.mxu0
      %v2741 = vpop.f32.mrf.mxu0
      %v2742 = vadd.f32 %v2574, %v2741
      %v2743 = vpop.f32.mrf.mxu0
      %2744 = vmatprep.mubr.bf16.mxu0 %v2528
      %2745 = vmatmul.mubr.bf16.gmra.mxu0 %v2527
      %v2746 = vpop.f32.mrf.mxu0
      %v2747 = vadd.f32 %v2574, %v2746
      %v2748 = vpop.f32.mrf.mxu0
      %v2749 = vpop.f32.mrf.mxu0
      %v2750 = vadd.f32 %v2574, %v2749
      %v2751 = vpop.f32.mrf.mxu0
      %2752 = vmatprep.mubr.bf16.mxu0 %v2531
      %2753 = vmatmul.mubr.bf16.gmra.mxu0 %v2530
      %v2754 = vpop.f32.mrf.mxu0
      %v2755 = vadd.f32 %v2574, %v2754
      %v2756 = vpop.f32.mrf.mxu0
      %v2757 = vpop.f32.mrf.mxu0
      %v2758 = vadd.f32 %v2574, %v2757
      %v2759 = vpop.f32.mrf.mxu0
      %2760 = vdwg.mxu0
      %2761 = vmatprep.subr.bf16.mxu0 0
      %2762 = vmatpush1.bf16.msra.mxu0 0
      %2763 = vmatprep.subr.bf16.mxu0 0
      %2764 = vmatpush1.bf16.msra.mxu0 0
      %2765 = vmatprep.subr.bf16.mxu0 0
      %2766 = vmatpush1.bf16.msra.mxu0 0
      %2767 = vmatprep.subr.bf16.mxu0 0
      %2768 = vmatpush1.bf16.msra.mxu0 0
      %2769 = vmatprep.subr.bf16.mxu0 0
      %2770 = vmatpush1.bf16.msra.mxu0 0
      %2771 = vmatprep.subr.bf16.mxu0 0
      %2772 = vmatpush1.bf16.msra.mxu0 0
      %2773 = vmatprep.subr.bf16.mxu0 0
      %2774 = vmatpush1.bf16.msra.mxu0 %v2665
      %2775 = vmatprep.subr.bf16.mxu0 0
      %2776 = vmatpush1.bf16.msra.mxu0 %v2664
      %2777 = vmatprep.subr.bf16.mxu0 0
      %2778 = vmatpush2.bf16.msra.mxu0 0
      %2779 = vmatprep.subr.bf16.mxu0 0
      %2780 = vmatpush2.bf16.msra.mxu0 0
      %2781 = vmatprep.subr.bf16.mxu0 0
      %2782 = vmatpush2.bf16.msra.mxu0 0
      %2783 = vmatprep.subr.bf16.mxu0 0
      %2784 = vmatpush2.bf16.msra.mxu0 0
      %2785 = vmatprep.subr.bf16.mxu0 0
      %2786 = vmatpush2.bf16.msra.mxu0 0
      %2787 = vmatprep.subr.bf16.mxu0 0
      %2788 = vmatpush2.bf16.msra.mxu0 0
      %2789 = vmatprep.subr.bf16.mxu0 0
      %2790 = vmatpush2.bf16.msra.mxu0 0
      %2791 = vmatprep.subr.bf16.mxu0 0
      %2792 = vmatpush2.bf16.msra.mxu0 0
      %2793 = vmatprep.mubr.bf16.mxu0 0
      %2794 = vmatmul.mubr.bf16.gmra.mxu0 %v2685
      %v2795 = vpop.f32.mrf.mxu0
      %v2796 = vadd.f32 %v2731, %v2795
      %v2797 = vpop.f32.mrf.mxu0
      %v2798 = vpop.f32.mrf.mxu0
      %v2799 = vadd.f32 %v2734, %v2798
      %v2800 = vpop.f32.mrf.mxu0
      %2801 = vmatprep.mubr.bf16.mxu0 0
      %2802 = vmatmul.mubr.bf16.gmra.mxu0 %v2688
      %v2803 = vpop.f32.mrf.mxu0
      %v2804 = vadd.f32 %v2739, %v2803
      %v2805 = vpop.f32.mrf.mxu0
      %v2806 = vpop.f32.mrf.mxu0
      %v2807 = vadd.f32 %v2742, %v2806
      %v2808 = vpop.f32.mrf.mxu0
      %2809 = vmatprep.mubr.bf16.mxu0 0
      %2810 = vmatmul.mubr.bf16.gmra.mxu0 %v2691
      %v2811 = vpop.f32.mrf.mxu0
      %v2812 = vadd.f32 %v2747, %v2811
      %v2813 = vpop.f32.mrf.mxu0
      %v2814 = vpop.f32.mrf.mxu0
      %v2815 = vadd.f32 %v2750, %v2814
      %v2816 = vpop.f32.mrf.mxu0
      %2817 = vmatprep.mubr.bf16.mxu0 0
      %2818 = vmatmul.mubr.bf16.gmra.mxu0 %v2694
      %v2819 = vpop.f32.mrf.mxu0
      %v2820 = vadd.f32 %v2755, %v2819
      %v2821 = vpop.f32.mrf.mxu0
      %v2822 = vpop.f32.mrf.mxu0
      %v2823 = vadd.f32 %v2758, %v2822
      %v2824 = vpop.f32.mrf.mxu0
      %2825 = vdwg.mxu0
      %v2826 = vmax.f32 %v2796, 0.0
      %v2827 = vmax.f32 %v2799, 0.0
      %v2828 = vmax.f32 %v2804, 0.0
      %v2829 = vmax.f32 %v2807, 0.0
      %v2830 = vmax.f32 %v2812, 0.0
      %v2831 = vmax.f32 %v2815, 0.0
      %v2832 = vmax.f32 %v2820, 0.0
      %v2833 = vmax.f32 %v2823, 0.0
      %v2834 = vrot.slane %v2826, 7
      %v2835 = vrot.slane %v2827, 7
      %v2836 = vrot.slane %v2828, 7
      %v2837 = vrot.slane %v2829, 7
      %v2838 = vrot.slane %v2830, 7
      %v2839 = vrot.slane %v2831, 7
      %v2840 = vrot.slane %v2832, 7
      %v2841 = vrot.slane %v2833, 7
      %v2842 = vsel %vm720, %v2840, %v2841
      %v2843 = vsel %vm720, %v2839, %v2840
      %v2844 = vsel %vm720, %v2838, %v2839
      %v2845 = vsel %vm720, %v2837, %v2838
      %v2846 = vsel %vm720, %v2836, %v2837
      %v2847 = vsel %vm720, %v2835, %v2836
      %v2848 = vsel %vm720, %v2834, %v2835
      %v2849 = vsel %vm720, %v2841, %v2834
      %v2850 = vmul.f32 %v2842, %v732
      %v2851 = vmul.f32 %v2849, %v737
      %v2852 = vmul.f32 %v2848, %v742
      %v2853 = vmul.f32 %v2847, %v747
      %v2854 = vmul.f32 %v2846, %v752
      %v2855 = vmul.f32 %v2845, %v757
      %v2856 = vmul.f32 %v2844, %v762
      %v2857 = vmul.f32 %v2843, %v767
      %v2858 = vmul.f32 %v2833, %v780
      %v2859 = vmul.f32 %v2826, %v785
      %v2860 = vmul.f32 %v2827, %v790
      %v2861 = vmul.f32 %v2828, %v795
      %v2862 = vmul.f32 %v2829, %v800
      %v2863 = vmul.f32 %v2830, %v805
      %v2864 = vmul.f32 %v2831, %v810
      %v2865 = vmul.f32 %v2832, %v815
      %v2866 = vrot.slane %v2826, 1
      %v2867 = vrot.slane %v2827, 1
      %v2868 = vrot.slane %v2828, 1
      %v2869 = vrot.slane %v2829, 1
      %v2870 = vrot.slane %v2830, 1
      %v2871 = vrot.slane %v2831, 1
      %v2872 = vrot.slane %v2832, 1
      %v2873 = vrot.slane %v2833, 1
      %v2874 = vsel %vm833, %v2872, %v2873
      %v2875 = vsel %vm833, %v2871, %v2872
      %v2876 = vsel %vm833, %v2870, %v2871
      %v2877 = vsel %vm833, %v2869, %v2870
      %v2878 = vsel %vm833, %v2868, %v2869
      %v2879 = vsel %vm833, %v2867, %v2868
      %v2880 = vsel %vm833, %v2866, %v2867
      %v2881 = vsel %vm833, %v2873, %v2866
      %v2882 = vmul.f32 %v2881, %v845
      %v2883 = vmul.f32 %v2880, %v850
      %v2884 = vmul.f32 %v2879, %v855
      %v2885 = vmul.f32 %v2878, %v860
      %v2886 = vmul.f32 %v2877, %v865
      %v2887 = vmul.f32 %v2876, %v870
      %v2888 = vmul.f32 %v2875, %v875
      %v2889 = vmul.f32 %v2874, %v880
      %v2890 = vmul.f32 %v2849, %v893
      %v2891 = vmul.f32 %v2848, %v898
      %v2892 = vmul.f32 %v2847, %v903
      %v2893 = vmul.f32 %v2846, %v908
      %v2894 = vmul.f32 %v2845, %v913
      %v2895 = vmul.f32 %v2844, %v918
      %v2896 = vmul.f32 %v2843, %v923
      %v2897 = vmul.f32 %v2842, %v928
      %v2898 = vmul.f32 %v2880, %v941
      %v2899 = vmul.f32 %v2879, %v946
      %v2900 = vmul.f32 %v2878, %v951
      %v2901 = vmul.f32 %v2877, %v956
      %v2902 = vmul.f32 %v2876, %v961
      %v2903 = vmul.f32 %v2875, %v966
      %v2904 = vmul.f32 %v2874, %v971
      %v2905 = vmul.f32 %v2881, %v976
      %v2906 = vmul.f32 %v2848, %v989
      %v2907 = vmul.f32 %v2847, %v994
      %v2908 = vmul.f32 %v2846, %v999
      %v2909 = vmul.f32 %v2845, %v1004
      %v2910 = vmul.f32 %v2844, %v1009
      %v2911 = vmul.f32 %v2843, %v1014
      %v2912 = vmul.f32 %v2842, %v1019
      %v2913 = vmul.f32 %v2849, %v1024
      %v2914 = vmul.f32 %v2827, %v1037
      %v2915 = vmul.f32 %v2828, %v1042
      %v2916 = vmul.f32 %v2829, %v1047
      %v2917 = vmul.f32 %v2830, %v1052
      %v2918 = vmul.f32 %v2831, %v1057
      %v2919 = vmul.f32 %v2832, %v1062
      %v2920 = vmul.f32 %v2833, %v1067
      %v2921 = vmul.f32 %v2826, %v1072
      %v2922 = vmul.f32 %v2879, %v1085
      %v2923 = vmul.f32 %v2878, %v1090
      %v2924 = vmul.f32 %v2877, %v1095
      %v2925 = vmul.f32 %v2876, %v1100
      %v2926 = vmul.f32 %v2875, %v1105
      %v2927 = vmul.f32 %v2874, %v1110
      %v2928 = vmul.f32 %v2881, %v1115
      %v2929 = vmul.f32 %v2880, %v1120
      %2938 = vrot.lane.b32.xlu0 %v2858, 32
      %v2939 = vpop.permute.xlu0 %2938
      %2940 = vrot.lane.b32.xlu0 %v2859, 32
      %v2941 = vpop.permute.xlu0 %2940
      %2942 = vrot.lane.b32.xlu0 %v2860, 32
      %v2943 = vpop.permute.xlu0 %2942
      %2944 = vrot.lane.b32.xlu0 %v2861, 32
      %v2945 = vpop.permute.xlu0 %2944
      %2946 = vrot.lane.b32.xlu0 %v2862, 32
      %v2947 = vpop.permute.xlu0 %2946
      %2948 = vrot.lane.b32.xlu0 %v2863, 32
      %v2949 = vpop.permute.xlu0 %2948
      %2950 = vrot.lane.b32.xlu0 %v2864, 32
      %v2951 = vpop.permute.xlu0 %2950
      %2952 = vrot.lane.b32.xlu0 %v2865, 32
      %v2953 = vpop.permute.xlu0 %2952
      %2970 = vrot.lane.b32.xlu0 %v2882, 64
      %v2971 = vpop.permute.xlu0 %2970
      %2972 = vrot.lane.b32.xlu0 %v2883, 64
      %v2973 = vpop.permute.xlu0 %2972
      %2974 = vrot.lane.b32.xlu0 %v2884, 64
      %v2975 = vpop.permute.xlu0 %2974
      %2976 = vrot.lane.b32.xlu0 %v2885, 64
      %v2977 = vpop.permute.xlu0 %2976
      %2978 = vrot.lane.b32.xlu0 %v2886, 64
      %v2979 = vpop.permute.xlu0 %2978
      %2980 = vrot.lane.b32.xlu0 %v2887, 64
      %v2981 = vpop.permute.xlu0 %2980
      %2982 = vrot.lane.b32.xlu0 %v2888, 64
      %v2983 = vpop.permute.xlu0 %2982
      %2984 = vrot.lane.b32.xlu0 %v2889, 64
      %v2985 = vpop.permute.xlu0 %2984
      %3002 = vrot.lane.b32.xlu0 %v2890, 96
      %v3003 = vpop.permute.xlu0 %3002
      %3004 = vrot.lane.b32.xlu0 %v2891, 96
      %v3005 = vpop.permute.xlu0 %3004
      %3006 = vrot.lane.b32.xlu0 %v2892, 96
      %v3007 = vpop.permute.xlu0 %3006
      %3008 = vrot.lane.b32.xlu0 %v2893, 96
      %v3009 = vpop.permute.xlu0 %3008
      %3010 = vrot.lane.b32.xlu0 %v2894, 96
      %v3011 = vpop.permute.xlu0 %3010
      %3012 = vrot.lane.b32.xlu0 %v2895, 96
      %v3013 = vpop.permute.xlu0 %3012
      %3014 = vrot.lane.b32.xlu0 %v2896, 96
      %v3015 = vpop.permute.xlu0 %3014
      %3016 = vrot.lane.b32.xlu0 %v2897, 96
      %v3017 = vpop.permute.xlu0 %3016
      %3034 = vrot.lane.b32.xlu0 %v2898, 32
      %v3035 = vpop.permute.xlu0 %3034
      %3036 = vrot.lane.b32.xlu0 %v2899, 32
      %v3037 = vpop.permute.xlu0 %3036
      %3038 = vrot.lane.b32.xlu0 %v2900, 32
      %v3039 = vpop.permute.xlu0 %3038
      %3040 = vrot.lane.b32.xlu0 %v2901, 32
      %v3041 = vpop.permute.xlu0 %3040
      %3042 = vrot.lane.b32.xlu0 %v2902, 32
      %v3043 = vpop.permute.xlu0 %3042
      %3044 = vrot.lane.b32.xlu0 %v2903, 32
      %v3045 = vpop.permute.xlu0 %3044
      %3046 = vrot.lane.b32.xlu0 %v2904, 32
      %v3047 = vpop.permute.xlu0 %3046
      %3048 = vrot.lane.b32.xlu0 %v2905, 32
      %v3049 = vpop.permute.xlu0 %3048
      %3066 = vrot.lane.b32.xlu0 %v2906, 64
      %v3067 = vpop.permute.xlu0 %3066
      %3068 = vrot.lane.b32.xlu0 %v2907, 64
      %v3069 = vpop.permute.xlu0 %3068
      %3070 = vrot.lane.b32.xlu0 %v2908, 64
      %v3071 = vpop.permute.xlu0 %3070
      %3072 = vrot.lane.b32.xlu0 %v2909, 64
      %v3073 = vpop.permute.xlu0 %3072
      %3074 = vrot.lane.b32.xlu0 %v2910, 64
      %v3075 = vpop.permute.xlu0 %3074
      %3076 = vrot.lane.b32.xlu0 %v2911, 64
      %v3077 = vpop.permute.xlu0 %3076
      %3078 = vrot.lane.b32.xlu0 %v2912, 64
      %v3079 = vpop.permute.xlu0 %3078
      %3080 = vrot.lane.b32.xlu0 %v2913, 64
      %v3081 = vpop.permute.xlu0 %3080
      %3098 = vrot.lane.b32.xlu0 %v2914, 96
      %v3099 = vpop.permute.xlu0 %3098
      %3100 = vrot.lane.b32.xlu0 %v2915, 96
      %v3101 = vpop.permute.xlu0 %3100
      %3102 = vrot.lane.b32.xlu0 %v2916, 96
      %v3103 = vpop.permute.xlu0 %3102
      %3104 = vrot.lane.b32.xlu0 %v2917, 96
      %v3105 = vpop.permute.xlu0 %3104
      %3106 = vrot.lane.b32.xlu0 %v2918, 96
      %v3107 = vpop.permute.xlu0 %3106
      %3108 = vrot.lane.b32.xlu0 %v2919, 96
      %v3109 = vpop.permute.xlu0 %3108
      %3110 = vrot.lane.b32.xlu0 %v2920, 96
      %v3111 = vpop.permute.xlu0 %3110
      %3112 = vrot.lane.b32.xlu0 %v2921, 96
      %v3113 = vpop.permute.xlu0 %3112
      %v3122 = vsel %vm1363, %v2850, %v2939
      %v3123 = vsel %vm1363, %v2851, %v2941
      %v3124 = vsel %vm1363, %v2852, %v2943
      %v3125 = vsel %vm1363, %v2853, %v2945
      %v3126 = vsel %vm1363, %v2854, %v2947
      %v3127 = vsel %vm1363, %v2855, %v2949
      %v3128 = vsel %vm1363, %v2856, %v2951
      %v3129 = vsel %vm1363, %v2857, %v2953
      %v3130 = vsel %vm1381, %v3122, %v2971
      %v3131 = vsel %vm1381, %v3123, %v2973
      %v3132 = vsel %vm1381, %v3124, %v2975
      %v3133 = vsel %vm1381, %v3125, %v2977
      %v3134 = vsel %vm1381, %v3126, %v2979
      %v3135 = vsel %vm1381, %v3127, %v2981
      %v3136 = vsel %vm1381, %v3128, %v2983
      %v3137 = vsel %vm1381, %v3129, %v2985
      %v3138 = vsel %vm1399, %v3130, %v3003
      %v3139 = vsel %vm1399, %v3131, %v3005
      %v3140 = vsel %vm1399, %v3132, %v3007
      %v3141 = vsel %vm1399, %v3133, %v3009
      %v3142 = vsel %vm1399, %v3134, %v3011
      %v3143 = vsel %vm1399, %v3135, %v3013
      %v3144 = vsel %vm1399, %v3136, %v3015
      %v3145 = vsel %vm1399, %v3137, %v3017
      %v3146 = vsel %vm1363, %v2826, %v3035
      %v3147 = vsel %vm1363, %v2827, %v3037
      %v3148 = vsel %vm1363, %v2828, %v3039
      %v3149 = vsel %vm1363, %v2829, %v3041
      %v3150 = vsel %vm1363, %v2830, %v3043
      %v3151 = vsel %vm1363, %v2831, %v3045
      %v3152 = vsel %vm1363, %v2832, %v3047
      %v3153 = vsel %vm1363, %v2833, %v3049
      %v3154 = vsel %vm1381, %v3146, %v3067
      %v3155 = vsel %vm1381, %v3147, %v3069
      %v3156 = vsel %vm1381, %v3148, %v3071
      %v3157 = vsel %vm1381, %v3149, %v3073
      %v3158 = vsel %vm1381, %v3150, %v3075
      %v3159 = vsel %vm1381, %v3151, %v3077
      %v3160 = vsel %vm1381, %v3152, %v3079
      %v3161 = vsel %vm1381, %v3153, %v3081
      %v3162 = vsel %vm1399, %v3154, %v3099
      %v3163 = vsel %vm1399, %v3155, %v3101
      %v3164 = vsel %vm1399, %v3156, %v3103
      %v3165 = vsel %vm1399, %v3157, %v3105
      %v3166 = vsel %vm1399, %v3158, %v3107
      %v3167 = vsel %vm1399, %v3159, %v3109
      %v3168 = vsel %vm1399, %v3160, %v3111
      %v3169 = vsel %vm1399, %v3161, %v3113
      %v3170 = vpack.c.bf16 %v3139, %v3138
      %v3171 = vpack.c.bf16 %v3163, %v3162
      %v3172 = vpack.c.bf16 %v2923, %v2922
      %v3173 = vpack.c.bf16 %v3141, %v3140
      %v3174 = vpack.c.bf16 %v3165, %v3164
      %v3175 = vpack.c.bf16 %v2925, %v2924
      %v3176 = vpack.c.bf16 %v3143, %v3142
      %v3177 = vpack.c.bf16 %v3167, %v3166
      %v3178 = vpack.c.bf16 %v2927, %v2926
      %v3179 = vpack.c.bf16 %v3145, %v3144
      %v3180 = vpack.c.bf16 %v3169, %v3168
      %v3181 = vpack.c.bf16 %v2929, %v2928
      %v3182 = vld [vmem:[%s8] sm:$0xf]
      %v3183 = vld [vmem:[%s8 + $0x4] sm:$0xf]
      %v3184 = vld [vmem:[%s8 + $0x8] sm:$0xf]
      %v3185 = vld [vmem:[%s8 + $0xc] sm:$0xf]
      %v3186 = vld [vmem:[%s8 + $0x10] sm:$0xf]
      %v3187 = vld [vmem:[%s8 + $0x14] sm:$0xf]
      %v3188 = vld [vmem:[%s8 + $0x18] sm:$0xf]
      %v3189 = vld [vmem:[%s8 + $0x1c] sm:$0xf]
      %v3190 = vld [vmem:[%s8 + $0x20] sm:$0xf]
      %v3191 = vld [vmem:[%s8 + $0x24] sm:$0xf]
      %v3192 = vld [vmem:[%s8 + $0x28] sm:$0xf]
      %v3193 = vld [vmem:[%s8 + $0x2c] sm:$0xf]
      %v3194 = vld [vmem:[%s8 + $0x30] sm:$0xf]
      %v3195 = vld [vmem:[%s8 + $0x34] sm:$0xf]
      %v3196 = vld [vmem:[%s8 + $0x38] sm:$0xf]
      %v3197 = vld [vmem:[%s8 + $0x3c] sm:$0xf]
      %v3198 = vld [vmem:[%s8 + $0x40] sm:$0xf]
      %v3199 = vld [vmem:[%s8 + $0x44] sm:$0xf]
      %v3200 = vld [vmem:[%s8 + $0x48] sm:$0xf]
      %v3201 = vld [vmem:[%s8 + $0x4c] sm:$0xf]
      %v3202 = vld [vmem:[%s8 + $0x50] sm:$0xf]
      %v3203 = vld [vmem:[%s8 + $0x54] sm:$0xf]
      %v3204 = vld [vmem:[%s8 + $0x58] sm:$0xf]
      %v3205 = vld [vmem:[%s8 + $0x5c] sm:$0xf]
      %v3206 = vld [vmem:[%s8 + $0x60] sm:$0xf]
      %v3207 = vld [vmem:[%s8 + $0x64] sm:$0xf]
      %v3208 = vld [vmem:[%s8 + $0x68] sm:$0xf]
      %v3209 = vld [vmem:[%s8 + $0x6c] sm:$0xf]
      %v3210 = vld [vmem:[%s8 + $0x70] sm:$0xf]
      %v3211 = vld [vmem:[%s8 + $0x74] sm:$0xf]
      %v3212 = vld [vmem:[%s8 + $0x78] sm:$0xf]
      %v3213 = vld [vmem:[%s8 + $0x7c] sm:$0xf]
      %v3214 = vld [vmem:[%s8 + $0x80] sm:$0xf]
      %v3215 = vld [vmem:[%s8 + $0x84] sm:$0xf]
      %v3216 = vld [vmem:[%s8 + $0x88] sm:$0xf]
      %v3217 = vld [vmem:[%s8 + $0x8c] sm:$0xf]
      %v3218 = vld [vmem:[%s9] sm:$0x1]
      %v3220 = vlaneseq
      %v3221 = vshrl.u32 %v3220, 7
      %v3222 = vsub.s32 0, %v3221
      %v3223 = vrot.slane %v3218, %v3222
      %v3261 = vunpack.c.l.b16 %v3182
      %v3262 = vunpack.c.l.b16 %v3183
      %v3263 = vunpack.c.l.b16 %v3184
      %v3264 = vunpack.c.l.b16 %v3185
      %v3265 = vunpack.c.l.b16 %v3186
      %v3266 = vunpack.c.l.b16 %v3187
      %v3267 = vunpack.c.l.b16 %v3188
      %v3268 = vunpack.c.l.b16 %v3189
      %v3269 = vunpack.c.l.b16 %v3190
      %v3270 = vunpack.c.l.b16 %v3191
      %v3271 = vunpack.c.l.b16 %v3192
      %v3272 = vunpack.c.l.b16 %v3193
      %v3273 = vunpack.c.l.b16 %v3194
      %v3274 = vunpack.c.l.b16 %v3195
      %v3275 = vunpack.c.l.b16 %v3196
      %v3276 = vunpack.c.l.b16 %v3197
      %v3277 = vunpack.c.l.b16 %v3198
      %v3278 = vunpack.c.l.b16 %v3199
      %v3279 = vunpack.c.l.b16 %v3200
      %v3280 = vunpack.c.l.b16 %v3201
      %v3281 = vunpack.c.l.b16 %v3202
      %v3282 = vunpack.c.l.b16 %v3203
      %v3283 = vunpack.c.l.b16 %v3204
      %v3284 = vunpack.c.l.b16 %v3205
      %v3285 = vunpack.c.l.b16 %v3206
      %v3286 = vunpack.c.l.b16 %v3207
      %v3287 = vunpack.c.l.b16 %v3208
      %v3288 = vunpack.c.l.b16 %v3209
      %v3289 = vunpack.c.l.b16 %v3210
      %v3290 = vunpack.c.l.b16 %v3211
      %v3291 = vunpack.c.l.b16 %v3212
      %v3292 = vunpack.c.l.b16 %v3213
      %v3293 = vunpack.c.l.b16 %v3214
      %v3294 = vunpack.c.l.b16 %v3215
      %v3295 = vunpack.c.l.b16 %v3216
      %v3296 = vunpack.c.l.b16 %v3217
      %v3297 = vpack.c.b16 %v3262, %v3261
      %v3298 = vpack.c.b16 %v3264, %v3263
      %v3299 = vpack.c.b16 %v3266, %v3265
      %v3300 = vpack.c.b16 %v3268, %v3267
      %v3301 = vpack.c.b16 %v3270, %v3269
      %v3302 = vpack.c.b16 %v3272, %v3271
      %v3303 = vpack.c.b16 %v3274, %v3273
      %v3304 = vpack.c.b16 %v3276, %v3275
      %v3305 = vpack.c.b16 %v3278, %v3277
      %v3306 = vpack.c.b16 %v3280, %v3279
      %v3307 = vpack.c.b16 %v3282, %v3281
      %v3308 = vpack.c.b16 %v3284, %v3283
      %v3309 = vpack.c.b16 %v3286, %v3285
      %v3310 = vpack.c.b16 %v3288, %v3287
      %v3311 = vpack.c.b16 %v3290, %v3289
      %v3312 = vpack.c.b16 %v3292, %v3291
      %v3313 = vpack.c.b16 %v3294, %v3293
      %v3314 = vpack.c.b16 %v3296, %v3295
      %v3334 = vsel %vm1363, %v3172, 0
      %v3337 = vsel %vm1363, %v3175, 0
      %v3340 = vsel %vm1363, %v3178, 0
      %v3343 = vsel %vm1363, %v3181, 0
      %3345 = vmatprep.subr.bf16.mxu0 0
      %3346 = vmatpush1.bf16.msra.mxu0 %v3304
      %3347 = vmatprep.subr.bf16.mxu0 0
      %3348 = vmatpush1.bf16.msra.mxu0 %v3303
      %3349 = vmatprep.subr.bf16.mxu0 0
      %3350 = vmatpush1.bf16.msra.mxu0 %v3302
      %3351 = vmatprep.subr.bf16.mxu0 0
      %3352 = vmatpush1.bf16.msra.mxu0 %v3301
      %3353 = vmatprep.subr.bf16.mxu0 0
      %3354 = vmatpush1.bf16.msra.mxu0 %v3300
      %3355 = vmatprep.subr.bf16.mxu0 0
      %3356 = vmatpush1.bf16.msra.mxu0 %v3299
      %3357 = vmatprep.subr.bf16.mxu0 0
      %3358 = vmatpush1.bf16.msra.mxu0 %v3298
      %3359 = vmatprep.subr.bf16.mxu0 0
      %3360 = vmatpush1.bf16.msra.mxu0 %v3297
      %3361 = vmatprep.subr.bf16.mxu0 0
      %3362 = vmatpush2.bf16.msra.mxu0 %v3312
      %3363 = vmatprep.subr.bf16.mxu0 0
      %3364 = vmatpush2.bf16.msra.mxu0 %v3311
      %3365 = vmatprep.subr.bf16.mxu0 0
      %3366 = vmatpush2.bf16.msra.mxu0 %v3310
      %3367 = vmatprep.subr.bf16.mxu0 0
      %3368 = vmatpush2.bf16.msra.mxu0 %v3309
      %3369 = vmatprep.subr.bf16.mxu0 0
      %3370 = vmatpush2.bf16.msra.mxu0 %v3308
      %3371 = vmatprep.subr.bf16.mxu0 0
      %3372 = vmatpush2.bf16.msra.mxu0 %v3307
      %3373 = vmatprep.subr.bf16.mxu0 0
      %3374 = vmatpush2.bf16.msra.mxu0 %v3306
      %3375 = vmatprep.subr.bf16.mxu0 0
      %3376 = vmatpush2.bf16.msra.mxu0 %v3305
      %3377 = vmatprep.mubr.bf16.mxu0 %v3171
      %3378 = vmatmul.mubr.bf16.gmra.mxu0 %v3170
      %v3379 = vpop.f32.mrf.mxu0
      %v3380 = vadd.f32 %v3223, %v3379
      %v3381 = vpop.f32.mrf.mxu0
      %v3382 = vpop.f32.mrf.mxu0
      %v3383 = vadd.f32 %v3223, %v3382
      %v3384 = vpop.f32.mrf.mxu0
      %3385 = vmatprep.mubr.bf16.mxu0 %v3174
      %3386 = vmatmul.mubr.bf16.gmra.mxu0 %v3173
      %v3387 = vpop.f32.mrf.mxu0
      %v3388 = vadd.f32 %v3223, %v3387
      %v3389 = vpop.f32.mrf.mxu0
      %v3390 = vpop.f32.mrf.mxu0
      %v3391 = vadd.f32 %v3223, %v3390
      %v3392 = vpop.f32.mrf.mxu0
      %3393 = vmatprep.mubr.bf16.mxu0 %v3177
      %3394 = vmatmul.mubr.bf16.gmra.mxu0 %v3176
      %v3395 = vpop.f32.mrf.mxu0
      %v3396 = vadd.f32 %v3223, %v3395
      %v3397 = vpop.f32.mrf.mxu0
      %v3398 = vpop.f32.mrf.mxu0
      %v3399 = vadd.f32 %v3223, %v3398
      %v3400 = vpop.f32.mrf.mxu0
      %3401 = vmatprep.mubr.bf16.mxu0 %v3180
      %3402 = vmatmul.mubr.bf16.gmra.mxu0 %v3179
      %v3403 = vpop.f32.mrf.mxu0
      %v3404 = vadd.f32 %v3223, %v3403
      %v3405 = vpop.f32.mrf.mxu0
      %v3406 = vpop.f32.mrf.mxu0
      %v3407 = vadd.f32 %v3223, %v3406
      %v3408 = vpop.f32.mrf.mxu0
      %3409 = vdwg.mxu0
      %3410 = vmatprep.subr.bf16.mxu0 0
      %3411 = vmatpush1.bf16.msra.mxu0 0
      %3412 = vmatprep.subr.bf16.mxu0 0
      %3413 = vmatpush1.bf16.msra.mxu0 0
      %3414 = vmatprep.subr.bf16.mxu0 0
      %3415 = vmatpush1.bf16.msra.mxu0 0
      %3416 = vmatprep.subr.bf16.mxu0 0
      %3417 = vmatpush1.bf16.msra.mxu0 0
      %3418 = vmatprep.subr.bf16.mxu0 0
      %3419 = vmatpush1.bf16.msra.mxu0 0
      %3420 = vmatprep.subr.bf16.mxu0 0
      %3421 = vmatpush1.bf16.msra.mxu0 0
      %3422 = vmatprep.subr.bf16.mxu0 0
      %3423 = vmatpush1.bf16.msra.mxu0 %v3314
      %3424 = vmatprep.subr.bf16.mxu0 0
      %3425 = vmatpush1.bf16.msra.mxu0 %v3313
      %3426 = vmatprep.subr.bf16.mxu0 0
      %3427 = vmatpush2.bf16.msra.mxu0 0
      %3428 = vmatprep.subr.bf16.mxu0 0
      %3429 = vmatpush2.bf16.msra.mxu0 0
      %3430 = vmatprep.subr.bf16.mxu0 0
      %3431 = vmatpush2.bf16.msra.mxu0 0
      %3432 = vmatprep.subr.bf16.mxu0 0
      %3433 = vmatpush2.bf16.msra.mxu0 0
      %3434 = vmatprep.subr.bf16.mxu0 0
      %3435 = vmatpush2.bf16.msra.mxu0 0
      %3436 = vmatprep.subr.bf16.mxu0 0
      %3437 = vmatpush2.bf16.msra.mxu0 0
      %3438 = vmatprep.subr.bf16.mxu0 0
      %3439 = vmatpush2.bf16.msra.mxu0 0
      %3440 = vmatprep.subr.bf16.mxu0 0
      %3441 = vmatpush2.bf16.msra.mxu0 0
      %3442 = vmatprep.mubr.bf16.mxu0 0
      %3443 = vmatmul.mubr.bf16.gmra.mxu0 %v3334
      %v3444 = vpop.f32.mrf.mxu0
      %v3445 = vadd.f32 %v3380, %v3444
      %v3446 = vpop.f32.mrf.mxu0
      %v3447 = vpop.f32.mrf.mxu0
      %v3448 = vadd.f32 %v3383, %v3447
      %v3449 = vpop.f32.mrf.mxu0
      %3450 = vmatprep.mubr.bf16.mxu0 0
      %3451 = vmatmul.mubr.bf16.gmra.mxu0 %v3337
      %v3452 = vpop.f32.mrf.mxu0
      %v3453 = vadd.f32 %v3388, %v3452
      %v3454 = vpop.f32.mrf.mxu0
      %v3455 = vpop.f32.mrf.mxu0
      %v3456 = vadd.f32 %v3391, %v3455
      %v3457 = vpop.f32.mrf.mxu0
      %3458 = vmatprep.mubr.bf16.mxu0 0
      %3459 = vmatmul.mubr.bf16.gmra.mxu0 %v3340
      %v3460 = vpop.f32.mrf.mxu0
      %v3461 = vadd.f32 %v3396, %v3460
      %v3462 = vpop.f32.mrf.mxu0
      %v3463 = vpop.f32.mrf.mxu0
      %v3464 = vadd.f32 %v3399, %v3463
      %v3465 = vpop.f32.mrf.mxu0
      %3466 = vmatprep.mubr.bf16.mxu0 0
      %3467 = vmatmul.mubr.bf16.gmra.mxu0 %v3343
      %v3468 = vpop.f32.mrf.mxu0
      %v3469 = vadd.f32 %v3404, %v3468
      %v3470 = vpop.f32.mrf.mxu0
      %v3471 = vpop.f32.mrf.mxu0
      %v3472 = vadd.f32 %v3407, %v3471
      %v3473 = vpop.f32.mrf.mxu0
      %3474 = vdwg.mxu0
      %v3475 = vadd.f32 %v3445, %v2177
      %v3476 = vadd.f32 %v3448, %v2178
      %v3477 = vadd.f32 %v3453, %v2179
      %v3478 = vadd.f32 %v3456, %v2180
      %v3479 = vadd.f32 %v3461, %v2181
      %v3480 = vadd.f32 %v3464, %v2182
      %v3481 = vadd.f32 %v3469, %v2183
      %v3482 = vadd.f32 %v3472, %v2184
      %v3483 = vmax.f32 %v3475, 0.0
      %v3484 = vmax.f32 %v3476, 0.0
      %v3485 = vmax.f32 %v3477, 0.0
      %v3486 = vmax.f32 %v3478, 0.0
      %v3487 = vmax.f32 %v3479, 0.0
      %v3488 = vmax.f32 %v3480, 0.0
      %v3489 = vmax.f32 %v3481, 0.0
      %v3490 = vmax.f32 %v3482, 0.0
      %3499 = vrot.lane.b32.xlu0 %v3483, 32
      %v3500 = vpop.permute.xlu0 %3499
      %3501 = vrot.lane.b32.xlu0 %v3484, 32
      %v3502 = vpop.permute.xlu0 %3501
      %3503 = vrot.lane.b32.xlu0 %v3485, 32
      %v3504 = vpop.permute.xlu0 %3503
      %3505 = vrot.lane.b32.xlu0 %v3486, 32
      %v3506 = vpop.permute.xlu0 %3505
      %3507 = vrot.lane.b32.xlu0 %v3487, 32
      %v3508 = vpop.permute.xlu0 %3507
      %3509 = vrot.lane.b32.xlu0 %v3488, 32
      %v3510 = vpop.permute.xlu0 %3509
      %3511 = vrot.lane.b32.xlu0 %v3489, 32
      %v3512 = vpop.permute.xlu0 %3511
      %3513 = vrot.lane.b32.xlu0 %v3490, 32
      %v3514 = vpop.permute.xlu0 %3513
      %v3523 = vsel %vm1363, %v2177, %v3500
      %v3524 = vsel %vm1363, %v2178, %v3502
      %v3525 = vsel %vm1363, %v2179, %v3504
      %v3526 = vsel %vm1363, %v2180, %v3506
      %v3527 = vsel %vm1363, %v2181, %v3508
      %v3528 = vsel %vm1363, %v2182, %v3510
      %v3529 = vsel %vm1363, %v2183, %v3512
      %v3530 = vsel %vm1363, %v2184, %v3514
      %v3531 = vrot.slane %v3523, 7
      %v3532 = vrot.slane %v3524, 7
      %v3533 = vrot.slane %v3525, 7
      %v3534 = vrot.slane %v3526, 7
      %v3535 = vrot.slane %v3527, 7
      %v3536 = vrot.slane %v3528, 7
      %v3537 = vrot.slane %v3529, 7
      %v3538 = vrot.slane %v3530, 7
      %v3539 = vsel %vm720, %v3537, %v3538
      %v3540 = vsel %vm720, %v3536, %v3537
      %v3541 = vsel %vm720, %v3535, %v3536
      %v3542 = vsel %vm720, %v3534, %v3535
      %v3543 = vsel %vm720, %v3533, %v3534
      %v3544 = vsel %vm720, %v3532, %v3533
      %v3545 = vsel %vm720, %v3531, %v3532
      %v3546 = vsel %vm720, %v3538, %v3531
      %v3547 = vmul.f32 %v3539, %v732
      %v3548 = vmul.f32 %v3546, %v737
      %v3549 = vmul.f32 %v3545, %v742
      %v3550 = vmul.f32 %v3544, %v747
      %v3551 = vmul.f32 %v3543, %v752
      %v3552 = vmul.f32 %v3542, %v757
      %v3553 = vmul.f32 %v3541, %v762
      %v3554 = vmul.f32 %v3540, %v767
      %v3555 = vmul.f32 %v3530, %v780
      %v3556 = vmul.f32 %v3523, %v785
      %v3557 = vmul.f32 %v3524, %v790
      %v3558 = vmul.f32 %v3525, %v795
      %v3559 = vmul.f32 %v3526, %v800
      %v3560 = vmul.f32 %v3527, %v805
      %v3561 = vmul.f32 %v3528, %v810
      %v3562 = vmul.f32 %v3529, %v815
      %v3563 = vrot.slane %v3523, 1
      %v3564 = vrot.slane %v3524, 1
      %v3565 = vrot.slane %v3525, 1
      %v3566 = vrot.slane %v3526, 1
      %v3567 = vrot.slane %v3527, 1
      %v3568 = vrot.slane %v3528, 1
      %v3569 = vrot.slane %v3529, 1
      %v3570 = vrot.slane %v3530, 1
      %v3571 = vsel %vm833, %v3569, %v3570
      %v3572 = vsel %vm833, %v3568, %v3569
      %v3573 = vsel %vm833, %v3567, %v3568
      %v3574 = vsel %vm833, %v3566, %v3567
      %v3575 = vsel %vm833, %v3565, %v3566
      %v3576 = vsel %vm833, %v3564, %v3565
      %v3577 = vsel %vm833, %v3563, %v3564
      %v3578 = vsel %vm833, %v3570, %v3563
      %v3579 = vmul.f32 %v3578, %v845
      %v3580 = vmul.f32 %v3577, %v850
      %v3581 = vmul.f32 %v3576, %v855
      %v3582 = vmul.f32 %v3575, %v860
      %v3583 = vmul.f32 %v3574, %v865
      %v3584 = vmul.f32 %v3573, %v870
      %v3585 = vmul.f32 %v3572, %v875
      %v3586 = vmul.f32 %v3571, %v880
      %v3587 = vmul.f32 %v3546, %v893
      %v3588 = vmul.f32 %v3545, %v898
      %v3589 = vmul.f32 %v3544, %v903
      %v3590 = vmul.f32 %v3543, %v908
      %v3591 = vmul.f32 %v3542, %v913
      %v3592 = vmul.f32 %v3541, %v918
      %v3593 = vmul.f32 %v3540, %v923
      %v3594 = vmul.f32 %v3539, %v928
      %v3595 = vmul.f32 %v3577, %v941
      %v3596 = vmul.f32 %v3576, %v946
      %v3597 = vmul.f32 %v3575, %v951
      %v3598 = vmul.f32 %v3574, %v956
      %v3599 = vmul.f32 %v3573, %v961
      %v3600 = vmul.f32 %v3572, %v966
      %v3601 = vmul.f32 %v3571, %v971
      %v3602 = vmul.f32 %v3578, %v976
      %v3603 = vmul.f32 %v3545, %v989
      %v3604 = vmul.f32 %v3544, %v994
      %v3605 = vmul.f32 %v3543, %v999
      %v3606 = vmul.f32 %v3542, %v1004
      %v3607 = vmul.f32 %v3541, %v1009
      %v3608 = vmul.f32 %v3540, %v1014
      %v3609 = vmul.f32 %v3539, %v1019
      %v3610 = vmul.f32 %v3546, %v1024
      %v3611 = vmul.f32 %v3524, %v1037
      %v3612 = vmul.f32 %v3525, %v1042
      %v3613 = vmul.f32 %v3526, %v1047
      %v3614 = vmul.f32 %v3527, %v1052
      %v3615 = vmul.f32 %v3528, %v1057
      %v3616 = vmul.f32 %v3529, %v1062
      %v3617 = vmul.f32 %v3530, %v1067
      %v3618 = vmul.f32 %v3523, %v1072
      %v3619 = vmul.f32 %v3576, %v1085
      %v3620 = vmul.f32 %v3575, %v1090
      %v3621 = vmul.f32 %v3574, %v1095
      %v3622 = vmul.f32 %v3573, %v1100
      %v3623 = vmul.f32 %v3572, %v1105
      %v3624 = vmul.f32 %v3571, %v1110
      %v3625 = vmul.f32 %v3578, %v1115
      %v3626 = vmul.f32 %v3577, %v1120
      %3635 = vrot.lane.b32.xlu0 %v3555, 64
      %v3636 = vpop.permute.xlu0 %3635
      %3637 = vrot.lane.b32.xlu0 %v3556, 64
      %v3638 = vpop.permute.xlu0 %3637
      %3639 = vrot.lane.b32.xlu0 %v3557, 64
      %v3640 = vpop.permute.xlu0 %3639
      %3641 = vrot.lane.b32.xlu0 %v3558, 64
      %v3642 = vpop.permute.xlu0 %3641
      %3643 = vrot.lane.b32.xlu0 %v3559, 64
      %v3644 = vpop.permute.xlu0 %3643
      %3645 = vrot.lane.b32.xlu0 %v3560, 64
      %v3646 = vpop.permute.xlu0 %3645
      %3647 = vrot.lane.b32.xlu0 %v3561, 64
      %v3648 = vpop.permute.xlu0 %3647
      %3649 = vrot.lane.b32.xlu0 %v3562, 64
      %v3650 = vpop.permute.xlu0 %3649
      %3667 = vrot.lane.b32.xlu0 %v3587, 64
      %v3668 = vpop.permute.xlu0 %3667
      %3669 = vrot.lane.b32.xlu0 %v3588, 64
      %v3670 = vpop.permute.xlu0 %3669
      %3671 = vrot.lane.b32.xlu0 %v3589, 64
      %v3672 = vpop.permute.xlu0 %3671
      %3673 = vrot.lane.b32.xlu0 %v3590, 64
      %v3674 = vpop.permute.xlu0 %3673
      %3675 = vrot.lane.b32.xlu0 %v3591, 64
      %v3676 = vpop.permute.xlu0 %3675
      %3677 = vrot.lane.b32.xlu0 %v3592, 64
      %v3678 = vpop.permute.xlu0 %3677
      %3679 = vrot.lane.b32.xlu0 %v3593, 64
      %v3680 = vpop.permute.xlu0 %3679
      %3681 = vrot.lane.b32.xlu0 %v3594, 64
      %v3682 = vpop.permute.xlu0 %3681
      %3699 = vrot.lane.b32.xlu0 %v3595, 64
      %v3700 = vpop.permute.xlu0 %3699
      %3701 = vrot.lane.b32.xlu0 %v3596, 64
      %v3702 = vpop.permute.xlu0 %3701
      %3703 = vrot.lane.b32.xlu0 %v3597, 64
      %v3704 = vpop.permute.xlu0 %3703
      %3705 = vrot.lane.b32.xlu0 %v3598, 64
      %v3706 = vpop.permute.xlu0 %3705
      %3707 = vrot.lane.b32.xlu0 %v3599, 64
      %v3708 = vpop.permute.xlu0 %3707
      %3709 = vrot.lane.b32.xlu0 %v3600, 64
      %v3710 = vpop.permute.xlu0 %3709
      %3711 = vrot.lane.b32.xlu0 %v3601, 64
      %v3712 = vpop.permute.xlu0 %3711
      %3713 = vrot.lane.b32.xlu0 %v3602, 64
      %v3714 = vpop.permute.xlu0 %3713
      %3731 = vrot.lane.b32.xlu0 %v3611, 64
      %v3732 = vpop.permute.xlu0 %3731
      %3733 = vrot.lane.b32.xlu0 %v3612, 64
      %v3734 = vpop.permute.xlu0 %3733
      %3735 = vrot.lane.b32.xlu0 %v3613, 64
      %v3736 = vpop.permute.xlu0 %3735
      %3737 = vrot.lane.b32.xlu0 %v3614, 64
      %v3738 = vpop.permute.xlu0 %3737
      %3739 = vrot.lane.b32.xlu0 %v3615, 64
      %v3740 = vpop.permute.xlu0 %3739
      %3741 = vrot.lane.b32.xlu0 %v3616, 64
      %v3742 = vpop.permute.xlu0 %3741
      %3743 = vrot.lane.b32.xlu0 %v3617, 64
      %v3744 = vpop.permute.xlu0 %3743
      %3745 = vrot.lane.b32.xlu0 %v3618, 64
      %v3746 = vpop.permute.xlu0 %3745
      %v3755 = vsel %vm1381, %v3547, %v3636
      %v3756 = vsel %vm1381, %v3548, %v3638
      %v3757 = vsel %vm1381, %v3549, %v3640
      %v3758 = vsel %vm1381, %v3550, %v3642
      %v3759 = vsel %vm1381, %v3551, %v3644
      %v3760 = vsel %vm1381, %v3552, %v3646
      %v3761 = vsel %vm1381, %v3553, %v3648
      %v3762 = vsel %vm1381, %v3554, %v3650
      %v3763 = vsel %vm1381, %v3579, %v3668
      %v3764 = vsel %vm1381, %v3580, %v3670
      %v3765 = vsel %vm1381, %v3581, %v3672
      %v3766 = vsel %vm1381, %v3582, %v3674
      %v3767 = vsel %vm1381, %v3583, %v3676
      %v3768 = vsel %vm1381, %v3584, %v3678
      %v3769 = vsel %vm1381, %v3585, %v3680
      %v3770 = vsel %vm1381, %v3586, %v3682
      %v3771 = vsel %vm1381, %v3523, %v3700
      %v3772 = vsel %vm1381, %v3524, %v3702
      %v3773 = vsel %vm1381, %v3525, %v3704
      %v3774 = vsel %vm1381, %v3526, %v3706
      %v3775 = vsel %vm1381, %v3527, %v3708
      %v3776 = vsel %vm1381, %v3528, %v3710
      %v3777 = vsel %vm1381, %v3529, %v3712
      %v3778 = vsel %vm1381, %v3530, %v3714
      %v3779 = vsel %vm1381, %v3603, %v3732
      %v3780 = vsel %vm1381, %v3604, %v3734
      %v3781 = vsel %vm1381, %v3605, %v3736
      %v3782 = vsel %vm1381, %v3606, %v3738
      %v3783 = vsel %vm1381, %v3607, %v3740
      %v3784 = vsel %vm1381, %v3608, %v3742
      %v3785 = vsel %vm1381, %v3609, %v3744
      %v3786 = vsel %vm1381, %v3610, %v3746
      %v3787 = vpack.c.bf16 %v3756, %v3755
      %v3788 = vpack.c.bf16 %v3764, %v3763
      %v3789 = vpack.c.bf16 %v3772, %v3771
      %v3790 = vpack.c.bf16 %v3780, %v3779
      %v3791 = vpack.c.bf16 %v3620, %v3619
      %v3792 = vpack.c.bf16 %v3758, %v3757
      %v3793 = vpack.c.bf16 %v3766, %v3765
      %v3794 = vpack.c.bf16 %v3774, %v3773
      %v3795 = vpack.c.bf16 %v3782, %v3781
      %v3796 = vpack.c.bf16 %v3622, %v3621
      %v3797 = vpack.c.bf16 %v3760, %v3759
      %v3798 = vpack.c.bf16 %v3768, %v3767
      %v3799 = vpack.c.bf16 %v3776, %v3775
      %v3800 = vpack.c.bf16 %v3784, %v3783
      %v3801 = vpack.c.bf16 %v3624, %v3623
      %v3802 = vpack.c.bf16 %v3762, %v3761
      %v3803 = vpack.c.bf16 %v3770, %v3769
      %v3804 = vpack.c.bf16 %v3778, %v3777
      %v3805 = vpack.c.bf16 %v3786, %v3785
      %v3806 = vpack.c.bf16 %v3626, %v3625
      %v3807 = vld [vmem:[%s10] sm:$0xf]
      %v3808 = vld [vmem:[%s10 + $0x4] sm:$0xf]
      %v3809 = vld [vmem:[%s10 + $0x8] sm:$0xf]
      %v3810 = vld [vmem:[%s10 + $0xc] sm:$0xf]
      %v3811 = vld [vmem:[%s10 + $0x10] sm:$0xf]
      %v3812 = vld [vmem:[%s10 + $0x14] sm:$0xf]
      %v3813 = vld [vmem:[%s10 + $0x18] sm:$0xf]
      %v3814 = vld [vmem:[%s10 + $0x1c] sm:$0xf]
      %v3815 = vld [vmem:[%s10 + $0x20] sm:$0xf]
      %v3816 = vld [vmem:[%s10 + $0x24] sm:$0xf]
      %v3817 = vld [vmem:[%s10 + $0x28] sm:$0xf]
      %v3818 = vld [vmem:[%s10 + $0x2c] sm:$0xf]
      %v3819 = vld [vmem:[%s10 + $0x30] sm:$0xf]
      %v3820 = vld [vmem:[%s10 + $0x34] sm:$0xf]
      %v3821 = vld [vmem:[%s10 + $0x38] sm:$0xf]
      %v3822 = vld [vmem:[%s10 + $0x3c] sm:$0xf]
      %v3823 = vld [vmem:[%s10 + $0x40] sm:$0xf]
      %v3824 = vld [vmem:[%s10 + $0x44] sm:$0xf]
      %v3825 = vld [vmem:[%s10 + $0x48] sm:$0xf]
      %v3826 = vld [vmem:[%s10 + $0x4c] sm:$0xf]
      %v3827 = vld [vmem:[%s10 + $0x50] sm:$0xf]
      %v3828 = vld [vmem:[%s10 + $0x54] sm:$0xf]
      %v3829 = vld [vmem:[%s10 + $0x58] sm:$0xf]
      %v3830 = vld [vmem:[%s10 + $0x5c] sm:$0xf]
      %v3831 = vld [vmem:[%s10 + $0x60] sm:$0xf]
      %v3832 = vld [vmem:[%s10 + $0x64] sm:$0xf]
      %v3833 = vld [vmem:[%s10 + $0x68] sm:$0xf]
      %v3834 = vld [vmem:[%s10 + $0x6c] sm:$0xf]
      %v3835 = vld [vmem:[%s10 + $0x70] sm:$0xf]
      %v3836 = vld [vmem:[%s10 + $0x74] sm:$0xf]
      %v3837 = vld [vmem:[%s10 + $0x78] sm:$0xf]
      %v3838 = vld [vmem:[%s10 + $0x7c] sm:$0xf]
      %v3839 = vld [vmem:[%s10 + $0x80] sm:$0xf]
      %v3840 = vld [vmem:[%s10 + $0x84] sm:$0xf]
      %v3841 = vld [vmem:[%s10 + $0x88] sm:$0xf]
      %v3842 = vld [vmem:[%s10 + $0x8c] sm:$0xf]
      %v3843 = vld [vmem:[%s10 + $0x90] sm:$0xf]
      %v3844 = vld [vmem:[%s10 + $0x94] sm:$0xf]
      %v3845 = vld [vmem:[%s10 + $0x98] sm:$0xf]
      %v3846 = vld [vmem:[%s10 + $0x9c] sm:$0xf]
      %v3847 = vld [vmem:[%s10 + $0xa0] sm:$0xf]
      %v3848 = vld [vmem:[%s10 + $0xa4] sm:$0xf]
      %v3849 = vld [vmem:[%s10 + $0xa8] sm:$0xf]
      %v3850 = vld [vmem:[%s10 + $0xac] sm:$0xf]
      %v3851 = vld [vmem:[%s10 + $0xb0] sm:$0xf]
      %v3852 = vld [vmem:[%s10 + $0xb4] sm:$0xf]
      %v3853 = vld [vmem:[%s10 + $0xb8] sm:$0xf]
      %v3854 = vld [vmem:[%s10 + $0xbc] sm:$0xf]
      %v3855 = vld [vmem:[%s10 + $0xc0] sm:$0xf]
      %v3856 = vld [vmem:[%s10 + $0xc4] sm:$0xf]
      %v3857 = vld [vmem:[%s10 + $0xc8] sm:$0xf]
      %v3858 = vld [vmem:[%s10 + $0xcc] sm:$0xf]
      %v3859 = vld [vmem:[%s10 + $0xd0] sm:$0xf]
      %v3860 = vld [vmem:[%s10 + $0xd4] sm:$0xf]
      %v3861 = vld [vmem:[%s10 + $0xd8] sm:$0xf]
      %v3862 = vld [vmem:[%s10 + $0xdc] sm:$0xf]
      %v3863 = vld [vmem:[%s10 + $0xe0] sm:$0xf]
      %v3864 = vld [vmem:[%s10 + $0xe4] sm:$0xf]
      %v3865 = vld [vmem:[%s10 + $0xe8] sm:$0xf]
      %v3866 = vld [vmem:[%s10 + $0xec] sm:$0xf]
      %v3867 = vld [vmem:[%s10 + $0xf0] sm:$0xf]
      %v3868 = vld [vmem:[%s10 + $0xf4] sm:$0xf]
      %v3869 = vld [vmem:[%s10 + $0xf8] sm:$0xf]
      %v3870 = vld [vmem:[%s10 + $0xfc] sm:$0xf]
      %v3871 = vld [vmem:[%s10 + $0x100] sm:$0xf]
      %v3872 = vld [vmem:[%s10 + $0x104] sm:$0xf]
      %v3873 = vld [vmem:[%s10 + $0x108] sm:$0xf]
      %v3874 = vld [vmem:[%s10 + $0x10c] sm:$0xf]
      %v3875 = vld [vmem:[%s10 + $0x110] sm:$0xf]
      %v3876 = vld [vmem:[%s10 + $0x114] sm:$0xf]
      %v3877 = vld [vmem:[%s10 + $0x118] sm:$0xf]
      %v3878 = vld [vmem:[%s10 + $0x11c] sm:$0xf]
      %v3879 = vld [vmem:[%s11] sm:$0x1]
      %v3881 = vlaneseq
      %v3882 = vshrl.u32 %v3881, 7
      %v3883 = vsub.s32 0, %v3882
      %v3884 = vrot.slane %v3879, %v3883
      %v3958 = vunpack.c.l.b16 %v3807
      %v3959 = vunpack.c.l.b16 %v3808
      %v3960 = vunpack.c.l.b16 %v3809
      %v3961 = vunpack.c.l.b16 %v3810
      %v3962 = vunpack.c.l.b16 %v3811
      %v3963 = vunpack.c.l.b16 %v3812
      %v3964 = vunpack.c.l.b16 %v3813
      %v3965 = vunpack.c.l.b16 %v3814
      %v3966 = vunpack.c.l.b16 %v3815
      %v3967 = vunpack.c.l.b16 %v3816
      %v3968 = vunpack.c.l.b16 %v3817
      %v3969 = vunpack.c.l.b16 %v3818
      %v3970 = vunpack.c.l.b16 %v3819
      %v3971 = vunpack.c.l.b16 %v3820
      %v3972 = vunpack.c.l.b16 %v3821
      %v3973 = vunpack.c.l.b16 %v3822
      %v3974 = vunpack.c.l.b16 %v3823
      %v3975 = vunpack.c.l.b16 %v3824
      %v3976 = vunpack.c.l.b16 %v3825
      %v3977 = vunpack.c.l.b16 %v3826
      %v3978 = vunpack.c.l.b16 %v3827
      %v3979 = vunpack.c.l.b16 %v3828
      %v3980 = vunpack.c.l.b16 %v3829
      %v3981 = vunpack.c.l.b16 %v3830
      %v3982 = vunpack.c.l.b16 %v3831
      %v3983 = vunpack.c.l.b16 %v3832
      %v3984 = vunpack.c.l.b16 %v3833
      %v3985 = vunpack.c.l.b16 %v3834
      %v3986 = vunpack.c.l.b16 %v3835
      %v3987 = vunpack.c.l.b16 %v3836
      %v3988 = vunpack.c.l.b16 %v3837
      %v3989 = vunpack.c.l.b16 %v3838
      %v3990 = vunpack.c.l.b16 %v3839
      %v3991 = vunpack.c.l.b16 %v3840
      %v3992 = vunpack.c.l.b16 %v3841
      %v3993 = vunpack.c.l.b16 %v3842
      %v3994 = vunpack.c.l.b16 %v3843
      %v3995 = vunpack.c.l.b16 %v3844
      %v3996 = vunpack.c.l.b16 %v3845
      %v3997 = vunpack.c.l.b16 %v3846
      %v3998 = vunpack.c.l.b16 %v3847
      %v3999 = vunpack.c.l.b16 %v3848
      %v4000 = vunpack.c.l.b16 %v3849
      %v4001 = vunpack.c.l.b16 %v3850
      %v4002 = vunpack.c.l.b16 %v3851
      %v4003 = vunpack.c.l.b16 %v3852
      %v4004 = vunpack.c.l.b16 %v3853
      %v4005 = vunpack.c.l.b16 %v3854
      %v4006 = vunpack.c.l.b16 %v3855
      %v4007 = vunpack.c.l.b16 %v3856
      %v4008 = vunpack.c.l.b16 %v3857
      %v4009 = vunpack.c.l.b16 %v3858
      %v4010 = vunpack.c.l.b16 %v3859
      %v4011 = vunpack.c.l.b16 %v3860
      %v4012 = vunpack.c.l.b16 %v3861
      %v4013 = vunpack.c.l.b16 %v3862
      %v4014 = vunpack.c.l.b16 %v3863
      %v4015 = vunpack.c.l.b16 %v3864
      %v4016 = vunpack.c.l.b16 %v3865
      %v4017 = vunpack.c.l.b16 %v3866
      %v4018 = vunpack.c.l.b16 %v3867
      %v4019 = vunpack.c.l.b16 %v3868
      %v4020 = vunpack.c.l.b16 %v3869
      %v4021 = vunpack.c.l.b16 %v3870
      %v4022 = vunpack.c.l.b16 %v3871
      %v4023 = vunpack.c.l.b16 %v3872
      %v4024 = vunpack.c.l.b16 %v3873
      %v4025 = vunpack.c.l.b16 %v3874
      %v4026 = vunpack.c.l.b16 %v3875
      %v4027 = vunpack.c.l.b16 %v3876
      %v4028 = vunpack.c.l.b16 %v3877
      %v4029 = vunpack.c.l.b16 %v3878
      %v4030 = vpack.c.b16 %v3959, %v3958
      %v4031 = vpack.c.b16 %v3961, %v3960
      %v4032 = vpack.c.b16 %v3963, %v3962
      %v4033 = vpack.c.b16 %v3965, %v3964
      %v4034 = vpack.c.b16 %v3967, %v3966
      %v4035 = vpack.c.b16 %v3969, %v3968
      %v4036 = vpack.c.b16 %v3971, %v3970
      %v4037 = vpack.c.b16 %v3973, %v3972
      %v4038 = vpack.c.b16 %v3975, %v3974
      %v4039 = vpack.c.b16 %v3977, %v3976
      %v4040 = vpack.c.b16 %v3979, %v3978
      %v4041 = vpack.c.b16 %v3981, %v3980
      %v4042 = vpack.c.b16 %v3983, %v3982
      %v4043 = vpack.c.b16 %v3985, %v3984
      %v4044 = vpack.c.b16 %v3987, %v3986
      %v4045 = vpack.c.b16 %v3989, %v3988
      %v4046 = vpack.c.b16 %v3991, %v3990
      %v4047 = vpack.c.b16 %v3993, %v3992
      %v4048 = vpack.c.b16 %v3995, %v3994
      %v4049 = vpack.c.b16 %v3997, %v3996
      %v4050 = vpack.c.b16 %v3999, %v3998
      %v4051 = vpack.c.b16 %v4001, %v4000
      %v4052 = vpack.c.b16 %v4003, %v4002
      %v4053 = vpack.c.b16 %v4005, %v4004
      %v4054 = vpack.c.b16 %v4007, %v4006
      %v4055 = vpack.c.b16 %v4009, %v4008
      %v4056 = vpack.c.b16 %v4011, %v4010
      %v4057 = vpack.c.b16 %v4013, %v4012
      %v4058 = vpack.c.b16 %v4015, %v4014
      %v4059 = vpack.c.b16 %v4017, %v4016
      %v4060 = vpack.c.b16 %v4019, %v4018
      %v4061 = vpack.c.b16 %v4021, %v4020
      %v4062 = vpack.c.b16 %v4023, %v4022
      %v4063 = vpack.c.b16 %v4025, %v4024
      %v4064 = vpack.c.b16 %v4027, %v4026
      %v4065 = vpack.c.b16 %v4029, %v4028
      %v4103 = vsel %vm1381, %v3791, 0
      %v4106 = vsel %vm1381, %v3796, 0
      %v4109 = vsel %vm1381, %v3801, 0
      %v4112 = vsel %vm1381, %v3806, 0
      %4114 = vmatprep.subr.bf16.mxu0 0
      %4115 = vmatpush1.bf16.msra.mxu0 %v4037
      %4116 = vmatprep.subr.bf16.mxu0 0
      %4117 = vmatpush1.bf16.msra.mxu0 %v4036
      %4118 = vmatprep.subr.bf16.mxu0 0
      %4119 = vmatpush1.bf16.msra.mxu0 %v4035
      %4120 = vmatprep.subr.bf16.mxu0 0
      %4121 = vmatpush1.bf16.msra.mxu0 %v4034
      %4122 = vmatprep.subr.bf16.mxu0 0
      %4123 = vmatpush1.bf16.msra.mxu0 %v4033
      %4124 = vmatprep.subr.bf16.mxu0 0
      %4125 = vmatpush1.bf16.msra.mxu0 %v4032
      %4126 = vmatprep.subr.bf16.mxu0 0
      %4127 = vmatpush1.bf16.msra.mxu0 %v4031
      %4128 = vmatprep.subr.bf16.mxu0 0
      %4129 = vmatpush1.bf16.msra.mxu0 %v4030
      %4130 = vmatprep.subr.bf16.mxu0 0
      %4131 = vmatpush2.bf16.msra.mxu0 %v4045
      %4132 = vmatprep.subr.bf16.mxu0 0
      %4133 = vmatpush2.bf16.msra.mxu0 %v4044
      %4134 = vmatprep.subr.bf16.mxu0 0
      %4135 = vmatpush2.bf16.msra.mxu0 %v4043
      %4136 = vmatprep.subr.bf16.mxu0 0
      %4137 = vmatpush2.bf16.msra.mxu0 %v4042
      %4138 = vmatprep.subr.bf16.mxu0 0
      %4139 = vmatpush2.bf16.msra.mxu0 %v4041
      %4140 = vmatprep.subr.bf16.mxu0 0
      %4141 = vmatpush2.bf16.msra.mxu0 %v4040
      %4142 = vmatprep.subr.bf16.mxu0 0
      %4143 = vmatpush2.bf16.msra.mxu0 %v4039
      %4144 = vmatprep.subr.bf16.mxu0 0
      %4145 = vmatpush2.bf16.msra.mxu0 %v4038
      %4146 = vmatprep.mubr.bf16.mxu0 %v3788
      %4147 = vmatmul.mubr.bf16.gmra.mxu0 %v3787
      %v4148 = vpop.f32.mrf.mxu0
      %v4149 = vadd.f32 %v3884, %v4148
      %v4150 = vpop.f32.mrf.mxu0
      %v4151 = vpop.f32.mrf.mxu0
      %v4152 = vadd.f32 %v3884, %v4151
      %v4153 = vpop.f32.mrf.mxu0
      %4154 = vmatprep.mubr.bf16.mxu0 %v3793
      %4155 = vmatmul.mubr.bf16.gmra.mxu0 %v3792
      %v4156 = vpop.f32.mrf.mxu0
      %v4157 = vadd.f32 %v3884, %v4156
      %v4158 = vpop.f32.mrf.mxu0
      %v4159 = vpop.f32.mrf.mxu0
      %v4160 = vadd.f32 %v3884, %v4159
      %v4161 = vpop.f32.mrf.mxu0
      %4162 = vmatprep.mubr.bf16.mxu0 %v3798
      %4163 = vmatmul.mubr.bf16.gmra.mxu0 %v3797
      %v4164 = vpop.f32.mrf.mxu0
      %v4165 = vadd.f32 %v3884, %v4164
      %v4166 = vpop.f32.mrf.mxu0
      %v4167 = vpop.f32.mrf.mxu0
      %v4168 = vadd.f32 %v3884, %v4167
      %v4169 = vpop.f32.mrf.mxu0
      %4170 = vmatprep.mubr.bf16.mxu0 %v3803
      %4171 = vmatmul.mubr.bf16.gmra.mxu0 %v3802
      %v4172 = vpop.f32.mrf.mxu0
      %v4173 = vadd.f32 %v3884, %v4172
      %v4174 = vpop.f32.mrf.mxu0
      %v4175 = vpop.f32.mrf.mxu0
      %v4176 = vadd.f32 %v3884, %v4175
      %v4177 = vpop.f32.mrf.mxu0
      %4178 = vdwg.mxu0
      %4179 = vmatprep.subr.bf16.mxu0 0
      %4180 = vmatpush1.bf16.msra.mxu0 %v4053
      %4181 = vmatprep.subr.bf16.mxu0 0
      %4182 = vmatpush1.bf16.msra.mxu0 %v4052
      %4183 = vmatprep.subr.bf16.mxu0 0
      %4184 = vmatpush1.bf16.msra.mxu0 %v4051
      %4185 = vmatprep.subr.bf16.mxu0 0
      %4186 = vmatpush1.bf16.msra.mxu0 %v4050
      %4187 = vmatprep.subr.bf16.mxu0 0
      %4188 = vmatpush1.bf16.msra.mxu0 %v4049
      %4189 = vmatprep.subr.bf16.mxu0 0
      %4190 = vmatpush1.bf16.msra.mxu0 %v4048
      %4191 = vmatprep.subr.bf16.mxu0 0
      %4192 = vmatpush1.bf16.msra.mxu0 %v4047
      %4193 = vmatprep.subr.bf16.mxu0 0
      %4194 = vmatpush1.bf16.msra.mxu0 %v4046
      %4195 = vmatprep.subr.bf16.mxu0 0
      %4196 = vmatpush2.bf16.msra.mxu0 %v4061
      %4197 = vmatprep.subr.bf16.mxu0 0
      %4198 = vmatpush2.bf16.msra.mxu0 %v4060
      %4199 = vmatprep.subr.bf16.mxu0 0
      %4200 = vmatpush2.bf16.msra.mxu0 %v4059
      %4201 = vmatprep.subr.bf16.mxu0 0
      %4202 = vmatpush2.bf16.msra.mxu0 %v4058
      %4203 = vmatprep.subr.bf16.mxu0 0
      %4204 = vmatpush2.bf16.msra.mxu0 %v4057
      %4205 = vmatprep.subr.bf16.mxu0 0
      %4206 = vmatpush2.bf16.msra.mxu0 %v4056
      %4207 = vmatprep.subr.bf16.mxu0 0
      %4208 = vmatpush2.bf16.msra.mxu0 %v4055
      %4209 = vmatprep.subr.bf16.mxu0 0
      %4210 = vmatpush2.bf16.msra.mxu0 %v4054
      %4211 = vmatprep.mubr.bf16.mxu0 %v3790
      %4212 = vmatmul.mubr.bf16.gmra.mxu0 %v3789
      %v4213 = vpop.f32.mrf.mxu0
      %v4214 = vadd.f32 %v4149, %v4213
      %v4215 = vpop.f32.mrf.mxu0
      %v4216 = vpop.f32.mrf.mxu0
      %v4217 = vadd.f32 %v4152, %v4216
      %v4218 = vpop.f32.mrf.mxu0
      %4219 = vmatprep.mubr.bf16.mxu0 %v3795
      %4220 = vmatmul.mubr.bf16.gmra.mxu0 %v3794
      %v4221 = vpop.f32.mrf.mxu0
      %v4222 = vadd.f32 %v4157, %v4221
      %v4223 = vpop.f32.mrf.mxu0
      %v4224 = vpop.f32.mrf.mxu0
      %v4225 = vadd.f32 %v4160, %v4224
      %v4226 = vpop.f32.mrf.mxu0
      %4227 = vmatprep.mubr.bf16.mxu0 %v3800
      %4228 = vmatmul.mubr.bf16.gmra.mxu0 %v3799
      %v4229 = vpop.f32.mrf.mxu0
      %v4230 = vadd.f32 %v4165, %v4229
      %v4231 = vpop.f32.mrf.mxu0
      %v4232 = vpop.f32.mrf.mxu0
      %v4233 = vadd.f32 %v4168, %v4232
      %v4234 = vpop.f32.mrf.mxu0
      %4235 = vmatprep.mubr.bf16.mxu0 %v3805
      %4236 = vmatmul.mubr.bf16.gmra.mxu0 %v3804
      %v4237 = vpop.f32.mrf.mxu0
      %v4238 = vadd.f32 %v4173, %v4237
      %v4239 = vpop.f32.mrf.mxu0
      %v4240 = vpop.f32.mrf.mxu0
      %v4241 = vadd.f32 %v4176, %v4240
      %v4242 = vpop.f32.mrf.mxu0
      %4243 = vdwg.mxu0
      %4244 = vmatprep.subr.bf16.mxu0 0
      %4245 = vmatpush1.bf16.msra.mxu0 0
      %4246 = vmatprep.subr.bf16.mxu0 0
      %4247 = vmatpush1.bf16.msra.mxu0 0
      %4248 = vmatprep.subr.bf16.mxu0 0
      %4249 = vmatpush1.bf16.msra.mxu0 0
      %4250 = vmatprep.subr.bf16.mxu0 0
      %4251 = vmatpush1.bf16.msra.mxu0 0
      %4252 = vmatprep.subr.bf16.mxu0 0
      %4253 = vmatpush1.bf16.msra.mxu0 %v4065
      %4254 = vmatprep.subr.bf16.mxu0 0
      %4255 = vmatpush1.bf16.msra.mxu0 %v4064
      %4256 = vmatprep.subr.bf16.mxu0 0
      %4257 = vmatpush1.bf16.msra.mxu0 %v4063
      %4258 = vmatprep.subr.bf16.mxu0 0
      %4259 = vmatpush1.bf16.msra.mxu0 %v4062
      %4260 = vmatprep.subr.bf16.mxu0 0
      %4261 = vmatpush2.bf16.msra.mxu0 0
      %4262 = vmatprep.subr.bf16.mxu0 0
      %4263 = vmatpush2.bf16.msra.mxu0 0
      %4264 = vmatprep.subr.bf16.mxu0 0
      %4265 = vmatpush2.bf16.msra.mxu0 0
      %4266 = vmatprep.subr.bf16.mxu0 0
      %4267 = vmatpush2.bf16.msra.mxu0 0
      %4268 = vmatprep.subr.bf16.mxu0 0
      %4269 = vmatpush2.bf16.msra.mxu0 0
      %4270 = vmatprep.subr.bf16.mxu0 0
      %4271 = vmatpush2.bf16.msra.mxu0 0
      %4272 = vmatprep.subr.bf16.mxu0 0
      %4273 = vmatpush2.bf16.msra.mxu0 0
      %4274 = vmatprep.subr.bf16.mxu0 0
      %4275 = vmatpush2.bf16.msra.mxu0 0
      %4276 = vmatprep.mubr.bf16.mxu0 0
      %4277 = vmatmul.mubr.bf16.gmra.mxu0 %v4103
      %v4278 = vpop.f32.mrf.mxu0
      %v4279 = vadd.f32 %v4214, %v4278
      %v4280 = vpop.f32.mrf.mxu0
      %v4281 = vpop.f32.mrf.mxu0
      %v4282 = vadd.f32 %v4217, %v4281
      %v4283 = vpop.f32.mrf.mxu0
      %4284 = vmatprep.mubr.bf16.mxu0 0
      %4285 = vmatmul.mubr.bf16.gmra.mxu0 %v4106
      %v4286 = vpop.f32.mrf.mxu0
      %v4287 = vadd.f32 %v4222, %v4286
      %v4288 = vpop.f32.mrf.mxu0
      %v4289 = vpop.f32.mrf.mxu0
      %v4290 = vadd.f32 %v4225, %v4289
      %v4291 = vpop.f32.mrf.mxu0
      %4292 = vmatprep.mubr.bf16.mxu0 0
      %4293 = vmatmul.mubr.bf16.gmra.mxu0 %v4109
      %v4294 = vpop.f32.mrf.mxu0
      %v4295 = vadd.f32 %v4230, %v4294
      %v4296 = vpop.f32.mrf.mxu0
      %v4297 = vpop.f32.mrf.mxu0
      %v4298 = vadd.f32 %v4233, %v4297
      %v4299 = vpop.f32.mrf.mxu0
      %4300 = vmatprep.mubr.bf16.mxu0 0
      %4301 = vmatmul.mubr.bf16.gmra.mxu0 %v4112
      %v4302 = vpop.f32.mrf.mxu0
      %v4303 = vadd.f32 %v4238, %v4302
      %v4304 = vpop.f32.mrf.mxu0
      %v4305 = vpop.f32.mrf.mxu0
      %v4306 = vadd.f32 %v4241, %v4305
      %v4307 = vpop.f32.mrf.mxu0
      %4308 = vdwg.mxu0
      %v4309 = vmax.f32 %v4279, 0.0
      %v4310 = vmax.f32 %v4282, 0.0
      %v4311 = vmax.f32 %v4287, 0.0
      %v4312 = vmax.f32 %v4290, 0.0
      %v4313 = vmax.f32 %v4295, 0.0
      %v4314 = vmax.f32 %v4298, 0.0
      %v4315 = vmax.f32 %v4303, 0.0
      %v4316 = vmax.f32 %v4306, 0.0
      %v4317 = vrot.slane %v4309, 7
      %v4318 = vrot.slane %v4310, 7
      %v4319 = vrot.slane %v4311, 7
      %v4320 = vrot.slane %v4312, 7
      %v4321 = vrot.slane %v4313, 7
      %v4322 = vrot.slane %v4314, 7
      %v4323 = vrot.slane %v4315, 7
      %v4324 = vrot.slane %v4316, 7
      %v4325 = vsel %vm720, %v4323, %v4324
      %v4326 = vsel %vm720, %v4322, %v4323
      %v4327 = vsel %vm720, %v4321, %v4322
      %v4328 = vsel %vm720, %v4320, %v4321
      %v4329 = vsel %vm720, %v4319, %v4320
      %v4330 = vsel %vm720, %v4318, %v4319
      %v4331 = vsel %vm720, %v4317, %v4318
      %v4332 = vsel %vm720, %v4324, %v4317
      %v4333 = vmul.f32 %v4325, %v732
      %v4334 = vmul.f32 %v4332, %v737
      %v4335 = vmul.f32 %v4331, %v742
      %v4336 = vmul.f32 %v4330, %v747
      %v4337 = vmul.f32 %v4329, %v752
      %v4338 = vmul.f32 %v4328, %v757
      %v4339 = vmul.f32 %v4327, %v762
      %v4340 = vmul.f32 %v4326, %v767
      %v4341 = vmul.f32 %v4316, %v780
      %v4342 = vmul.f32 %v4309, %v785
      %v4343 = vmul.f32 %v4310, %v790
      %v4344 = vmul.f32 %v4311, %v795
      %v4345 = vmul.f32 %v4312, %v800
      %v4346 = vmul.f32 %v4313, %v805
      %v4347 = vmul.f32 %v4314, %v810
      %v4348 = vmul.f32 %v4315, %v815
      %v4349 = vrot.slane %v4309, 1
      %v4350 = vrot.slane %v4310, 1
      %v4351 = vrot.slane %v4311, 1
      %v4352 = vrot.slane %v4312, 1
      %v4353 = vrot.slane %v4313, 1
      %v4354 = vrot.slane %v4314, 1
      %v4355 = vrot.slane %v4315, 1
      %v4356 = vrot.slane %v4316, 1
      %v4357 = vsel %vm833, %v4355, %v4356
      %v4358 = vsel %vm833, %v4354, %v4355
      %v4359 = vsel %vm833, %v4353, %v4354
      %v4360 = vsel %vm833, %v4352, %v4353
      %v4361 = vsel %vm833, %v4351, %v4352
      %v4362 = vsel %vm833, %v4350, %v4351
      %v4363 = vsel %vm833, %v4349, %v4350
      %v4364 = vsel %vm833, %v4356, %v4349
      %v4365 = vmul.f32 %v4364, %v845
      %v4366 = vmul.f32 %v4363, %v850
      %v4367 = vmul.f32 %v4362, %v855
      %v4368 = vmul.f32 %v4361, %v860
      %v4369 = vmul.f32 %v4360, %v865
      %v4370 = vmul.f32 %v4359, %v870
      %v4371 = vmul.f32 %v4358, %v875
      %v4372 = vmul.f32 %v4357, %v880
      %v4373 = vmul.f32 %v4332, %v893
      %v4374 = vmul.f32 %v4331, %v898
      %v4375 = vmul.f32 %v4330, %v903
      %v4376 = vmul.f32 %v4329, %v908
      %v4377 = vmul.f32 %v4328, %v913
      %v4378 = vmul.f32 %v4327, %v918
      %v4379 = vmul.f32 %v4326, %v923
      %v4380 = vmul.f32 %v4325, %v928
      %v4381 = vmul.f32 %v4363, %v941
      %v4382 = vmul.f32 %v4362, %v946
      %v4383 = vmul.f32 %v4361, %v951
      %v4384 = vmul.f32 %v4360, %v956
      %v4385 = vmul.f32 %v4359, %v961
      %v4386 = vmul.f32 %v4358, %v966
      %v4387 = vmul.f32 %v4357, %v971
      %v4388 = vmul.f32 %v4364, %v976
      %v4389 = vmul.f32 %v4331, %v989
      %v4390 = vmul.f32 %v4330, %v994
      %v4391 = vmul.f32 %v4329, %v999
      %v4392 = vmul.f32 %v4328, %v1004
      %v4393 = vmul.f32 %v4327, %v1009
      %v4394 = vmul.f32 %v4326, %v1014
      %v4395 = vmul.f32 %v4325, %v1019
      %v4396 = vmul.f32 %v4332, %v1024
      %v4397 = vmul.f32 %v4310, %v1037
      %v4398 = vmul.f32 %v4311, %v1042
      %v4399 = vmul.f32 %v4312, %v1047
      %v4400 = vmul.f32 %v4313, %v1052
      %v4401 = vmul.f32 %v4314, %v1057
      %v4402 = vmul.f32 %v4315, %v1062
      %v4403 = vmul.f32 %v4316, %v1067
      %v4404 = vmul.f32 %v4309, %v1072
      %v4405 = vmul.f32 %v4362, %v1085
      %v4406 = vmul.f32 %v4361, %v1090
      %v4407 = vmul.f32 %v4360, %v1095
      %v4408 = vmul.f32 %v4359, %v1100
      %v4409 = vmul.f32 %v4358, %v1105
      %v4410 = vmul.f32 %v4357, %v1110
      %v4411 = vmul.f32 %v4364, %v1115
      %v4412 = vmul.f32 %v4363, %v1120
      %4421 = vrot.lane.b32.xlu0 %v4341, 64
      %v4422 = vpop.permute.xlu0 %4421
      %4423 = vrot.lane.b32.xlu0 %v4342, 64
      %v4424 = vpop.permute.xlu0 %4423
      %4425 = vrot.lane.b32.xlu0 %v4343, 64
      %v4426 = vpop.permute.xlu0 %4425
      %4427 = vrot.lane.b32.xlu0 %v4344, 64
      %v4428 = vpop.permute.xlu0 %4427
      %4429 = vrot.lane.b32.xlu0 %v4345, 64
      %v4430 = vpop.permute.xlu0 %4429
      %4431 = vrot.lane.b32.xlu0 %v4346, 64
      %v4432 = vpop.permute.xlu0 %4431
      %4433 = vrot.lane.b32.xlu0 %v4347, 64
      %v4434 = vpop.permute.xlu0 %4433
      %4435 = vrot.lane.b32.xlu0 %v4348, 64
      %v4436 = vpop.permute.xlu0 %4435
      %4453 = vrot.lane.b32.xlu0 %v4373, 64
      %v4454 = vpop.permute.xlu0 %4453
      %4455 = vrot.lane.b32.xlu0 %v4374, 64
      %v4456 = vpop.permute.xlu0 %4455
      %4457 = vrot.lane.b32.xlu0 %v4375, 64
      %v4458 = vpop.permute.xlu0 %4457
      %4459 = vrot.lane.b32.xlu0 %v4376, 64
      %v4460 = vpop.permute.xlu0 %4459
      %4461 = vrot.lane.b32.xlu0 %v4377, 64
      %v4462 = vpop.permute.xlu0 %4461
      %4463 = vrot.lane.b32.xlu0 %v4378, 64
      %v4464 = vpop.permute.xlu0 %4463
      %4465 = vrot.lane.b32.xlu0 %v4379, 64
      %v4466 = vpop.permute.xlu0 %4465
      %4467 = vrot.lane.b32.xlu0 %v4380, 64
      %v4468 = vpop.permute.xlu0 %4467
      %4485 = vrot.lane.b32.xlu0 %v4381, 64
      %v4486 = vpop.permute.xlu0 %4485
      %4487 = vrot.lane.b32.xlu0 %v4382, 64
      %v4488 = vpop.permute.xlu0 %4487
      %4489 = vrot.lane.b32.xlu0 %v4383, 64
      %v4490 = vpop.permute.xlu0 %4489
      %4491 = vrot.lane.b32.xlu0 %v4384, 64
      %v4492 = vpop.permute.xlu0 %4491
      %4493 = vrot.lane.b32.xlu0 %v4385, 64
      %v4494 = vpop.permute.xlu0 %4493
      %4495 = vrot.lane.b32.xlu0 %v4386, 64
      %v4496 = vpop.permute.xlu0 %4495
      %4497 = vrot.lane.b32.xlu0 %v4387, 64
      %v4498 = vpop.permute.xlu0 %4497
      %4499 = vrot.lane.b32.xlu0 %v4388, 64
      %v4500 = vpop.permute.xlu0 %4499
      %4517 = vrot.lane.b32.xlu0 %v4397, 64
      %v4518 = vpop.permute.xlu0 %4517
      %4519 = vrot.lane.b32.xlu0 %v4398, 64
      %v4520 = vpop.permute.xlu0 %4519
      %4521 = vrot.lane.b32.xlu0 %v4399, 64
      %v4522 = vpop.permute.xlu0 %4521
      %4523 = vrot.lane.b32.xlu0 %v4400, 64
      %v4524 = vpop.permute.xlu0 %4523
      %4525 = vrot.lane.b32.xlu0 %v4401, 64
      %v4526 = vpop.permute.xlu0 %4525
      %4527 = vrot.lane.b32.xlu0 %v4402, 64
      %v4528 = vpop.permute.xlu0 %4527
      %4529 = vrot.lane.b32.xlu0 %v4403, 64
      %v4530 = vpop.permute.xlu0 %4529
      %4531 = vrot.lane.b32.xlu0 %v4404, 64
      %v4532 = vpop.permute.xlu0 %4531
      %v4541 = vsel %vm1381, %v4333, %v4422
      %v4542 = vsel %vm1381, %v4334, %v4424
      %v4543 = vsel %vm1381, %v4335, %v4426
      %v4544 = vsel %vm1381, %v4336, %v4428
      %v4545 = vsel %vm1381, %v4337, %v4430
      %v4546 = vsel %vm1381, %v4338, %v4432
      %v4547 = vsel %vm1381, %v4339, %v4434
      %v4548 = vsel %vm1381, %v4340, %v4436
      %v4549 = vsel %vm1381, %v4365, %v4454
      %v4550 = vsel %vm1381, %v4366, %v4456
      %v4551 = vsel %vm1381, %v4367, %v4458
      %v4552 = vsel %vm1381, %v4368, %v4460
      %v4553 = vsel %vm1381, %v4369, %v4462
      %v4554 = vsel %vm1381, %v4370, %v4464
      %v4555 = vsel %vm1381, %v4371, %v4466
      %v4556 = vsel %vm1381, %v4372, %v4468
      %v4557 = vsel %vm1381, %v4309, %v4486
      %v4558 = vsel %vm1381, %v4310, %v4488
      %v4559 = vsel %vm1381, %v4311, %v4490
      %v4560 = vsel %vm1381, %v4312, %v4492
      %v4561 = vsel %vm1381, %v4313, %v4494
      %v4562 = vsel %vm1381, %v4314, %v4496
      %v4563 = vsel %vm1381, %v4315, %v4498
      %v4564 = vsel %vm1381, %v4316, %v4500
      %v4565 = vsel %vm1381, %v4389, %v4518
      %v4566 = vsel %vm1381, %v4390, %v4520
      %v4567 = vsel %vm1381, %v4391, %v4522
      %v4568 = vsel %vm1381, %v4392, %v4524
      %v4569 = vsel %vm1381, %v4393, %v4526
      %v4570 = vsel %vm1381, %v4394, %v4528
      %v4571 = vsel %vm1381, %v4395, %v4530
      %v4572 = vsel %vm1381, %v4396, %v4532
      %v4573 = vpack.c.bf16 %v4542, %v4541
      %v4574 = vpack.c.bf16 %v4550, %v4549
      %v4575 = vpack.c.bf16 %v4558, %v4557
      %v4576 = vpack.c.bf16 %v4566, %v4565
      %v4577 = vpack.c.bf16 %v4406, %v4405
      %v4578 = vpack.c.bf16 %v4544, %v4543
      %v4579 = vpack.c.bf16 %v4552, %v4551
      %v4580 = vpack.c.bf16 %v4560, %v4559
      %v4581 = vpack.c.bf16 %v4568, %v4567
      %v4582 = vpack.c.bf16 %v4408, %v4407
      %v4583 = vpack.c.bf16 %v4546, %v4545
      %v4584 = vpack.c.bf16 %v4554, %v4553
      %v4585 = vpack.c.bf16 %v4562, %v4561
      %v4586 = vpack.c.bf16 %v4570, %v4569
      %v4587 = vpack.c.bf16 %v4410, %v4409
      %v4588 = vpack.c.bf16 %v4548, %v4547
      %v4589 = vpack.c.bf16 %v4556, %v4555
      %v4590 = vpack.c.bf16 %v4564, %v4563
      %v4591 = vpack.c.bf16 %v4572, %v4571
      %v4592 = vpack.c.bf16 %v4412, %v4411
      %v4593 = vld [vmem:[%s12] sm:$0xf]
      %v4594 = vld [vmem:[%s12 + $0x4] sm:$0xf]
      %v4595 = vld [vmem:[%s12 + $0x8] sm:$0xf]
      %v4596 = vld [vmem:[%s12 + $0xc] sm:$0xf]
      %v4597 = vld [vmem:[%s12 + $0x10] sm:$0xf]
      %v4598 = vld [vmem:[%s12 + $0x14] sm:$0xf]
      %v4599 = vld [vmem:[%s12 + $0x18] sm:$0xf]
      %v4600 = vld [vmem:[%s12 + $0x1c] sm:$0xf]
      %v4601 = vld [vmem:[%s12 + $0x20] sm:$0xf]
      %v4602 = vld [vmem:[%s12 + $0x24] sm:$0xf]
      %v4603 = vld [vmem:[%s12 + $0x28] sm:$0xf]
      %v4604 = vld [vmem:[%s12 + $0x2c] sm:$0xf]
      %v4605 = vld [vmem:[%s12 + $0x30] sm:$0xf]
      %v4606 = vld [vmem:[%s12 + $0x34] sm:$0xf]
      %v4607 = vld [vmem:[%s12 + $0x38] sm:$0xf]
      %v4608 = vld [vmem:[%s12 + $0x3c] sm:$0xf]
      %v4609 = vld [vmem:[%s12 + $0x40] sm:$0xf]
      %v4610 = vld [vmem:[%s12 + $0x44] sm:$0xf]
      %v4611 = vld [vmem:[%s12 + $0x48] sm:$0xf]
      %v4612 = vld [vmem:[%s12 + $0x4c] sm:$0xf]
      %v4613 = vld [vmem:[%s12 + $0x50] sm:$0xf]
      %v4614 = vld [vmem:[%s12 + $0x54] sm:$0xf]
      %v4615 = vld [vmem:[%s12 + $0x58] sm:$0xf]
      %v4616 = vld [vmem:[%s12 + $0x5c] sm:$0xf]
      %v4617 = vld [vmem:[%s12 + $0x60] sm:$0xf]
      %v4618 = vld [vmem:[%s12 + $0x64] sm:$0xf]
      %v4619 = vld [vmem:[%s12 + $0x68] sm:$0xf]
      %v4620 = vld [vmem:[%s12 + $0x6c] sm:$0xf]
      %v4621 = vld [vmem:[%s12 + $0x70] sm:$0xf]
      %v4622 = vld [vmem:[%s12 + $0x74] sm:$0xf]
      %v4623 = vld [vmem:[%s12 + $0x78] sm:$0xf]
      %v4624 = vld [vmem:[%s12 + $0x7c] sm:$0xf]
      %v4625 = vld [vmem:[%s12 + $0x80] sm:$0xf]
      %v4626 = vld [vmem:[%s12 + $0x84] sm:$0xf]
      %v4627 = vld [vmem:[%s12 + $0x88] sm:$0xf]
      %v4628 = vld [vmem:[%s12 + $0x8c] sm:$0xf]
      %v4629 = vld [vmem:[%s12 + $0x90] sm:$0xf]
      %v4630 = vld [vmem:[%s12 + $0x94] sm:$0xf]
      %v4631 = vld [vmem:[%s12 + $0x98] sm:$0xf]
      %v4632 = vld [vmem:[%s12 + $0x9c] sm:$0xf]
      %v4633 = vld [vmem:[%s12 + $0xa0] sm:$0xf]
      %v4634 = vld [vmem:[%s12 + $0xa4] sm:$0xf]
      %v4635 = vld [vmem:[%s12 + $0xa8] sm:$0xf]
      %v4636 = vld [vmem:[%s12 + $0xac] sm:$0xf]
      %v4637 = vld [vmem:[%s12 + $0xb0] sm:$0xf]
      %v4638 = vld [vmem:[%s12 + $0xb4] sm:$0xf]
      %v4639 = vld [vmem:[%s12 + $0xb8] sm:$0xf]
      %v4640 = vld [vmem:[%s12 + $0xbc] sm:$0xf]
      %v4641 = vld [vmem:[%s12 + $0xc0] sm:$0xf]
      %v4642 = vld [vmem:[%s12 + $0xc4] sm:$0xf]
      %v4643 = vld [vmem:[%s12 + $0xc8] sm:$0xf]
      %v4644 = vld [vmem:[%s12 + $0xcc] sm:$0xf]
      %v4645 = vld [vmem:[%s12 + $0xd0] sm:$0xf]
      %v4646 = vld [vmem:[%s12 + $0xd4] sm:$0xf]
      %v4647 = vld [vmem:[%s12 + $0xd8] sm:$0xf]
      %v4648 = vld [vmem:[%s12 + $0xdc] sm:$0xf]
      %v4649 = vld [vmem:[%s12 + $0xe0] sm:$0xf]
      %v4650 = vld [vmem:[%s12 + $0xe4] sm:$0xf]
      %v4651 = vld [vmem:[%s12 + $0xe8] sm:$0xf]
      %v4652 = vld [vmem:[%s12 + $0xec] sm:$0xf]
      %v4653 = vld [vmem:[%s12 + $0xf0] sm:$0xf]
      %v4654 = vld [vmem:[%s12 + $0xf4] sm:$0xf]
      %v4655 = vld [vmem:[%s12 + $0xf8] sm:$0xf]
      %v4656 = vld [vmem:[%s12 + $0xfc] sm:$0xf]
      %v4657 = vld [vmem:[%s12 + $0x100] sm:$0xf]
      %v4658 = vld [vmem:[%s12 + $0x104] sm:$0xf]
      %v4659 = vld [vmem:[%s12 + $0x108] sm:$0xf]
      %v4660 = vld [vmem:[%s12 + $0x10c] sm:$0xf]
      %v4661 = vld [vmem:[%s12 + $0x110] sm:$0xf]
      %v4662 = vld [vmem:[%s12 + $0x114] sm:$0xf]
      %v4663 = vld [vmem:[%s12 + $0x118] sm:$0xf]
      %v4664 = vld [vmem:[%s12 + $0x11c] sm:$0xf]
      %v4665 = vld [vmem:[%s13] sm:$0x1]
      %v4667 = vlaneseq
      %v4668 = vshrl.u32 %v4667, 7
      %v4669 = vsub.s32 0, %v4668
      %v4670 = vrot.slane %v4665, %v4669
      %v4744 = vunpack.c.l.b16 %v4593
      %v4745 = vunpack.c.l.b16 %v4594
      %v4746 = vunpack.c.l.b16 %v4595
      %v4747 = vunpack.c.l.b16 %v4596
      %v4748 = vunpack.c.l.b16 %v4597
      %v4749 = vunpack.c.l.b16 %v4598
      %v4750 = vunpack.c.l.b16 %v4599
      %v4751 = vunpack.c.l.b16 %v4600
      %v4752 = vunpack.c.l.b16 %v4601
      %v4753 = vunpack.c.l.b16 %v4602
      %v4754 = vunpack.c.l.b16 %v4603
      %v4755 = vunpack.c.l.b16 %v4604
      %v4756 = vunpack.c.l.b16 %v4605
      %v4757 = vunpack.c.l.b16 %v4606
      %v4758 = vunpack.c.l.b16 %v4607
      %v4759 = vunpack.c.l.b16 %v4608
      %v4760 = vunpack.c.l.b16 %v4609
      %v4761 = vunpack.c.l.b16 %v4610
      %v4762 = vunpack.c.l.b16 %v4611
      %v4763 = vunpack.c.l.b16 %v4612
      %v4764 = vunpack.c.l.b16 %v4613
      %v4765 = vunpack.c.l.b16 %v4614
      %v4766 = vunpack.c.l.b16 %v4615
      %v4767 = vunpack.c.l.b16 %v4616
      %v4768 = vunpack.c.l.b16 %v4617
      %v4769 = vunpack.c.l.b16 %v4618
      %v4770 = vunpack.c.l.b16 %v4619
      %v4771 = vunpack.c.l.b16 %v4620
      %v4772 = vunpack.c.l.b16 %v4621
      %v4773 = vunpack.c.l.b16 %v4622
      %v4774 = vunpack.c.l.b16 %v4623
      %v4775 = vunpack.c.l.b16 %v4624
      %v4776 = vunpack.c.l.b16 %v4625
      %v4777 = vunpack.c.l.b16 %v4626
      %v4778 = vunpack.c.l.b16 %v4627
      %v4779 = vunpack.c.l.b16 %v4628
      %v4780 = vunpack.c.l.b16 %v4629
      %v4781 = vunpack.c.l.b16 %v4630
      %v4782 = vunpack.c.l.b16 %v4631
      %v4783 = vunpack.c.l.b16 %v4632
      %v4784 = vunpack.c.l.b16 %v4633
      %v4785 = vunpack.c.l.b16 %v4634
      %v4786 = vunpack.c.l.b16 %v4635
      %v4787 = vunpack.c.l.b16 %v4636
      %v4788 = vunpack.c.l.b16 %v4637
      %v4789 = vunpack.c.l.b16 %v4638
      %v4790 = vunpack.c.l.b16 %v4639
      %v4791 = vunpack.c.l.b16 %v4640
      %v4792 = vunpack.c.l.b16 %v4641
      %v4793 = vunpack.c.l.b16 %v4642
      %v4794 = vunpack.c.l.b16 %v4643
      %v4795 = vunpack.c.l.b16 %v4644
      %v4796 = vunpack.c.l.b16 %v4645
      %v4797 = vunpack.c.l.b16 %v4646
      %v4798 = vunpack.c.l.b16 %v4647
      %v4799 = vunpack.c.l.b16 %v4648
      %v4800 = vunpack.c.l.b16 %v4649
      %v4801 = vunpack.c.l.b16 %v4650
      %v4802 = vunpack.c.l.b16 %v4651
      %v4803 = vunpack.c.l.b16 %v4652
      %v4804 = vunpack.c.l.b16 %v4653
      %v4805 = vunpack.c.l.b16 %v4654
      %v4806 = vunpack.c.l.b16 %v4655
      %v4807 = vunpack.c.l.b16 %v4656
      %v4808 = vunpack.c.l.b16 %v4657
      %v4809 = vunpack.c.l.b16 %v4658
      %v4810 = vunpack.c.l.b16 %v4659
      %v4811 = vunpack.c.l.b16 %v4660
      %v4812 = vunpack.c.l.b16 %v4661
      %v4813 = vunpack.c.l.b16 %v4662
      %v4814 = vunpack.c.l.b16 %v4663
      %v4815 = vunpack.c.l.b16 %v4664
      %v4816 = vpack.c.b16 %v4745, %v4744
      %v4817 = vpack.c.b16 %v4747, %v4746
      %v4818 = vpack.c.b16 %v4749, %v4748
      %v4819 = vpack.c.b16 %v4751, %v4750
      %v4820 = vpack.c.b16 %v4753, %v4752
      %v4821 = vpack.c.b16 %v4755, %v4754
      %v4822 = vpack.c.b16 %v4757, %v4756
      %v4823 = vpack.c.b16 %v4759, %v4758
      %v4824 = vpack.c.b16 %v4761, %v4760
      %v4825 = vpack.c.b16 %v4763, %v4762
      %v4826 = vpack.c.b16 %v4765, %v4764
      %v4827 = vpack.c.b16 %v4767, %v4766
      %v4828 = vpack.c.b16 %v4769, %v4768
      %v4829 = vpack.c.b16 %v4771, %v4770
      %v4830 = vpack.c.b16 %v4773, %v4772
      %v4831 = vpack.c.b16 %v4775, %v4774
      %v4832 = vpack.c.b16 %v4777, %v4776
      %v4833 = vpack.c.b16 %v4779, %v4778
      %v4834 = vpack.c.b16 %v4781, %v4780
      %v4835 = vpack.c.b16 %v4783, %v4782
      %v4836 = vpack.c.b16 %v4785, %v4784
      %v4837 = vpack.c.b16 %v4787, %v4786
      %v4838 = vpack.c.b16 %v4789, %v4788
      %v4839 = vpack.c.b16 %v4791, %v4790
      %v4840 = vpack.c.b16 %v4793, %v4792
      %v4841 = vpack.c.b16 %v4795, %v4794
      %v4842 = vpack.c.b16 %v4797, %v4796
      %v4843 = vpack.c.b16 %v4799, %v4798
      %v4844 = vpack.c.b16 %v4801, %v4800
      %v4845 = vpack.c.b16 %v4803, %v4802
      %v4846 = vpack.c.b16 %v4805, %v4804
      %v4847 = vpack.c.b16 %v4807, %v4806
      %v4848 = vpack.c.b16 %v4809, %v4808
      %v4849 = vpack.c.b16 %v4811, %v4810
      %v4850 = vpack.c.b16 %v4813, %v4812
      %v4851 = vpack.c.b16 %v4815, %v4814
      %v4889 = vsel %vm1381, %v4577, 0
      %v4892 = vsel %vm1381, %v4582, 0
      %v4895 = vsel %vm1381, %v4587, 0
      %v4898 = vsel %vm1381, %v4592, 0
      %4900 = vmatprep.subr.bf16.mxu0 0
      %4901 = vmatpush1.bf16.msra.mxu0 %v4823
      %4902 = vmatprep.subr.bf16.mxu0 0
      %4903 = vmatpush1.bf16.msra.mxu0 %v4822
      %4904 = vmatprep.subr.bf16.mxu0 0
      %4905 = vmatpush1.bf16.msra.mxu0 %v4821
      %4906 = vmatprep.subr.bf16.mxu0 0
      %4907 = vmatpush1.bf16.msra.mxu0 %v4820
      %4908 = vmatprep.subr.bf16.mxu0 0
      %4909 = vmatpush1.bf16.msra.mxu0 %v4819
      %4910 = vmatprep.subr.bf16.mxu0 0
      %4911 = vmatpush1.bf16.msra.mxu0 %v4818
      %4912 = vmatprep.subr.bf16.mxu0 0
      %4913 = vmatpush1.bf16.msra.mxu0 %v4817
      %4914 = vmatprep.subr.bf16.mxu0 0
      %4915 = vmatpush1.bf16.msra.mxu0 %v4816
      %4916 = vmatprep.subr.bf16.mxu0 0
      %4917 = vmatpush2.bf16.msra.mxu0 %v4831
      %4918 = vmatprep.subr.bf16.mxu0 0
      %4919 = vmatpush2.bf16.msra.mxu0 %v4830
      %4920 = vmatprep.subr.bf16.mxu0 0
      %4921 = vmatpush2.bf16.msra.mxu0 %v4829
      %4922 = vmatprep.subr.bf16.mxu0 0
      %4923 = vmatpush2.bf16.msra.mxu0 %v4828
      %4924 = vmatprep.subr.bf16.mxu0 0
      %4925 = vmatpush2.bf16.msra.mxu0 %v4827
      %4926 = vmatprep.subr.bf16.mxu0 0
      %4927 = vmatpush2.bf16.msra.mxu0 %v4826
      %4928 = vmatprep.subr.bf16.mxu0 0
      %4929 = vmatpush2.bf16.msra.mxu0 %v4825
      %4930 = vmatprep.subr.bf16.mxu0 0
      %4931 = vmatpush2.bf16.msra.mxu0 %v4824
      %4932 = vmatprep.mubr.bf16.mxu0 %v4574
      %4933 = vmatmul.mubr.bf16.gmra.mxu0 %v4573
      %v4934 = vpop.f32.mrf.mxu0
      %v4935 = vadd.f32 %v4670, %v4934
      %v4936 = vpop.f32.mrf.mxu0
      %v4937 = vpop.f32.mrf.mxu0
      %v4938 = vadd.f32 %v4670, %v4937
      %v4939 = vpop.f32.mrf.mxu0
      %4940 = vmatprep.mubr.bf16.mxu0 %v4579
      %4941 = vmatmul.mubr.bf16.gmra.mxu0 %v4578
      %v4942 = vpop.f32.mrf.mxu0
      %v4943 = vadd.f32 %v4670, %v4942
      %v4944 = vpop.f32.mrf.mxu0
      %v4945 = vpop.f32.mrf.mxu0
      %v4946 = vadd.f32 %v4670, %v4945
      %v4947 = vpop.f32.mrf.mxu0
      %4948 = vmatprep.mubr.bf16.mxu0 %v4584
      %4949 = vmatmul.mubr.bf16.gmra.mxu0 %v4583
      %v4950 = vpop.f32.mrf.mxu0
      %v4951 = vadd.f32 %v4670, %v4950
      %v4952 = vpop.f32.mrf.mxu0
      %v4953 = vpop.f32.mrf.mxu0
      %v4954 = vadd.f32 %v4670, %v4953
      %v4955 = vpop.f32.mrf.mxu0
      %4956 = vmatprep.mubr.bf16.mxu0 %v4589
      %4957 = vmatmul.mubr.bf16.gmra.mxu0 %v4588
      %v4958 = vpop.f32.mrf.mxu0
      %v4959 = vadd.f32 %v4670, %v4958
      %v4960 = vpop.f32.mrf.mxu0
      %v4961 = vpop.f32.mrf.mxu0
      %v4962 = vadd.f32 %v4670, %v4961
      %v4963 = vpop.f32.mrf.mxu0
      %4964 = vdwg.mxu0
      %4965 = vmatprep.subr.bf16.mxu0 0
      %4966 = vmatpush1.bf16.msra.mxu0 %v4839
      %4967 = vmatprep.subr.bf16.mxu0 0
      %4968 = vmatpush1.bf16.msra.mxu0 %v4838
      %4969 = vmatprep.subr.bf16.mxu0 0
      %4970 = vmatpush1.bf16.msra.mxu0 %v4837
      %4971 = vmatprep.subr.bf16.mxu0 0
      %4972 = vmatpush1.bf16.msra.mxu0 %v4836
      %4973 = vmatprep.subr.bf16.mxu0 0
      %4974 = vmatpush1.bf16.msra.mxu0 %v4835
      %4975 = vmatprep.subr.bf16.mxu0 0
      %4976 = vmatpush1.bf16.msra.mxu0 %v4834
      %4977 = vmatprep.subr.bf16.mxu0 0
      %4978 = vmatpush1.bf16.msra.mxu0 %v4833
      %4979 = vmatprep.subr.bf16.mxu0 0
      %4980 = vmatpush1.bf16.msra.mxu0 %v4832
      %4981 = vmatprep.subr.bf16.mxu0 0
      %4982 = vmatpush2.bf16.msra.mxu0 %v4847
      %4983 = vmatprep.subr.bf16.mxu0 0
      %4984 = vmatpush2.bf16.msra.mxu0 %v4846
      %4985 = vmatprep.subr.bf16.mxu0 0
      %4986 = vmatpush2.bf16.msra.mxu0 %v4845
      %4987 = vmatprep.subr.bf16.mxu0 0
      %4988 = vmatpush2.bf16.msra.mxu0 %v4844
      %4989 = vmatprep.subr.bf16.mxu0 0
      %4990 = vmatpush2.bf16.msra.mxu0 %v4843
      %4991 = vmatprep.subr.bf16.mxu0 0
      %4992 = vmatpush2.bf16.msra.mxu0 %v4842
      %4993 = vmatprep.subr.bf16.mxu0 0
      %4994 = vmatpush2.bf16.msra.mxu0 %v4841
      %4995 = vmatprep.subr.bf16.mxu0 0
      %4996 = vmatpush2.bf16.msra.mxu0 %v4840
      %4997 = vmatprep.mubr.bf16.mxu0 %v4576
      %4998 = vmatmul.mubr.bf16.gmra.mxu0 %v4575
      %v4999 = vpop.f32.mrf.mxu0
      %v5000 = vadd.f32 %v4935, %v4999
      %v5001 = vpop.f32.mrf.mxu0
      %v5002 = vpop.f32.mrf.mxu0
      %v5003 = vadd.f32 %v4938, %v5002
      %v5004 = vpop.f32.mrf.mxu0
      %5005 = vmatprep.mubr.bf16.mxu0 %v4581
      %5006 = vmatmul.mubr.bf16.gmra.mxu0 %v4580
      %v5007 = vpop.f32.mrf.mxu0
      %v5008 = vadd.f32 %v4943, %v5007
      %v5009 = vpop.f32.mrf.mxu0
      %v5010 = vpop.f32.mrf.mxu0
      %v5011 = vadd.f32 %v4946, %v5010
      %v5012 = vpop.f32.mrf.mxu0
      %5013 = vmatprep.mubr.bf16.mxu0 %v4586
      %5014 = vmatmul.mubr.bf16.gmra.mxu0 %v4585
      %v5015 = vpop.f32.mrf.mxu0
      %v5016 = vadd.f32 %v4951, %v5015
      %v5017 = vpop.f32.mrf.mxu0
      %v5018 = vpop.f32.mrf.mxu0
      %v5019 = vadd.f32 %v4954, %v5018
      %v5020 = vpop.f32.mrf.mxu0
      %5021 = vmatprep.mubr.bf16.mxu0 %v4591
      %5022 = vmatmul.mubr.bf16.gmra.mxu0 %v4590
      %v5023 = vpop.f32.mrf.mxu0
      %v5024 = vadd.f32 %v4959, %v5023
      %v5025 = vpop.f32.mrf.mxu0
      %v5026 = vpop.f32.mrf.mxu0
      %v5027 = vadd.f32 %v4962, %v5026
      %v5028 = vpop.f32.mrf.mxu0
      %5029 = vdwg.mxu0
      %5030 = vmatprep.subr.bf16.mxu0 0
      %5031 = vmatpush1.bf16.msra.mxu0 0
      %5032 = vmatprep.subr.bf16.mxu0 0
      %5033 = vmatpush1.bf16.msra.mxu0 0
      %5034 = vmatprep.subr.bf16.mxu0 0
      %5035 = vmatpush1.bf16.msra.mxu0 0
      %5036 = vmatprep.subr.bf16.mxu0 0
      %5037 = vmatpush1.bf16.msra.mxu0 0
      %5038 = vmatprep.subr.bf16.mxu0 0
      %5039 = vmatpush1.bf16.msra.mxu0 %v4851
      %5040 = vmatprep.subr.bf16.mxu0 0
      %5041 = vmatpush1.bf16.msra.mxu0 %v4850
      %5042 = vmatprep.subr.bf16.mxu0 0
      %5043 = vmatpush1.bf16.msra.mxu0 %v4849
      %5044 = vmatprep.subr.bf16.mxu0 0
      %5045 = vmatpush1.bf16.msra.mxu0 %v4848
      %5046 = vmatprep.subr.bf16.mxu0 0
      %5047 = vmatpush2.bf16.msra.mxu0 0
      %5048 = vmatprep.subr.bf16.mxu0 0
      %5049 = vmatpush2.bf16.msra.mxu0 0
      %5050 = vmatprep.subr.bf16.mxu0 0
      %5051 = vmatpush2.bf16.msra.mxu0 0
      %5052 = vmatprep.subr.bf16.mxu0 0
      %5053 = vmatpush2.bf16.msra.mxu0 0
      %5054 = vmatprep.subr.bf16.mxu0 0
      %5055 = vmatpush2.bf16.msra.mxu0 0
      %5056 = vmatprep.subr.bf16.mxu0 0
      %5057 = vmatpush2.bf16.msra.mxu0 0
      %5058 = vmatprep.subr.bf16.mxu0 0
      %5059 = vmatpush2.bf16.msra.mxu0 0
      %5060 = vmatprep.subr.bf16.mxu0 0
      %5061 = vmatpush2.bf16.msra.mxu0 0
      %5062 = vmatprep.mubr.bf16.mxu0 0
      %5063 = vmatmul.mubr.bf16.gmra.mxu0 %v4889
      %v5064 = vpop.f32.mrf.mxu0
      %v5065 = vadd.f32 %v5000, %v5064
      %v5066 = vpop.f32.mrf.mxu0
      %v5067 = vpop.f32.mrf.mxu0
      %v5068 = vadd.f32 %v5003, %v5067
      %v5069 = vpop.f32.mrf.mxu0
      %5070 = vmatprep.mubr.bf16.mxu0 0
      %5071 = vmatmul.mubr.bf16.gmra.mxu0 %v4892
      %v5072 = vpop.f32.mrf.mxu0
      %v5073 = vadd.f32 %v5008, %v5072
      %v5074 = vpop.f32.mrf.mxu0
      %v5075 = vpop.f32.mrf.mxu0
      %v5076 = vadd.f32 %v5011, %v5075
      %v5077 = vpop.f32.mrf.mxu0
      %5078 = vmatprep.mubr.bf16.mxu0 0
      %5079 = vmatmul.mubr.bf16.gmra.mxu0 %v4895
      %v5080 = vpop.f32.mrf.mxu0
      %v5081 = vadd.f32 %v5016, %v5080
      %v5082 = vpop.f32.mrf.mxu0
      %v5083 = vpop.f32.mrf.mxu0
      %v5084 = vadd.f32 %v5019, %v5083
      %v5085 = vpop.f32.mrf.mxu0
      %5086 = vmatprep.mubr.bf16.mxu0 0
      %5087 = vmatmul.mubr.bf16.gmra.mxu0 %v4898
      %v5088 = vpop.f32.mrf.mxu0
      %v5089 = vadd.f32 %v5024, %v5088
      %v5090 = vpop.f32.mrf.mxu0
      %v5091 = vpop.f32.mrf.mxu0
      %v5092 = vadd.f32 %v5027, %v5091
      %v5093 = vpop.f32.mrf.mxu0
      %5094 = vdwg.mxu0
      %v5095 = vadd.f32 %v5065, %v3523
      %v5096 = vadd.f32 %v5068, %v3524
      %v5097 = vadd.f32 %v5073, %v3525
      %v5098 = vadd.f32 %v5076, %v3526
      %v5099 = vadd.f32 %v5081, %v3527
      %v5100 = vadd.f32 %v5084, %v3528
      %v5101 = vadd.f32 %v5089, %v3529
      %v5102 = vadd.f32 %v5092, %v3530
      %v5103 = vmax.f32 %v5095, 0.0
      %v5104 = vmax.f32 %v5096, 0.0
      %v5105 = vmax.f32 %v5097, 0.0
      %v5106 = vmax.f32 %v5098, 0.0
      %v5107 = vmax.f32 %v5099, 0.0
      %v5108 = vmax.f32 %v5100, 0.0
      %v5109 = vmax.f32 %v5101, 0.0
      %v5110 = vmax.f32 %v5102, 0.0
      %5119 = vrot.lane.b32.xlu0 %v5103, 64
      %v5120 = vpop.permute.xlu0 %5119
      %5121 = vrot.lane.b32.xlu0 %v5104, 64
      %v5122 = vpop.permute.xlu0 %5121
      %5123 = vrot.lane.b32.xlu0 %v5105, 64
      %v5124 = vpop.permute.xlu0 %5123
      %5125 = vrot.lane.b32.xlu0 %v5106, 64
      %v5126 = vpop.permute.xlu0 %5125
      %5127 = vrot.lane.b32.xlu0 %v5107, 64
      %v5128 = vpop.permute.xlu0 %5127
      %5129 = vrot.lane.b32.xlu0 %v5108, 64
      %v5130 = vpop.permute.xlu0 %5129
      %5131 = vrot.lane.b32.xlu0 %v5109, 64
      %v5132 = vpop.permute.xlu0 %5131
      %5133 = vrot.lane.b32.xlu0 %v5110, 64
      %v5134 = vpop.permute.xlu0 %5133
      %v5143 = vsel %vm1381, %v3523, %v5120
      %v5144 = vsel %vm1381, %v3524, %v5122
      %v5145 = vsel %vm1381, %v3525, %v5124
      %v5146 = vsel %vm1381, %v3526, %v5126
      %v5147 = vsel %vm1381, %v3527, %v5128
      %v5148 = vsel %vm1381, %v3528, %v5130
      %v5149 = vsel %vm1381, %v3529, %v5132
      %v5150 = vsel %vm1381, %v3530, %v5134
      %v5151 = vpack.c.bf16 %v5144, %v5143
      %v5152 = vpack.c.bf16 %v5146, %v5145
      %v5153 = vpack.c.bf16 %v5148, %v5147
      %v5154 = vpack.c.bf16 %v5150, %v5149
      %v5155 = vld [vmem:[%s14] sm:$0xf]
      %v5156 = vld [vmem:[%s14 + $0x4] sm:$0xf]
      %v5157 = vld [vmem:[%s14 + $0x8] sm:$0xf]
      %v5158 = vld [vmem:[%s14 + $0xc] sm:$0xf]
      %v5159 = vld [vmem:[%s14 + $0x10] sm:$0xf]
      %v5160 = vld [vmem:[%s14 + $0x14] sm:$0xf]
      %v5161 = vld [vmem:[%s14 + $0x18] sm:$0xf]
      %v5162 = vld [vmem:[%s14 + $0x1c] sm:$0xf]
      %v5163 = vld [vmem:[%s14 + $0x20] sm:$0xf]
      %v5164 = vld [vmem:[%s14 + $0x24] sm:$0xf]
      %v5165 = vld [vmem:[%s14 + $0x28] sm:$0xf]
      %v5166 = vld [vmem:[%s14 + $0x2c] sm:$0xf]
      %v5167 = vld [vmem:[%s14 + $0x30] sm:$0xf]
      %v5168 = vld [vmem:[%s14 + $0x34] sm:$0xf]
      %v5169 = vld [vmem:[%s14 + $0x38] sm:$0xf]
      %v5170 = vld [vmem:[%s14 + $0x3c] sm:$0xf]
      %v5171 = vld [vmem:[%s15] sm:$0x1]
      %v5173 = vlaneseq
      %v5174 = vshrl.u32 %v5173, 7
      %v5175 = vsub.s32 0, %v5174
      %v5176 = vrot.slane %v5171, %v5175
      %v5194 = vunpack.c.l.b16 %v5155
      %v5195 = vunpack.c.l.b16 %v5156
      %v5196 = vunpack.c.l.b16 %v5157
      %v5197 = vunpack.c.l.b16 %v5158
      %v5198 = vunpack.c.l.b16 %v5159
      %v5199 = vunpack.c.l.b16 %v5160
      %v5200 = vunpack.c.l.b16 %v5161
      %v5201 = vunpack.c.l.b16 %v5162
      %v5202 = vunpack.c.l.b16 %v5163
      %v5203 = vunpack.c.l.b16 %v5164
      %v5204 = vunpack.c.l.b16 %v5165
      %v5205 = vunpack.c.l.b16 %v5166
      %v5206 = vunpack.c.l.b16 %v5167
      %v5207 = vunpack.c.l.b16 %v5168
      %v5208 = vunpack.c.l.b16 %v5169
      %v5209 = vunpack.c.l.b16 %v5170
      %v5210 = vpack.c.b16 %v5195, %v5194
      %v5211 = vpack.c.b16 %v5197, %v5196
      %v5212 = vpack.c.b16 %v5199, %v5198
      %v5213 = vpack.c.b16 %v5201, %v5200
      %v5214 = vpack.c.b16 %v5203, %v5202
      %v5215 = vpack.c.b16 %v5205, %v5204
      %v5216 = vpack.c.b16 %v5207, %v5206
      %v5217 = vpack.c.b16 %v5209, %v5208
      %5226 = vmatprep.subr.bf16.mxu0 0
      %5227 = vmatpush1.bf16.msra.mxu0 %v5217
      %5228 = vmatprep.subr.bf16.mxu0 0
      %5229 = vmatpush1.bf16.msra.mxu0 %v5216
      %5230 = vmatprep.subr.bf16.mxu0 0
      %5231 = vmatpush1.bf16.msra.mxu0 %v5215
      %5232 = vmatprep.subr.bf16.mxu0 0
      %5233 = vmatpush1.bf16.msra.mxu0 %v5214
      %5234 = vmatprep.subr.bf16.mxu0 0
      %5235 = vmatpush1.bf16.msra.mxu0 %v5213
      %5236 = vmatprep.subr.bf16.mxu0 0
      %5237 = vmatpush1.bf16.msra.mxu0 %v5212
      %5238 = vmatprep.subr.bf16.mxu0 0
      %5239 = vmatpush1.bf16.msra.mxu0 %v5211
      %5240 = vmatprep.subr.bf16.mxu0 0
      %5241 = vmatpush1.bf16.msra.mxu0 %v5210
      %5242 = vmatprep.subr.bf16.mxu0 0
      %5243 = vmatpush2.bf16.msra.mxu0 0
      %5244 = vmatprep.subr.bf16.mxu0 0
      %5245 = vmatpush2.bf16.msra.mxu0 0
      %5246 = vmatprep.subr.bf16.mxu0 0
      %5247 = vmatpush2.bf16.msra.mxu0 0
      %5248 = vmatprep.subr.bf16.mxu0 0
      %5249 = vmatpush2.bf16.msra.mxu0 0
      %5250 = vmatprep.subr.bf16.mxu0 0
      %5251 = vmatpush2.bf16.msra.mxu0 0
      %5252 = vmatprep.subr.bf16.mxu0 0
      %5253 = vmatpush2.bf16.msra.mxu0 0
      %5254 = vmatprep.subr.bf16.mxu0 0
      %5255 = vmatpush2.bf16.msra.mxu0 0
      %5256 = vmatprep.subr.bf16.mxu0 0
      %5257 = vmatpush2.bf16.msra.mxu0 0
      %5258 = vmatprep.mubr.bf16.mxu0 0
      %5259 = vmatmul.mubr.bf16.gmra.mxu0 %v5151
      %v5260 = vpop.f32.mrf.mxu0
      %v5261 = vadd.f32 %v5176, %v5260
      %v5262 = vpop.f32.mrf.mxu0
      %v5263 = vpop.f32.mrf.mxu0
      %v5264 = vadd.f32 %v5176, %v5263
      %v5265 = vpop.f32.mrf.mxu0
      %5266 = vmatprep.mubr.bf16.mxu0 0
      %5267 = vmatmul.mubr.bf16.gmra.mxu0 %v5152
      %v5268 = vpop.f32.mrf.mxu0
      %v5269 = vadd.f32 %v5176, %v5268
      %v5270 = vpop.f32.mrf.mxu0
      %v5271 = vpop.f32.mrf.mxu0
      %v5272 = vadd.f32 %v5176, %v5271
      %v5273 = vpop.f32.mrf.mxu0
      %5274 = vmatprep.mubr.bf16.mxu0 0
      %5275 = vmatmul.mubr.bf16.gmra.mxu0 %v5153
      %v5276 = vpop.f32.mrf.mxu0
      %v5277 = vadd.f32 %v5176, %v5276
      %v5278 = vpop.f32.mrf.mxu0
      %v5279 = vpop.f32.mrf.mxu0
      %v5280 = vadd.f32 %v5176, %v5279
      %v5281 = vpop.f32.mrf.mxu0
      %5282 = vmatprep.mubr.bf16.mxu0 0
      %5283 = vmatmul.mubr.bf16.gmra.mxu0 %v5154
      %v5284 = vpop.f32.mrf.mxu0
      %v5285 = vadd.f32 %v5176, %v5284
      %v5286 = vpop.f32.mrf.mxu0
      %v5287 = vpop.f32.mrf.mxu0
      %v5288 = vadd.f32 %v5176, %v5287
      %v5289 = vpop.f32.mrf.mxu0
      %5290 = vdwg.mxu0
      %v5291 = vmax.f32 %v5261, 0.0
      %v5292 = vmax.f32 %v5264, 0.0
      %v5293 = vmax.f32 %v5269, 0.0
      %v5294 = vmax.f32 %v5272, 0.0
      %v5295 = vmax.f32 %v5277, 0.0
      %v5296 = vmax.f32 %v5280, 0.0
      %v5297 = vmax.f32 %v5285, 0.0
      %v5298 = vmax.f32 %v5288, 0.0
      %v5299 = vsel %vm1354, %v5291, 0.0
      %v5300 = vsel %vm1354, %v5292, 0.0
      %v5301 = vadd.f32 %v5299, %v5300
      %v5302 = vsel %vm1354, %v5293, 0.0
      %v5303 = vadd.f32 %v5301, %v5302
      %v5304 = vsel %vm1354, %v5294, 0.0
      %v5305 = vadd.f32 %v5303, %v5304
      %v5306 = vsel %vm1354, %v5295, 0.0
      %v5307 = vadd.f32 %v5305, %v5306
      %v5308 = vsel %vm1354, %v5296, 0.0
      %v5309 = vadd.f32 %v5307, %v5308
      %v5310 = vsel %vm1354, %v5297, 0.0
      %v5311 = vadd.f32 %v5309, %v5310
      %v5312 = vsel %vm1354, %v5298, 0.0
      %v5313 = vadd.f32 %v5311, %v5312
      %v5314 = vrot.slane %v5313, 4
      %v5315 = vadd.f32 %v5313, %v5314
      %v5316 = vrot.slane %v5315, 2
      %v5317 = vadd.f32 %v5315, %v5316
      %v5318 = vrot.slane %v5317, 1
      %v5319 = vadd.f32 %v5317, %v5318
      %v5320 = vmul.f32 %v5319, 0.015625
      %v5321 = vld [vmem:[%s16] sm:$0xff]
      %v5322 = vld [vmem:[%s16 + $0x8] sm:$0xff]
      %v5323 = vld [vmem:[%s17] sm:$0x1]
      %v5325 = vsel %vm1354, %v5320, 0
      %5327 = vmatprep.subr.mxu0 0.0
      %5328 = vmatpush1.msra.mxu0 0.0
      %5329 = vmatprep.subr.mxu0 0.0
      %5330 = vmatpush1.msra.mxu0 0.0
      %5331 = vmatprep.subr.mxu0 0.0
      %5332 = vmatpush1.msra.mxu0 0.0
      %5333 = vmatprep.subr.mxu0 0.0
      %5334 = vmatpush1.msra.mxu0 0.0
      %5335 = vmatprep.subr.mxu0 0.0
      %5336 = vmatpush1.msra.mxu0 0.0
      %5337 = vmatprep.subr.mxu0 0.0
      %5338 = vmatpush1.msra.mxu0 0.0
      %5339 = vmatprep.subr.mxu0 0.0
      %5340 = vmatpush1.msra.mxu0 0.0
      %5341 = vmatprep.subr.mxu0 0.0
      %5342 = vmatpush1.msra.mxu0 0.0
      %5343 = vmatprep.subr.mxu0 0.0
      %5344 = vmatpush1.msra.mxu0 0.0
      %5345 = vmatprep.subr.mxu0 0.0
      %5346 = vmatpush1.msra.mxu0 0.0
      %5347 = vmatprep.subr.mxu0 0.0
      %5348 = vmatpush1.msra.mxu0 0.0
      %5349 = vmatprep.subr.mxu0 0.0
      %5350 = vmatpush1.msra.mxu0 0.0
      %5351 = vmatprep.subr.mxu0 0.0
      %5352 = vmatpush1.msra.mxu0 0.0
      %5353 = vmatprep.subr.mxu0 0.0
      %5354 = vmatpush1.msra.mxu0 0.0
      %5355 = vmatprep.subr.mxu0 0.0
      %5356 = vmatpush1.msra.mxu0 %v5322
      %5357 = vmatprep.subr.mxu0 0.0
      %5358 = vmatpush1.msra.mxu0 %v5321
      %5359 = vmatprep.subr.mxu0 0.0
      %5360 = vmatpush2.msra.mxu0 0.0
      %5361 = vmatprep.subr.mxu0 0.0
      %5362 = vmatpush2.msra.mxu0 0.0
      %5363 = vmatprep.subr.mxu0 0.0
      %5364 = vmatpush2.msra.mxu0 0.0
      %5365 = vmatprep.subr.mxu0 0.0
      %5366 = vmatpush2.msra.mxu0 0.0
      %5367 = vmatprep.subr.mxu0 0.0
      %5368 = vmatpush2.msra.mxu0 0.0
      %5369 = vmatprep.subr.mxu0 0.0
      %5370 = vmatpush2.msra.mxu0 0.0
      %5371 = vmatprep.subr.mxu0 0.0
      %5372 = vmatpush2.msra.mxu0 0.0
      %5373 = vmatprep.subr.mxu0 0.0
      %5374 = vmatpush2.msra.mxu0 0.0
      %5375 = vmatprep.subr.mxu0 0.0
      %5376 = vmatpush2.msra.mxu0 0.0
      %5377 = vmatprep.subr.mxu0 0.0
      %5378 = vmatpush2.msra.mxu0 0.0
      %5379 = vmatprep.subr.mxu0 0.0
      %5380 = vmatpush2.msra.mxu0 0.0
      %5381 = vmatprep.subr.mxu0 0.0
      %5382 = vmatpush2.msra.mxu0 0.0
      %5383 = vmatprep.subr.mxu0 0.0
      %5384 = vmatpush2.msra.mxu0 0.0
      %5385 = vmatprep.subr.mxu0 0.0
      %5386 = vmatpush2.msra.mxu0 0.0
      %5387 = vmatprep.subr.mxu0 0.0
      %5388 = vmatpush2.msra.mxu0 0.0
      %5389 = vmatprep.subr.mxu0 0.0
      %5390 = vmatpush2.msra.mxu0 0.0
      %5391 = vmatprep.mubr.f32.mxu0 0.0
      %5392 = vmatmul.mubr.f32.gmra.mxu0 %v5325
      %v5393 = vpop.f32.mrf.mxu0
      %v5394 = vadd.f32 %v5323, %v5393
      %v5395 = vpop.f32.mrf.mxu0
      %5396 = vdwg.mxu0
      %v5397 = vmax.f32 %v5394, 0.0
      %v5398 = vld [vmem:[%s18] sm:$0x7]
      %v5399 = vld [vmem:[%s19] sm:$0x1]
      %vm5400 = vcmask 23552
      %v5402 = vsel %vm5400, %v5397, 0
      %vm5404 = vcmask 1042432
      %v5406 = vsel %vm5404, %v5398, 0
      %5408 = vmatprep.subr.mxu0 0.0
      %5409 = vmatpush1.msra.mxu0 0.0
      %5410 = vmatprep.subr.mxu0 0.0
      %5411 = vmatpush1.msra.mxu0 0.0
      %5412 = vmatprep.subr.mxu0 0.0
      %5413 = vmatpush1.msra.mxu0 0.0
      %5414 = vmatprep.subr.mxu0 0.0
      %5415 = vmatpush1.msra.mxu0 0.0
      %5416 = vmatprep.subr.mxu0 0.0
      %5417 = vmatpush1.msra.mxu0 0.0
      %5418 = vmatprep.subr.mxu0 0.0
      %5419 = vmatpush1.msra.mxu0 0.0
      %5420 = vmatprep.subr.mxu0 0.0
      %5421 = vmatpush1.msra.mxu0 0.0
      %5422 = vmatprep.subr.mxu0 0.0
      %5423 = vmatpush1.msra.mxu0 0.0
      %5424 = vmatprep.subr.mxu0 0.0
      %5425 = vmatpush1.msra.mxu0 0.0
      %5426 = vmatprep.subr.mxu0 0.0
      %5427 = vmatpush1.msra.mxu0 0.0
      %5428 = vmatprep.subr.mxu0 0.0
      %5429 = vmatpush1.msra.mxu0 0.0
      %5430 = vmatprep.subr.mxu0 0.0
      %5431 = vmatpush1.msra.mxu0 0.0
      %5432 = vmatprep.subr.mxu0 0.0
      %5433 = vmatpush1.msra.mxu0 0.0
      %5434 = vmatprep.subr.mxu0 0.0
      %5435 = vmatpush1.msra.mxu0 0.0
      %5436 = vmatprep.subr.mxu0 0.0
      %5437 = vmatpush1.msra.mxu0 0.0
      %5438 = vmatprep.subr.mxu0 0.0
      %5439 = vmatpush1.msra.mxu0 %v5406
      %5440 = vmatprep.subr.mxu0 0.0
      %5441 = vmatpush2.msra.mxu0 0.0
      %5442 = vmatprep.subr.mxu0 0.0
      %5443 = vmatpush2.msra.mxu0 0.0
      %5444 = vmatprep.subr.mxu0 0.0
      %5445 = vmatpush2.msra.mxu0 0.0
      %5446 = vmatprep.subr.mxu0 0.0
      %5447 = vmatpush2.msra.mxu0 0.0
      %5448 = vmatprep.subr.mxu0 0.0
      %5449 = vmatpush2.msra.mxu0 0.0
      %5450 = vmatprep.subr.mxu0 0.0
      %5451 = vmatpush2.msra.mxu0 0.0
      %5452 = vmatprep.subr.mxu0 0.0
      %5453 = vmatpush2.msra.mxu0 0.0
      %5454 = vmatprep.subr.mxu0 0.0
      %5455 = vmatpush2.msra.mxu0 0.0
      %5456 = vmatprep.subr.mxu0 0.0
      %5457 = vmatpush2.msra.mxu0 0.0
      %5458 = vmatprep.subr.mxu0 0.0
      %5459 = vmatpush2.msra.mxu0 0.0
      %5460 = vmatprep.subr.mxu0 0.0
      %5461 = vmatpush2.msra.mxu0 0.0
      %5462 = vmatprep.subr.mxu0 0.0
      %5463 = vmatpush2.msra.mxu0 0.0
      %5464 = vmatprep.subr.mxu0 0.0
      %5465 = vmatpush2.msra.mxu0 0.0
      %5466 = vmatprep.subr.mxu0 0.0
      %5467 = vmatpush2.msra.mxu0 0.0
      %5468 = vmatprep.subr.mxu0 0.0
      %5469 = vmatpush2.msra.mxu0 0.0
      %5470 = vmatprep.subr.mxu0 0.0
      %5471 = vmatpush2.msra.mxu0 0.0
      %5472 = vmatprep.mubr.f32.mxu0 0.0
      %5473 = vmatmul.mubr.f32.gmra.mxu0 %v5402
      %v5474 = vpop.f32.mrf.mxu0
      %v5475 = vadd.f32 %v5399, %v5474
      %v5476 = vpop.f32.mrf.mxu0
      %5477 = vdwg.mxu0
      %v5478 = vsub.f32 0.0, %v5475
      %v5479 = vmul.f32 %v5478, 1.442695
      %v5480 = vpow.pop %v5479
      %v5481 = vadd.f32 %v5480, 1.0
      %v5482 = vrcp.pop %v5481
      %v5483 = vmul.f32 1.0, %v5482
      %v5484 = vlaneseq
      %v5485 = vshrl.u32 %v5484, 7
      %v5486 = vsub.s32 0, %v5485
      %v5487 = vrot.slane %v5483, %v5486
      %v5488 = vmul.f32 %v5291, %v5487
      %v5489 = vmul.f32 %v5292, %v5487
      %v5490 = vmul.f32 %v5293, %v5487
      %v5491 = vmul.f32 %v5294, %v5487
      %v5492 = vmul.f32 %v5295, %v5487
      %v5493 = vmul.f32 %v5296, %v5487
      %v5494 = vmul.f32 %v5297, %v5487
      %v5495 = vmul.f32 %v5298, %v5487
      %5496 = vst.msk [vmem:[%s629] sm:$0xff] %vm1354, %v5488
      %5497 = vst.msk [vmem:[%s629 + $0x8] sm:$0xff] %vm1354, %v5489
      %5498 = vst.msk [vmem:[%s629 + $0x10] sm:$0xff] %vm1354, %v5490
      %5499 = vst.msk [vmem:[%s629 + $0x18] sm:$0xff] %vm1354, %v5491
      %5500 = vst.msk [vmem:[%s629 + $0x20] sm:$0xff] %vm1354, %v5492
      %5501 = vst.msk [vmem:[%s629 + $0x28] sm:$0xff] %vm1354, %v5493
      %5502 = vst.msk [vmem:[%s629 + $0x30] sm:$0xff] %vm1354, %v5494
      %5503 = vst.msk [vmem:[%s629 + $0x38] sm:$0xff] %vm1354, %v5495
      %p5504 = scmp.lt.s32.totalorder %s31, 1
      %s5505 = scalar_select %p5504, %s31, 1
      %s5506 = smul.addr %s5505, 8
      %s5507 = smul.addr %s5506, 8
      %s5508 = scalar_lea.vmem %s20, %s5507
      // Predicated region
      $region101: #{tpu_custom_call.1} parent=99 // pred_check
        %p5509 = pneg %p474
      $region102: #{tpu_custom_call.1} parent=99 // pred_check_branch
        %5511 = sbr.rel (%p5509) target = $region104
      $region103: #{tpu_custom_call.1} parent=99 // pred_region
        _
      $region104: #{tpu_custom_call.1} parent=99 // pred_fallthru
        _
    $region100: #{tpu_custom_call.1} parent=5 // pred_fallthru
      _
    %p5512 = scmp.le.s32.totalorder 2, %s26
    // Predicated region
    $region105: #{tpu_custom_call.1} parent=5 // pred_check
      %p5513 = pneg %p5512
    $region106: #{tpu_custom_call.1} parent=5 // pred_check_branch
      %5515 = sbr.rel (%p5513) target = $region108
    $region107: #{tpu_custom_call.1} parent=5 // pred_region
      %s5516 = ssub.s32 %s26, 2
      // Predicated region
      $region109: #{tpu_custom_call.1} parent=107 // pred_check
        %p5517 = pneg %p480
      $region110: #{tpu_custom_call.1} parent=107 // pred_check_branch
        %5519 = sbr.rel (%p5517) target = $region112
      $region111: #{tpu_custom_call.1} parent=107 // pred_region
        %p5520 = scmp.lt.s32.totalorder %s32, 1
        %s5521 = scalar_select %p5520, %s32, 1
        %s5522 = smul.addr %s5521, 8
        %s5523 = smul.addr %s5522, 8
        %s5524 = scalar_lea.vmem %s20, %s5523
      $region112: #{tpu_custom_call.1} parent=107 // pred_fallthru
        _
    $region108: #{tpu_custom_call.1} parent=5 // pred_fallthru
      _
  $region6: #{tpu_custom_call.1} parent=0 // loop_footer
    %s30 = sadd.s32 1, %s26
  $region7: #{tpu_custom_call.1} parent=0 // loop_footer_branch
    %25 = sbr.rel target = $region3
  $region8: #{tpu_custom_call.1} parent=0 // loop_exit
    _

</llo_original>
